<compile_context>
chip_gen: v7x
topology: tpu7x:2x2x1
jax: 0.10.0
libtpu: 0.0.40
codegen_flags: <defaults>
</compile_context>

<pallas_src>
import jax
import jax.numpy as jnp
from jax import lax
from jax.experimental import pallas as pl
from jax.experimental.pallas import tpu as pltpu

EPS = 1e-5
LANE = 128


def _round_up(x, m):
    return ((x + m - 1) // m) * m


def _emit_bn_partials(s_ref, acc, hw):
    """Per-tile BN partials: row0 = sum, row1 = per-tile-centered M2."""
    ssum = jnp.sum(acc, axis=0, keepdims=True)              # (1, C)
    d = acc - ssum * (1.0 / hw)
    s_ref[0, 0:1, :] = ssum
    s_ref[0, 1:2, :] = jnp.sum(d * d, axis=0, keepdims=True)


# --------------------------------------------------------------------------
# Pass A: conv1 (3x3, stride via phase split, pad=1) + optional 1x1
#         downsample conv, with fused per-tile BN partial statistics.
#         Taps read straight from the pre-padded phase-split input block.
# --------------------------------------------------------------------------
def _make_conv1_kernel(Ho, Wo, Hp, Cp, stride, has_down, io_dtype):
    HW = Ho * Wo
    s = stride

    def tap_offsets(kh, kw):
        # x_pad[s*i + kh, s*j + kw] == phase[(kh%s, kw%s)][i + kh//s, j + kw//s]
        ph = (kh % s) * s + (kw % s)
        return ph * Hp + kh // s, kw // s

    def kernel(*refs):
        if has_down:
            x_ref, w1_ref, wd_ref, c1_ref, s1_ref, rd_ref, sd_ref = refs
        else:
            x_ref, w1_ref, c1_ref, s1_ref = refs

        acc = None
        for kh in range(3):
            for kw in range(3):
                ro, co = tap_offsets(kh, kw)
                tap = x_ref[0, ro:ro + Ho, co:co + Wo, :].reshape(HW, Cp)
                p = jnp.dot(tap, w1_ref[kh * 3 + kw],
                            preferred_element_type=jnp.float32)
                acc = p if acc is None else acc + p
        c1_ref[0] = acc.astype(io_dtype)
        _emit_bn_partials(s1_ref, acc, HW)

        if has_down:
            # 1x1 downsample samples x[s*i, s*j] = x_pad[s*i+1, s*j+1].
            ro, co = tap_offsets(1, 1)
            xs = x_ref[0, ro:ro + Ho, co:co + Wo, :].reshape(HW, Cp)
            r = jnp.dot(xs, wd_ref[...], preferred_element_type=jnp.float32)
            rd_ref[0] = r.astype(io_dtype)
            _emit_bn_partials(sd_ref, r, HW)

    return kernel


# --------------------------------------------------------------------------
# Pass B: bn1 (precomputed scale/shift) + relu -> conv2 (3x3, pad=1)
#         with fused per-tile BN partial statistics.
# --------------------------------------------------------------------------
def _make_conv2_kernel(Ho, Wo, Cq, mxu_dtype, io_dtype):
    HW = Ho * Wo

    def kernel(c1_ref, sc1_ref, sh1_ref, w2_ref, c2_ref, s2_ref, t1_s):
        # bn1 + relu in f32.
        y = jnp.maximum(c1_ref[0].astype(jnp.float32) * sc1_ref[...]
                        + sh1_ref[...], 0.0)

        # Build the conv2 halo tile in VMEM.  Only the 1-wide border is
        # zeroed, and it is re-zeroed every step so the kernel stays correct
        # when the grid is sharded across TensorCores ("parallel").
        zrow = jnp.zeros((1, Wo + 2, Cq), jnp.float32)
        t1_s[0:1, :, :] = zrow
        t1_s[Ho + 1:Ho + 2, :, :] = zrow
        zcol = jnp.zeros((Ho + 2, 1, Cq), jnp.float32)
        t1_s[:, 0:1, :] = zcol
        t1_s[:, Wo + 1:Wo + 2, :] = zcol
        t1_s[1:Ho + 1, 1:Wo + 1, :] = y.reshape(Ho, Wo, Cq)

        # TODO(synk): t1_s could be mxu_dtype to halve the tap vld traffic;
        # kept f32 pending HW validation of sub-32-bit offset stores.
        acc = None
        for kh in range(3):
            for kw in range(3):
                tap = t1_s[kh:kh + Ho, kw:kw + Wo, :].reshape(HW, Cq)
                p = jnp.dot(tap.astype(mxu_dtype), w2_ref[kh * 3 + kw],
                            preferred_element_type=jnp.float32)
                acc = p if acc is None else acc + p
        c2_ref[0] = acc.astype(io_dtype)
        _emit_bn_partials(s2_ref, acc, HW)

    return kernel


# --------------------------------------------------------------------------
# Pass C: bn2 + residual (identity or bn(downsample)) + final relu.
# --------------------------------------------------------------------------
def _make_finalize_kernel(Ho, Wo, Cq, has_down, out_dtype):
    HW = Ho * Wo

    def kernel(*refs):
        if has_down:
            c2_ref, rd_ref, sc2_ref, sh2_ref, scd_ref, shd_ref, o_ref = refs
            res = rd_ref[0].astype(jnp.float32) * scd_ref[...] + shd_ref[...]
        else:
            c2_ref, x_ref, sc2_ref, sh2_ref, o_ref = refs
            res = x_ref[0].reshape(HW, Cq).astype(jnp.float32)
        y = c2_ref[0].astype(jnp.float32) * sc2_ref[...] + sh2_ref[...]
        o_ref[0] = jnp.maximum(y + res, 0.0).reshape(Ho, Wo, Cq).astype(out_dtype)

    return kernel


# --------------------------------------------------------------------------
# Wrapper
# --------------------------------------------------------------------------
def basic_block_pallas(x_nchw, params, stride=1, mxu_dtype=jnp.bfloat16):
    N, Cin, H, W = x_nchw.shape
    Cout = params["w1"].shape[-1]
    s = int(stride)
    assert s in (1, 2), "only stride 1 and 2 are supported"
    has_down = (s != 1) or (Cin != Cout)
    Ho = (H - 1) // s + 1
    Wo = (W - 1) // s + 1
    HW = Ho * Wo
    Cp = _round_up(Cin, LANE)    # lane-dense padded input channels
    Cq = _round_up(Cout, LANE)   # lane-dense padded output channels
    f32 = jnp.float32
    io_dtype = mxu_dtype         # HBM dtype of conv intermediates (bf16 halves traffic)

    # ---- input prep: NCHW -> NHWC, channel pad, spatial pre-pad, phase split
    x_nhwc = jnp.transpose(x_nchw, (0, 2, 3, 1)).astype(f32)
    xpad = jnp.pad(x_nhwc, ((0, 0), (1, 1), (1, 1), (0, Cp - Cin))).astype(mxu_dtype)

    Hp = Ho + 2 // s
    Wp = Wo + 2 // s
    if s == 1:
        ph_stack = xpad                                   # (N, H+2, W+2, Cp)
    else:
        # 2x2 space-to-depth phase split: every in-kernel tap becomes a
        # contiguous (unstrided) slice, protecting the vld/vst slots.
        parts = []
        for a in range(s):
            for b in range(s):
                p = xpad[:, a::s, b::s, :][:, :Hp, :Wp, :]
                p = jnp.pad(p, ((0, 0), (0, Hp - p.shape[1]),
                                (0, Wp - p.shape[2]), (0, 0)))
                parts.append(p)
        ph_stack = jnp.concatenate(parts, axis=1)         # (N, s*s*Hp, Wp, Cp)
    HT = s * s * Hp

    # ---- weights / BN params (lane-padded; weights per-tap for 9 matmuls) --
    def fold3x3(w, cin, cinp):
        w = jnp.pad(w.astype(f32), ((0, 0), (0, 0), (0, cinp - cin), (0, Cq - Cout)))
        return w.reshape(9, cinp, Cq).astype(mxu_dtype)
    # TODO(synk): for stem-like tiny Cin, packing the 9 taps into one
    # lane-dense contraction (K = round_up(9*Cin, 128)) would cut MXU cycles.

    def pad_vec(v):
        return jnp.pad(v.astype(f32), (0, Cq - Cout)).reshape(1, Cq)

    w1 = fold3x3(params["w1"], Cin, Cp)
    w2 = fold3x3(params["w2"], Cout, Cq)
    g1, b1 = pad_vec(params["g1"]), pad_vec(params["b1"])
    g2, b2 = pad_vec(params["g2"]), pad_vec(params["b2"])
    if has_down:
        wd = jnp.pad(params["wd"].reshape(Cin, Cout).astype(f32),
                     ((0, Cp - Cin), (0, Cq - Cout))).astype(mxu_dtype)
        gd, bd = pad_vec(params["gd"]), pad_vec(params["bd"])

    # ---- VMEM budget: estimate per-step usage; never claim v7x's full 64 MiB
    isz = jnp.dtype(mxu_dtype).itemsize
    est_a = 2 * (HT * Wp * Cp * isz + 9 * Cp * Cq * isz
                 + (Cp * Cq * isz if has_down else 0)
                 + (2 if has_down else 1) * (HW * Cq * isz + 2 * Cq * 4))
    est_b = 2 * (2 * HW * Cq * isz + 9 * Cq * Cq * isz + 4 * Cq * 4) \
        + (Ho + 2) * (Wo + 2) * Cq * 4
    est_c = 2 * (2 * HW * Cq * isz + 4 * Cq * 4 + HW * Cq * 4)
    vmem_limit = int(min(max(max(est_a, est_b, est_c) + (8 << 20), 32 << 20),
                         56 << 20))

    cparams = pltpu.CompilerParams(
        dimension_semantics=("parallel",),     # shard N across TCs (v7x megacore)
        vmem_limit_bytes=vmem_limit,
    )

    tile3 = lambda n: (n, 0, 0)
    tile4 = lambda n: (n, 0, 0, 0)
    bcast2 = lambda n: (0, 0)
    bcast3 = lambda n: (0, 0, 0)

    # ---- pass A: conv1 (+ optional 1x1 downsample) + BN partial stats ------
    ins_a = [ph_stack, w1]
    in_specs_a = [pl.BlockSpec((1, HT, Wp, Cp), tile4),
                  pl.BlockSpec((9, Cp, Cq), bcast3)]
    out_shape_a = [jax.ShapeDtypeStruct((N, HW, Cq), io_dtype),
                   jax.ShapeDtypeStruct((N, 2, Cq), f32)]
    out_specs_a = [pl.BlockSpec((1, HW, Cq), tile3),
                   pl.BlockSpec((1, 2, Cq), tile3)]
    if has_down:
        ins_a.append(wd)
        in_specs_a.append(pl.BlockSpec((Cp, Cq), bcast2))
        out_shape_a += [jax.ShapeDtypeStruct((N, HW, Cq), io_dtype),
                        jax.ShapeDtypeStruct((N, 2, Cq), f32)]
        out_specs_a += [pl.BlockSpec((1, HW, Cq), tile3),
                        pl.BlockSpec((1, 2, Cq), tile3)]

    res_a = pl.pallas_call(
        _make_conv1_kernel(Ho, Wo, Hp, Cp, s, has_down, io_dtype),
        grid=(N,),
        out_shape=tuple(out_shape_a),
        in_specs=in_specs_a,
        out_specs=tuple(out_specs_a),
        compiler_params=cparams,
    )(*ins_a)
    if has_down:
        c1, s1, rd, sd = res_a
    else:
        c1, s1 = res_a

    # ---- tiny cross-tile BN combine (Welford-style) + scale/shift ----------
    total = float(N * HW)

    def scale_shift(stats, g, b):
        sums = stats[:, 0, :]                    # (N, Cq) per-tile sums
        m2s = stats[:, 1, :]                     # (N, Cq) per-tile centered M2
        mean = jnp.sum(sums, axis=0) / total
        mu_t = sums / float(HW)
        m2 = jnp.sum(m2s, axis=0) + float(HW) * jnp.sum((mu_t - mean[None, :]) ** 2, axis=0)
        var = jnp.maximum(m2 / total, 0.0)       # biased (training-mode) variance
        sc = g[0] / jnp.sqrt(var + EPS)
        sh = b[0] - mean * sc
        return sc.reshape(1, Cq), sh.reshape(1, Cq)

    sc1, sh1 = scale_shift(s1, g1, b1)

    # ---- pass B: bn1 + relu -> conv2 + BN partial stats ---------------------
    c2, s2 = pl.pallas_call(
        _make_conv2_kernel(Ho, Wo, Cq, mxu_dtype, io_dtype),
        grid=(N,),
        out_shape=(jax.ShapeDtypeStruct((N, HW, Cq), io_dtype),
                   jax.ShapeDtypeStruct((N, 2, Cq), f32)),
        in_specs=[pl.BlockSpec((1, HW, Cq), tile3),
                  pl.BlockSpec((1, Cq), bcast2),
                  pl.BlockSpec((1, Cq), bcast2),
                  pl.BlockSpec((9, Cq, Cq), bcast3)],
        out_specs=(pl.BlockSpec((1, HW, Cq), tile3),
                   pl.BlockSpec((1, 2, Cq), tile3)),
        scratch_shapes=[pltpu.VMEM((Ho + 2, Wo + 2, Cq), f32)],
        compiler_params=cparams,
    )(c1, sc1, sh1, w2)

    sc2, sh2 = scale_shift(s2, g2, b2)

    # ---- pass C: bn2 + residual + relu --------------------------------------
    if has_down:
        scd, shd = scale_shift(sd, gd, bd)
        ins_c = [c2, rd, sc2, sh2, scd, shd]
        in_specs_c = [pl.BlockSpec((1, HW, Cq), tile3),
                      pl.BlockSpec((1, HW, Cq), tile3)] \
            + [pl.BlockSpec((1, Cq), bcast2)] * 4
    else:
        x_res = jnp.pad(x_nhwc, ((0, 0), (0, 0), (0, 0), (0, Cq - Cin))).astype(io_dtype)
        ins_c = [c2, x_res, sc2, sh2]
        in_specs_c = [pl.BlockSpec((1, HW, Cq), tile3),
                      pl.BlockSpec((1, H, W, Cq), tile4)] \
            + [pl.BlockSpec((1, Cq), bcast2)] * 2

    out_nhwc = pl.pallas_call(
        _make_finalize_kernel(Ho, Wo, Cq, has_down, f32),
        grid=(N,),
        out_shape=jax.ShapeDtypeStruct((N, Ho, Wo, Cq), f32),
        in_specs=in_specs_c,
        out_specs=pl.BlockSpec((1, Ho, Wo, Cq), tile4),
        compiler_params=cparams,
    )(*ins_c)

    # TODO(synk): if downstream can consume NHWC / lane-padded channels (or
    # bf16), drop this slice+transpose HBM round-trip.
    return jnp.transpose(out_nhwc[..., :Cout], (0, 3, 1, 2))      # NHWC -> NCHW


# --------------------------------------------------------------------------
# Params + pure-JAX reference
# --------------------------------------------------------------------------
def init_params(key, in_channels, out_channels, stride):
    has_down = (stride != 1) or (in_channels != out_channels)
    ks = jax.random.split(key, 9)
    p = {
        "w1": 0.2 * jax.random.normal(ks[0], (3, 3, in_channels, out_channels), jnp.float32),
        "g1": 1.0 + 0.1 * jax.random.normal(ks[1], (out_channels,), jnp.float32),
        "b1": 0.1 * jax.random.normal(ks[2], (out_channels,), jnp.float32),
        "w2": 0.2 * jax.random.normal(ks[3], (3, 3, out_channels, out_channels), jnp.float32),
        "g2": 1.0 + 0.1 * jax.random.normal(ks[4], (out_channels,), jnp.float32),
        "b2": 0.1 * jax.random.normal(ks[5], (out_channels,), jnp.float32),
    }
    if has_down:
        p["wd"] = 0.2 * jax.random.normal(ks[6], (1, 1, in_channels, out_channels), jnp.float32)
        p["gd"] = 1.0 + 0.1 * jax.random.normal(ks[7], (out_channels,), jnp.float32)
        p["bd"] = 0.1 * jax.random.normal(ks[8], (out_channels,), jnp.float32)
    return p


def basic_block_reference(x_nchw, params, stride=1):
    Cin = x_nchw.shape[1]
    Cout = params["w1"].shape[-1]
    has_down = (stride != 1) or (Cin != Cout)
    dn = ("NCHW", "HWIO", "NCHW")

    def bn_train(y, g, b):
        mean = jnp.mean(y, axis=(0, 2, 3), keepdims=True)
        var = jnp.var(y, axis=(0, 2, 3), keepdims=True)
        return (y - mean) / jnp.sqrt(var + EPS) * g.reshape(1, -1, 1, 1) + b.reshape(1, -1, 1, 1)

    out = lax.conv_general_dilated(x_nchw, params["w1"], (stride, stride),
                                   ((1, 1), (1, 1)), dimension_numbers=dn)
    out = jax.nn.relu(bn_train(out, params["g1"], params["b1"]))
    out = lax.conv_general_dilated(out, params["w2"], (1, 1),
                                   ((1, 1), (1, 1)), dimension_numbers=dn)
    out = bn_train(out, params["g2"], params["b2"])
    if has_down:
        res = lax.conv_general_dilated(x_nchw, params["wd"], (stride, stride),
                                       ((0, 0), (0, 0)), dimension_numbers=dn)
        res = bn_train(res, params["gd"], params["bd"])
    else:
        res = x_nchw
    return jax.nn.relu(out + res)


if __name__ == "__main__":
    key = jax.random.PRNGKey(0)

    cases = [
        # (N, Cin, H, W, Cout, stride)
        (2, 4, 16, 16, 8, 1),    # channel change -> 1x1 downsample, stride 1
        (2, 4, 16, 16, 8, 2),    # strided conv + strided downsample (phase split)
        (2, 8, 16, 16, 8, 1),    # identity residual path
    ]
    for idx, (N, Cin, H, W, Cout, stride) in enumerate(cases):
        kx, kp, key = jax.random.split(key, 3)
        x = jax.random.normal(kx, (N, Cin, H, W), jnp.float32)
        params = init_params(kp, Cin, Cout, stride)
        ref = basic_block_reference(x, params, stride=stride)

        # f32 MXU path: tight numerical check.
        out_f32 = jax.block_until_ready(
            basic_block_pallas(x, params, stride=stride, mxu_dtype=jnp.float32))
        assert out_f32.shape == ref.shape, (out_f32.shape, ref.shape)
        err = float(jnp.max(jnp.abs(out_f32 - ref)))
        assert err < 5e-3, f"case {idx}: f32 max abs error {err}"

        # bf16 MXU + bf16 HBM intermediates (perf config): looser check.
        out_bf16 = jax.block_until_ready(
            basic_block_pallas(x, params, stride=stride, mxu_dtype=jnp.bfloat16))
        err_bf = float(jnp.max(jnp.abs(out_bf16 - ref)))
        assert err_bf < 2.5e-1, f"case {idx}: bf16 max abs error {err_bf}"

    print("KERNEL_OK")
</pallas_src>

<mosaic_0001>
module attributes {stable_mosaic.version = 11 : i64} {
  func.func @kernel(%arg0: i32, %arg1: memref<1x18x18x128xf32, #tpu.memory_space<vmem>>, %arg2: memref<9x128x128xf32, #tpu.memory_space<vmem>>, %arg3: memref<128x128xf32, #tpu.memory_space<vmem>>, %arg4: memref<1x256x128xf32, #tpu.memory_space<vmem>>, %arg5: memref<1x2x128xf32, #tpu.memory_space<vmem>>, %arg6: memref<1x256x128xf32, #tpu.memory_space<vmem>>, %arg7: memref<1x2x128xf32, #tpu.memory_space<vmem>>) attributes {dimension_semantics = [#tpu.dimension_semantics<parallel>], iteration_bounds = array<i64: 2>, scalar_prefetch = 0 : i64, scratch_operands = 0 : i64, tpu.core_type = #tpu.core_type<tc>, window_params = [{transform_indices = @transform_0, window_bounds = array<i64: 1, 18, 18, 128>}, {pipeline_mode = #tpu.pipeline_mode<synchronous>, transform_indices = @transform_1, window_bounds = array<i64: 9, 128, 128>}, {pipeline_mode = #tpu.pipeline_mode<synchronous>, transform_indices = @transform_2, window_bounds = array<i64: 128, 128>}, {transform_indices = @transform_3, window_bounds = array<i64: 1, 256, 128>}, {transform_indices = @transform_4, window_bounds = array<i64: 1, 2, 128>}, {transform_indices = @transform_5, window_bounds = array<i64: 1, 256, 128>}, {transform_indices = @transform_6, window_bounds = array<i64: 1, 2, 128>}]} {
    %c0 = arith.constant 0 : index
    %c0_0 = arith.constant 0 : index
    %c0_1 = arith.constant 0 : index
    %c0_2 = arith.constant 0 : index
    %0 = vector.load %arg1[%c0, %c0_0, %c0_1, %c0_2] : memref<1x18x18x128xf32, #tpu.memory_space<vmem>>, vector<1x16x16x128xf32>
    %1 = vector.shape_cast %0 : vector<1x16x16x128xf32> to vector<16x16x128xf32>
    %2 = vector.shape_cast %1 : vector<16x16x128xf32> to vector<256x128xf32>
    %c0_3 = arith.constant 0 : index
    %c0_4 = arith.constant 0 : index
    %c0_5 = arith.constant 0 : index
    %3 = vector.load %arg2[%c0_3, %c0_4, %c0_5] : memref<9x128x128xf32, #tpu.memory_space<vmem>>, vector<1x128x128xf32>
    %4 = vector.shape_cast %3 : vector<1x128x128xf32> to vector<128x128xf32>
    %cst = arith.constant dense<0.000000e+00> : vector<256x128xf32>
    %5 = tpu.matmul %2, %4, %cst {dimension_numbers = #tpu.dot_dimension_numbers<[1], [0], [0], [1], [0, 0, 1, 1], [], []>} : vector<256x128xf32>, vector<128x128xf32>, vector<256x128xf32> -> vector<256x128xf32>
    %c0_6 = arith.constant 0 : index
    %c0_7 = arith.constant 0 : index
    %c1 = arith.constant 1 : index
    %c0_8 = arith.constant 0 : index
    %6 = vector.load %arg1[%c0_6, %c0_7, %c1, %c0_8] : memref<1x18x18x128xf32, #tpu.memory_space<vmem>>, vector<1x16x16x128xf32>
    %7 = vector.shape_cast %6 : vector<1x16x16x128xf32> to vector<16x16x128xf32>
    %8 = vector.shape_cast %7 : vector<16x16x128xf32> to vector<256x128xf32>
    %c1_9 = arith.constant 1 : index
    %c0_10 = arith.constant 0 : index
    %c0_11 = arith.constant 0 : index
    %9 = vector.load %arg2[%c1_9, %c0_10, %c0_11] : memref<9x128x128xf32, #tpu.memory_space<vmem>>, vector<1x128x128xf32>
    %10 = vector.shape_cast %9 : vector<1x128x128xf32> to vector<128x128xf32>
    %cst_12 = arith.constant dense<0.000000e+00> : vector<256x128xf32>
    %11 = tpu.matmul %8, %10, %cst_12 {dimension_numbers = #tpu.dot_dimension_numbers<[1], [0], [0], [1], [0, 0, 1, 1], [], []>} : vector<256x128xf32>, vector<128x128xf32>, vector<256x128xf32> -> vector<256x128xf32>
    %12 = arith.addf %5, %11 : vector<256x128xf32>
    %c0_13 = arith.constant 0 : index
    %c0_14 = arith.constant 0 : index
    %c2 = arith.constant 2 : index
    %c0_15 = arith.constant 0 : index
    %13 = vector.load %arg1[%c0_13, %c0_14, %c2, %c0_15] : memref<1x18x18x128xf32, #tpu.memory_space<vmem>>, vector<1x16x16x128xf32>
    %14 = vector.shape_cast %13 : vector<1x16x16x128xf32> to vector<16x16x128xf32>
    %15 = vector.shape_cast %14 : vector<16x16x128xf32> to vector<256x128xf32>
    %c2_16 = arith.constant 2 : index
    %c0_17 = arith.constant 0 : index
    %c0_18 = arith.constant 0 : index
    %16 = vector.load %arg2[%c2_16, %c0_17, %c0_18] : memref<9x128x128xf32, #tpu.memory_space<vmem>>, vector<1x128x128xf32>
    %17 = vector.shape_cast %16 : vector<1x128x128xf32> to vector<128x128xf32>
    %cst_19 = arith.constant dense<0.000000e+00> : vector<256x128xf32>
    %18 = tpu.matmul %15, %17, %cst_19 {dimension_numbers = #tpu.dot_dimension_numbers<[1], [0], [0], [1], [0, 0, 1, 1], [], []>} : vector<256x128xf32>, vector<128x128xf32>, vector<256x128xf32> -> vector<256x128xf32>
    %19 = arith.addf %12, %18 : vector<256x128xf32>
    %c0_20 = arith.constant 0 : index
    %c1_21 = arith.constant 1 : index
    %c0_22 = arith.constant 0 : index
    %c0_23 = arith.constant 0 : index
    %20 = vector.load %arg1[%c0_20, %c1_21, %c0_22, %c0_23] : memref<1x18x18x128xf32, #tpu.memory_space<vmem>>, vector<1x16x16x128xf32>
    %21 = vector.shape_cast %20 : vector<1x16x16x128xf32> to vector<16x16x128xf32>
    %22 = vector.shape_cast %21 : vector<16x16x128xf32> to vector<256x128xf32>
    %c3 = arith.constant 3 : index
    %c0_24 = arith.constant 0 : index
    %c0_25 = arith.constant 0 : index
    %23 = vector.load %arg2[%c3, %c0_24, %c0_25] : memref<9x128x128xf32, #tpu.memory_space<vmem>>, vector<1x128x128xf32>
    %24 = vector.shape_cast %23 : vector<1x128x128xf32> to vector<128x128xf32>
    %cst_26 = arith.constant dense<0.000000e+00> : vector<256x128xf32>
    %25 = tpu.matmul %22, %24, %cst_26 {dimension_numbers = #tpu.dot_dimension_numbers<[1], [0], [0], [1], [0, 0, 1, 1], [], []>} : vector<256x128xf32>, vector<128x128xf32>, vector<256x128xf32> -> vector<256x128xf32>
    %26 = arith.addf %19, %25 : vector<256x128xf32>
    %c0_27 = arith.constant 0 : index
    %c1_28 = arith.constant 1 : index
    %c1_29 = arith.constant 1 : index
    %c0_30 = arith.constant 0 : index
    %27 = vector.load %arg1[%c0_27, %c1_28, %c1_29, %c0_30] : memref<1x18x18x128xf32, #tpu.memory_space<vmem>>, vector<1x16x16x128xf32>
    %28 = vector.shape_cast %27 : vector<1x16x16x128xf32> to vector<16x16x128xf32>
    %29 = vector.shape_cast %28 : vector<16x16x128xf32> to vector<256x128xf32>
    %c4 = arith.constant 4 : index
    %c0_31 = arith.constant 0 : index
    %c0_32 = arith.constant 0 : index
    %30 = vector.load %arg2[%c4, %c0_31, %c0_32] : memref<9x128x128xf32, #tpu.memory_space<vmem>>, vector<1x128x128xf32>
    %31 = vector.shape_cast %30 : vector<1x128x128xf32> to vector<128x128xf32>
    %cst_33 = arith.constant dense<0.000000e+00> : vector<256x128xf32>
    %32 = tpu.matmul %29, %31, %cst_33 {dimension_numbers = #tpu.dot_dimension_numbers<[1], [0], [0], [1], [0, 0, 1, 1], [], []>} : vector<256x128xf32>, vector<128x128xf32>, vector<256x128xf32> -> vector<256x128xf32>
    %33 = arith.addf %26, %32 : vector<256x128xf32>
    %c0_34 = arith.constant 0 : index
    %c1_35 = arith.constant 1 : index
    %c2_36 = arith.constant 2 : index
    %c0_37 = arith.constant 0 : index
    %34 = vector.load %arg1[%c0_34, %c1_35, %c2_36, %c0_37] : memref<1x18x18x128xf32, #tpu.memory_space<vmem>>, vector<1x16x16x128xf32>
    %35 = vector.shape_cast %34 : vector<1x16x16x128xf32> to vector<16x16x128xf32>
    %36 = vector.shape_cast %35 : vector<16x16x128xf32> to vector<256x128xf32>
    %c5 = arith.constant 5 : index
    %c0_38 = arith.constant 0 : index
    %c0_39 = arith.constant 0 : index
    %37 = vector.load %arg2[%c5, %c0_38, %c0_39] : memref<9x128x128xf32, #tpu.memory_space<vmem>>, vector<1x128x128xf32>
    %38 = vector.shape_cast %37 : vector<1x128x128xf32> to vector<128x128xf32>
    %cst_40 = arith.constant dense<0.000000e+00> : vector<256x128xf32>
    %39 = tpu.matmul %36, %38, %cst_40 {dimension_numbers = #tpu.dot_dimension_numbers<[1], [0], [0], [1], [0, 0, 1, 1], [], []>} : vector<256x128xf32>, vector<128x128xf32>, vector<256x128xf32> -> vector<256x128xf32>
    %40 = arith.addf %33, %39 : vector<256x128xf32>
    %c0_41 = arith.constant 0 : index
    %c2_42 = arith.constant 2 : index
    %c0_43 = arith.constant 0 : index
    %c0_44 = arith.constant 0 : index
    %41 = vector.load %arg1[%c0_41, %c2_42, %c0_43, %c0_44] : memref<1x18x18x128xf32, #tpu.memory_space<vmem>>, vector<1x16x16x128xf32>
    %42 = vector.shape_cast %41 : vector<1x16x16x128xf32> to vector<16x16x128xf32>
    %43 = vector.shape_cast %42 : vector<16x16x128xf32> to vector<256x128xf32>
    %c6 = arith.constant 6 : index
    %c0_45 = arith.constant 0 : index
    %c0_46 = arith.constant 0 : index
    %44 = vector.load %arg2[%c6, %c0_45, %c0_46] : memref<9x128x128xf32, #tpu.memory_space<vmem>>, vector<1x128x128xf32>
    %45 = vector.shape_cast %44 : vector<1x128x128xf32> to vector<128x128xf32>
    %cst_47 = arith.constant dense<0.000000e+00> : vector<256x128xf32>
    %46 = tpu.matmul %43, %45, %cst_47 {dimension_numbers = #tpu.dot_dimension_numbers<[1], [0], [0], [1], [0, 0, 1, 1], [], []>} : vector<256x128xf32>, vector<128x128xf32>, vector<256x128xf32> -> vector<256x128xf32>
    %47 = arith.addf %40, %46 : vector<256x128xf32>
    %c0_48 = arith.constant 0 : index
    %c2_49 = arith.constant 2 : index
    %c1_50 = arith.constant 1 : index
    %c0_51 = arith.constant 0 : index
    %48 = vector.load %arg1[%c0_48, %c2_49, %c1_50, %c0_51] : memref<1x18x18x128xf32, #tpu.memory_space<vmem>>, vector<1x16x16x128xf32>
    %49 = vector.shape_cast %48 : vector<1x16x16x128xf32> to vector<16x16x128xf32>
    %50 = vector.shape_cast %49 : vector<16x16x128xf32> to vector<256x128xf32>
    %c7 = arith.constant 7 : index
    %c0_52 = arith.constant 0 : index
    %c0_53 = arith.constant 0 : index
    %51 = vector.load %arg2[%c7, %c0_52, %c0_53] : memref<9x128x128xf32, #tpu.memory_space<vmem>>, vector<1x128x128xf32>
    %52 = vector.shape_cast %51 : vector<1x128x128xf32> to vector<128x128xf32>
    %cst_54 = arith.constant dense<0.000000e+00> : vector<256x128xf32>
    %53 = tpu.matmul %50, %52, %cst_54 {dimension_numbers = #tpu.dot_dimension_numbers<[1], [0], [0], [1], [0, 0, 1, 1], [], []>} : vector<256x128xf32>, vector<128x128xf32>, vector<256x128xf32> -> vector<256x128xf32>
    %54 = arith.addf %47, %53 : vector<256x128xf32>
    %c0_55 = arith.constant 0 : index
    %c2_56 = arith.constant 2 : index
    %c2_57 = arith.constant 2 : index
    %c0_58 = arith.constant 0 : index
    %55 = vector.load %arg1[%c0_55, %c2_56, %c2_57, %c0_58] : memref<1x18x18x128xf32, #tpu.memory_space<vmem>>, vector<1x16x16x128xf32>
    %56 = vector.shape_cast %55 : vector<1x16x16x128xf32> to vector<16x16x128xf32>
    %57 = vector.shape_cast %56 : vector<16x16x128xf32> to vector<256x128xf32>
    %c8 = arith.constant 8 : index
    %c0_59 = arith.constant 0 : index
    %c0_60 = arith.constant 0 : index
    %58 = vector.load %arg2[%c8, %c0_59, %c0_60] : memref<9x128x128xf32, #tpu.memory_space<vmem>>, vector<1x128x128xf32>
    %59 = vector.shape_cast %58 : vector<1x128x128xf32> to vector<128x128xf32>
    %cst_61 = arith.constant dense<0.000000e+00> : vector<256x128xf32>
    %60 = tpu.matmul %57, %59, %cst_61 {dimension_numbers = #tpu.dot_dimension_numbers<[1], [0], [0], [1], [0, 0, 1, 1], [], []>} : vector<256x128xf32>, vector<128x128xf32>, vector<256x128xf32> -> vector<256x128xf32>
    %61 = arith.addf %54, %60 : vector<256x128xf32>
    %c0_62 = arith.constant 0 : index
    %c0_63 = arith.constant 0 : index
    %c0_64 = arith.constant 0 : index
    %62 = vector.load %arg4[%c0_62, %c0_63, %c0_64] : memref<1x256x128xf32, #tpu.memory_space<vmem>>, vector<1x256x128xf32>
    %63 = vector.shape_cast %62 : vector<1x256x128xf32> to vector<256x128xf32>
    %64 = vector.shape_cast %61 : vector<256x128xf32> to vector<1x256x128xf32>
    tpu.vector_store %arg4[%c0_62, %c0_63, %c0_64], %64 {strides = array<i32>} : memref<1x256x128xf32, #tpu.memory_space<vmem>>, vector<1x256x128xf32>,
    %cst_65 = arith.constant dense<0.000000e+00> : vector<128xf32>
    %65 = vector.multi_reduction <add>, %61, %cst_65 [0] : vector<256x128xf32> to vector<128xf32>
    %66 = vector.shape_cast %65 : vector<128xf32> to vector<1x128xf32>
    %cst_66 = arith.constant 3.906250e-03 : f32
    %67 = vector.broadcast %cst_66 : f32 to vector<1x128xf32>
    %68 = arith.mulf %66, %67 : vector<1x128xf32>
    %69 = vector.broadcast %68 : vector<1x128xf32> to vector<256x128xf32>
    %70 = arith.subf %61, %69 : vector<256x128xf32>
    %c0_67 = arith.constant 0 : index
    %c0_68 = arith.constant 0 : index
    %c0_69 = arith.constant 0 : index
    %71 = vector.load %arg5[%c0_67, %c0_68, %c0_69] : memref<1x2x128xf32, #tpu.memory_space<vmem>>, vector<1x1x128xf32>
    %72 = vector.shape_cast %71 : vector<1x1x128xf32> to vector<1x128xf32>
    %73 = vector.shape_cast %66 : vector<1x128xf32> to vector<1x1x128xf32>
    tpu.vector_store %arg5[%c0_67, %c0_68, %c0_69], %73 {strides = array<i32>} : memref<1x2x128xf32, #tpu.memory_space<vmem>>, vector<1x1x128xf32>,
    %74 = arith.mulf %70, %70 : vector<256x128xf32>
    %cst_70 = arith.constant dense<0.000000e+00> : vector<128xf32>
    %75 = vector.multi_reduction <add>, %74, %cst_70 [0] : vector<256x128xf32> to vector<128xf32>
    %76 = vector.shape_cast %75 : vector<128xf32> to vector<1x128xf32>
    %c0_71 = arith.constant 0 : index
    %c1_72 = arith.constant 1 : index
    %c0_73 = arith.constant 0 : index
    %77 = vector.load %arg5[%c0_71, %c1_72, %c0_73] : memref<1x2x128xf32, #tpu.memory_space<vmem>>, vector<1x1x128xf32>
    %78 = vector.shape_cast %77 : vector<1x1x128xf32> to vector<1x128xf32>
    %79 = vector.shape_cast %76 : vector<1x128xf32> to vector<1x1x128xf32>
    tpu.vector_store %arg5[%c0_71, %c1_72, %c0_73], %79 {strides = array<i32>} : memref<1x2x128xf32, #tpu.memory_space<vmem>>, vector<1x1x128xf32>,
    %c0_74 = arith.constant 0 : index
    %c1_75 = arith.constant 1 : index
    %c1_76 = arith.constant 1 : index
    %c0_77 = arith.constant 0 : index
    %80 = vector.load %arg1[%c0_74, %c1_75, %c1_76, %c0_77] : memref<1x18x18x128xf32, #tpu.memory_space<vmem>>, vector<1x16x16x128xf32>
    %81 = vector.shape_cast %80 : vector<1x16x16x128xf32> to vector<16x16x128xf32>
    %82 = vector.shape_cast %81 : vector<16x16x128xf32> to vector<256x128xf32>
    %c0_78 = arith.constant 0 : index
    %c0_79 = arith.constant 0 : index
    %83 = vector.load %arg3[%c0_78, %c0_79] : memref<128x128xf32, #tpu.memory_space<vmem>>, vector<128x128xf32>
    %cst_80 = arith.constant dense<0.000000e+00> : vector<256x128xf32>
    %84 = tpu.matmul %82, %83, %cst_80 {dimension_numbers = #tpu.dot_dimension_numbers<[1], [0], [0], [1], [0, 0, 1, 1], [], []>} : vector<256x128xf32>, vector<128x128xf32>, vector<256x128xf32> -> vector<256x128xf32>
    %c0_81 = arith.constant 0 : index
    %c0_82 = arith.constant 0 : index
    %c0_83 = arith.constant 0 : index
    %85 = vector.load %arg6[%c0_81, %c0_82, %c0_83] : memref<1x256x128xf32, #tpu.memory_space<vmem>>, vector<1x256x128xf32>
    %86 = vector.shape_cast %85 : vector<1x256x128xf32> to vector<256x128xf32>
    %87 = vector.shape_cast %84 : vector<256x128xf32> to vector<1x256x128xf32>
    tpu.vector_store %arg6[%c0_81, %c0_82, %c0_83], %87 {strides = array<i32>} : memref<1x256x128xf32, #tpu.memory_space<vmem>>, vector<1x256x128xf32>,
    %cst_84 = arith.constant dense<0.000000e+00> : vector<128xf32>
    %88 = vector.multi_reduction <add>, %84, %cst_84 [0] : vector<256x128xf32> to vector<128xf32>
    %89 = vector.shape_cast %88 : vector<128xf32> to vector<1x128xf32>
    %cst_85 = arith.constant 3.906250e-03 : f32
    %90 = vector.broadcast %cst_85 : f32 to vector<1x128xf32>
    %91 = arith.mulf %89, %90 : vector<1x128xf32>
    %92 = vector.broadcast %91 : vector<1x128xf32> to vector<256x128xf32>
    %93 = arith.subf %84, %92 : vector<256x128xf32>
    %c0_86 = arith.constant 0 : index
    %c0_87 = arith.constant 0 : index
    %c0_88 = arith.constant 0 : index
    %94 = vector.load %arg7[%c0_86, %c0_87, %c0_88] : memref<1x2x128xf32, #tpu.memory_space<vmem>>, vector<1x1x128xf32>
    %95 = vector.shape_cast %94 : vector<1x1x128xf32> to vector<1x128xf32>
    %96 = vector.shape_cast %89 : vector<1x128xf32> to vector<1x1x128xf32>
    tpu.vector_store %arg7[%c0_86, %c0_87, %c0_88], %96 {strides = array<i32>} : memref<1x2x128xf32, #tpu.memory_space<vmem>>, vector<1x1x128xf32>,
    %97 = arith.mulf %93, %93 : vector<256x128xf32>
    %cst_89 = arith.constant dense<0.000000e+00> : vector<128xf32>
    %98 = vector.multi_reduction <add>, %97, %cst_89 [0] : vector<256x128xf32> to vector<128xf32>
    %99 = vector.shape_cast %98 : vector<128xf32> to vector<1x128xf32>
    %c0_90 = arith.constant 0 : index
    %c1_91 = arith.constant 1 : index
    %c0_92 = arith.constant 0 : index
    %100 = vector.load %arg7[%c0_90, %c1_91, %c0_92] : memref<1x2x128xf32, #tpu.memory_space<vmem>>, vector<1x1x128xf32>
    %101 = vector.shape_cast %100 : vector<1x1x128xf32> to vector<1x128xf32>
    %102 = vector.shape_cast %99 : vector<1x128xf32> to vector<1x1x128xf32>
    tpu.vector_store %arg7[%c0_90, %c1_91, %c0_92], %102 {strides = array<i32>} : memref<1x2x128xf32, #tpu.memory_space<vmem>>, vector<1x1x128xf32>,
    return
  }
  func.func @transform_0(%arg0: i32) -> (i32, i32, i32, i32) {
    %c0_i32 = arith.constant 0 : i32
    %c0_i32_0 = arith.constant 0 : i32
    %c0_i32_1 = arith.constant 0 : i32
    %c0_i32_2 = arith.constant 0 : i32
    return %arg0, %c0_i32, %c0_i32_0, %c0_i32_1 : i32, i32, i32, i32
  }
  func.func @transform_1(%arg0: i32) -> (i32, i32, i32) {
    %c0_i32 = arith.constant 0 : i32
    %c0_i32_0 = arith.constant 0 : i32
    %c0_i32_1 = arith.constant 0 : i32
    %c0_i32_2 = arith.constant 0 : i32
    return %c0_i32, %c0_i32_0, %c0_i32_1 : i32, i32, i32
  }
  func.func @transform_2(%arg0: i32) -> (i32, i32) {
    %c0_i32 = arith.constant 0 : i32
    %c0_i32_0 = arith.constant 0 : i32
    %c0_i32_1 = arith.constant 0 : i32
    return %c0_i32, %c0_i32_0 : i32, i32
  }
  func.func @transform_3(%arg0: i32) -> (i32, i32, i32) {
    %c0_i32 = arith.constant 0 : i32
    %c0_i32_0 = arith.constant 0 : i32
    %c0_i32_1 = arith.constant 0 : i32
    return %arg0, %c0_i32, %c0_i32_0 : i32, i32, i32
  }
  func.func @transform_4(%arg0: i32) -> (i32, i32, i32) {
    %c0_i32 = arith.constant 0 : i32
    %c0_i32_0 = arith.constant 0 : i32
    %c0_i32_1 = arith.constant 0 : i32
    return %arg0, %c0_i32, %c0_i32_0 : i32, i32, i32
  }
  func.func @transform_5(%arg0: i32) -> (i32, i32, i32) {
    %c0_i32 = arith.constant 0 : i32
    %c0_i32_0 = arith.constant 0 : i32
    %c0_i32_1 = arith.constant 0 : i32
    return %arg0, %c0_i32, %c0_i32_0 : i32, i32, i32
  }
  func.func @transform_6(%arg0: i32) -> (i32, i32, i32) {
    %c0_i32 = arith.constant 0 : i32
    %c0_i32_0 = arith.constant 0 : i32
    %c0_i32_1 = arith.constant 0 : i32
    return %arg0, %c0_i32, %c0_i32_0 : i32, i32, i32
  }
}

</mosaic_0001>

<llo_original>
// kernel: tpu_custom_call.1
$region0: #{tpu_custom_call.1}
  #allocation0 [shape = 'u32[]', space=smem, size = 0x4, offset = 0x4, fixed_abs, tag = 'smem constant byte address 0x4 - core index']
  #allocation1 [shape = 'u32[144,128]{1,0:T(1,128)}', space=vmem, size = 0x12000, scoped, tag = 'internal scratch']
  %s0 = inlined_call_operand.vmem [shape: f32[2,18,18,128], index: 0, kind: input, shape index: {}]
  %s1 = inlined_call_operand.vmem [shape: f32[9,128,128], index: 1, kind: input, shape index: {}]
  %s2 = inlined_call_operand.vmem [shape: f32[128,128], index: 2, kind: input, shape index: {}]
  %s3 = inlined_call_operand.hbm [shape: f32[2,256,128], index: 3, kind: output, shape index: {0}]
  %s4 = inlined_call_operand.hbm [shape: f32[2,2,128], index: 4, kind: output, shape index: {1}]
  %s5 = inlined_call_operand.hbm [shape: f32[2,256,128], index: 5, kind: output, shape index: {2}]
  %s6 = inlined_call_operand.hbm [shape: f32[2,2,128], index: 6, kind: output, shape index: {3}]
  %7 = xla_tuple %s3, %s4, %s5, %s6
  %s8 = sld [smem:[#allocation0]]
  $region69: #{tpu_custom_call.1} parent=0
    _
  %s10 = ssub.s32 1, %s8
  %s11 = scalar_select 0, %s10, %s8
  $region1: #{tpu_custom_call.1} parent=0
    #allocation2 [shape = 'u8[262144]{0}', space=vmem, size = 0x40000, scoped, tag = 'output window, operand 0']
    #allocation3 [shape = 's32[2]{0}', space=sflag, size = 0x8, scoped, tag = 'scoped memory for tpu_custom_call.1']
    #allocation4 [shape = 'u8[2048]{0}', space=vmem, size = 0x800, scoped, tag = 'output window, operand 1']
    #allocation5 [shape = 's32[2]{0}', space=sflag, size = 0x8, scoped, tag = 'scoped memory for tpu_custom_call.1']
    #allocation6 [shape = 'u8[262144]{0}', space=vmem, size = 0x40000, scoped, tag = 'output window, operand 2']
    #allocation7 [shape = 'u8[2048]{0}', space=vmem, size = 0x800, scoped, tag = 'output window, operand 3']
    #allocation8 [shape = 's32[2]{0}', space=sflag, size = 0x8, scoped, tag = 'scoped memory for tpu_custom_call.1']
    %12 = vsyncpa [#allocation3], 0
    %s13 = scalar_lea.sflag [#allocation3], 1
    %14 = vsyncpa %s13, 0
    %15 = vsyncpa [#allocation5], 0
    %s16 = scalar_lea.sflag [#allocation5], 1
    %17 = vsyncpa %s16, 0
    %18 = vsyncpa [#allocation8], 0
    %s19 = scalar_lea.sflag [#allocation8], 1
    %20 = vsyncpa %s19, 0
    loop: start=0, step=1, limit=4
    $region2: #{tpu_custom_call.1} parent=1 // loop_pre_header
      _
    $region3: #{tpu_custom_call.1} parent=1 // loop_header
      %s22 = sphi 0, %s26
      %p23 = scmp.ge.s32.totalorder %s22, 4
      %s32 = sphi 0, %s34
      %s35 = sphi 0, %s32
      %s36 = sphi 0, %s35
      %s52 = sphi 0, %s36
      %s56 = sphi 0, %s56
      %s58 = sphi 0, %s56
      %s59 = sphi 0, %s58
      %s73 = sphi 0, %s59
      %s77 = sphi 0, %s77
      %s79 = sphi 0, %s77
      %s80 = sphi 0, %s79
      %s94 = sphi 0, %s80
      %s100 = sphi 0, %s102
      %s103 = sphi 0, %s100
      %s104 = sphi 0, %s103
      %s120 = sphi 0, %s104
      %s126 = sphi 0, %s128
      %s129 = sphi 0, %s126
      %s130 = sphi 0, %s129
      %s146 = sphi 0, %s130
      %s152 = sphi 0, %s154
      %s155 = sphi 0, %s152
      %s156 = sphi 0, %s155
      %s172 = sphi 0, %s156
      %s178 = sphi 0, %s180
      %s181 = sphi 0, %s178
      %s182 = sphi 0, %s181
      %s198 = sphi 0, %s182
    $region4: #{tpu_custom_call.1} parent=1 // loop_header_branch
      %25 = sbr.rel (%p23) target = $region8
    $region5: #{tpu_custom_call.1} parent=1 // loop_body
      %s27 = ssub.s32 %s22, 1
      %s28 = ssub.s32 %s22, 2
      %s29 = sadd.s32 %s22, 1
      %s30 = ssub.s32 %s22, %s29
      %p31 = scmp.eq.s32.totalorder %s30, 0
      %s33 = sadd.s32 %s32, 1
      %s34 = scalar_select %p31, %s32, %s33
      %p37 = pneg %p31
      %p38 = scmp.eq.s32.totalorder %s22, 1
      %p39 = por %p37, %p38
      %p40 = scmp.ne.s32.totalorder %s32, %s35
      %p41 = scmp.eq.s32.totalorder %s22, 0
      %p42 = por %p40, %p41
      %p43 = scmp.ne.s32.totalorder %s32, %s35
      %p44 = scmp.eq.s32.totalorder %s27, 1
      %p45 = por %p43, %p44
      %p46 = scmp.ne.s32.totalorder %s35, %s36
      %p47 = scmp.eq.s32.totalorder %s27, 0
      %p48 = por %p46, %p47
      %p49 = scmp.ne.s32.totalorder %s35, %s36
      %p50 = scmp.eq.s32.totalorder %s28, 1
      %p51 = por %p49, %p50
      %p53 = scmp.ne.s32.totalorder %s36, %s52
      %p54 = scmp.eq.s32.totalorder %s28, 0
      %p55 = por %p53, %p54
      %s57 = sadd.s32 %s56, 1
      %p60 = scmp.eq.s32.totalorder %s22, 1
      %p61 = scmp.ne.s32.totalorder %s56, %s58
      %p62 = scmp.eq.s32.totalorder %s22, 0
      %p63 = por %p61, %p62
      %p64 = scmp.ne.s32.totalorder %s56, %s58
      %p65 = scmp.eq.s32.totalorder %s27, 1
      %p66 = por %p64, %p65
      %p67 = scmp.ne.s32.totalorder %s58, %s59
      %p68 = scmp.eq.s32.totalorder %s27, 0
      %p69 = por %p67, %p68
      %p70 = scmp.ne.s32.totalorder %s58, %s59
      %p71 = scmp.eq.s32.totalorder %s28, 1
      %p72 = por %p70, %p71
      %p74 = scmp.ne.s32.totalorder %s59, %s73
      %p75 = scmp.eq.s32.totalorder %s28, 0
      %p76 = por %p74, %p75
      %s78 = sadd.s32 %s77, 1
      %p81 = scmp.eq.s32.totalorder %s22, 1
      %p82 = scmp.ne.s32.totalorder %s77, %s79
      %p83 = scmp.eq.s32.totalorder %s22, 0
      %p84 = por %p82, %p83
      %p85 = scmp.ne.s32.totalorder %s77, %s79
      %p86 = scmp.eq.s32.totalorder %s27, 1
      %p87 = por %p85, %p86
      %p88 = scmp.ne.s32.totalorder %s79, %s80
      %p89 = scmp.eq.s32.totalorder %s27, 0
      %p90 = por %p88, %p89
      %p91 = scmp.ne.s32.totalorder %s79, %s80
      %p92 = scmp.eq.s32.totalorder %s28, 1
      %p93 = por %p91, %p92
      %p95 = scmp.ne.s32.totalorder %s80, %s94
      %p96 = scmp.eq.s32.totalorder %s28, 0
      %p97 = por %p95, %p96
      %s98 = ssub.s32 %s22, %s29
      %p99 = scmp.eq.s32.totalorder %s98, 0
      %s101 = sadd.s32 %s100, 1
      %s102 = scalar_select %p99, %s100, %s101
      %p105 = pneg %p99
      %p106 = scmp.eq.s32.totalorder %s22, 1
      %p107 = por %p105, %p106
      %p108 = scmp.ne.s32.totalorder %s100, %s103
      %p109 = scmp.eq.s32.totalorder %s22, 0
      %p110 = por %p108, %p109
      %p111 = scmp.ne.s32.totalorder %s100, %s103
      %p112 = scmp.eq.s32.totalorder %s27, 1
      %p113 = por %p111, %p112
      %p114 = scmp.ne.s32.totalorder %s103, %s104
      %p115 = scmp.eq.s32.totalorder %s27, 0
      %p116 = por %p114, %p115
      %p117 = scmp.ne.s32.totalorder %s103, %s104
      %p118 = scmp.eq.s32.totalorder %s28, 1
      %p119 = por %p117, %p118
      %p121 = scmp.ne.s32.totalorder %s104, %s120
      %p122 = scmp.eq.s32.totalorder %s28, 0
      %p123 = por %p121, %p122
      %s124 = ssub.s32 %s22, %s29
      %p125 = scmp.eq.s32.totalorder %s124, 0
      %s127 = sadd.s32 %s126, 1
      %s128 = scalar_select %p125, %s126, %s127
      %p131 = pneg %p125
      %p132 = scmp.eq.s32.totalorder %s22, 1
      %p133 = por %p131, %p132
      %p134 = scmp.ne.s32.totalorder %s126, %s129
      %p135 = scmp.eq.s32.totalorder %s22, 0
      %p136 = por %p134, %p135
      %p137 = scmp.ne.s32.totalorder %s126, %s129
      %p138 = scmp.eq.s32.totalorder %s27, 1
      %p139 = por %p137, %p138
      %p140 = scmp.ne.s32.totalorder %s129, %s130
      %p141 = scmp.eq.s32.totalorder %s27, 0
      %p142 = por %p140, %p141
      %p143 = scmp.ne.s32.totalorder %s129, %s130
      %p144 = scmp.eq.s32.totalorder %s28, 1
      %p145 = por %p143, %p144
      %p147 = scmp.ne.s32.totalorder %s130, %s146
      %p148 = scmp.eq.s32.totalorder %s28, 0
      %p149 = por %p147, %p148
      %s150 = ssub.s32 %s22, %s29
      %p151 = scmp.eq.s32.totalorder %s150, 0
      %s153 = sadd.s32 %s152, 1
      %s154 = scalar_select %p151, %s152, %s153
      %p157 = pneg %p151
      %p158 = scmp.eq.s32.totalorder %s22, 1
      %p159 = por %p157, %p158
      %p160 = scmp.ne.s32.totalorder %s152, %s155
      %p161 = scmp.eq.s32.totalorder %s22, 0
      %p162 = por %p160, %p161
      %p163 = scmp.ne.s32.totalorder %s152, %s155
      %p164 = scmp.eq.s32.totalorder %s27, 1
      %p165 = por %p163, %p164
      %p166 = scmp.ne.s32.totalorder %s155, %s156
      %p167 = scmp.eq.s32.totalorder %s27, 0
      %p168 = por %p166, %p167
      %p169 = scmp.ne.s32.totalorder %s155, %s156
      %p170 = scmp.eq.s32.totalorder %s28, 1
      %p171 = por %p169, %p170
      %p173 = scmp.ne.s32.totalorder %s156, %s172
      %p174 = scmp.eq.s32.totalorder %s28, 0
      %p175 = por %p173, %p174
      %s176 = ssub.s32 %s22, %s29
      %p177 = scmp.eq.s32.totalorder %s176, 0
      %s179 = sadd.s32 %s178, 1
      %s180 = scalar_select %p177, %s178, %s179
      %p183 = pneg %p177
      %p184 = scmp.eq.s32.totalorder %s22, 1
      %p185 = por %p183, %p184
      %p186 = scmp.ne.s32.totalorder %s178, %s181
      %p187 = scmp.eq.s32.totalorder %s22, 0
      %p188 = por %p186, %p187
      %p189 = scmp.ne.s32.totalorder %s178, %s181
      %p190 = scmp.eq.s32.totalorder %s27, 1
      %p191 = por %p189, %p190
      %p192 = scmp.ne.s32.totalorder %s181, %s182
      %p193 = scmp.eq.s32.totalorder %s27, 0
      %p194 = por %p192, %p193
      %p195 = scmp.ne.s32.totalorder %s181, %s182
      %p196 = scmp.eq.s32.totalorder %s28, 1
      %p197 = por %p195, %p196
      %p199 = scmp.ne.s32.totalorder %s182, %s198
      %p200 = scmp.eq.s32.totalorder %s28, 0
      %p201 = por %p199, %p200
      %p202 = scmp.le.s32.totalorder 1, %s22
      %p203 = scmp.lt.s32.totalorder %s22, 3
      %p204 = pnand %p202, %p203
      %p205 = pneg %p204
      // Predicated region
      $region9: #{tpu_custom_call.1} parent=5 // pred_check
        _
      $region10: #{tpu_custom_call.1} parent=5 // pred_check_branch
        %207 = sbr.rel (%p204) target = $region12
      $region11: #{tpu_custom_call.1} parent=5 // pred_region
        %s208 = ssub.s32 %s22, 1
        // Predicated region
        $region13: #{tpu_custom_call.1} parent=11 // pred_check
          %p209 = pneg %p69
        $region14: #{tpu_custom_call.1} parent=11 // pred_check_branch
          %211 = sbr.rel (%p209) target = $region16
        $region15: #{tpu_custom_call.1} parent=11 // pred_region
          _
        $region16: #{tpu_custom_call.1} parent=11 // pred_fallthru
          _
        // Predicated region
        $region17: #{tpu_custom_call.1} parent=11 // pred_check
          %p212 = pneg %p90
        $region18: #{tpu_custom_call.1} parent=11 // pred_check_branch
          %214 = sbr.rel (%p212) target = $region20
        $region19: #{tpu_custom_call.1} parent=11 // pred_region
          _
        $region20: #{tpu_custom_call.1} parent=11 // pred_fallthru
          _
      $region12: #{tpu_custom_call.1} parent=5 // pred_fallthru
        _
      %p215 = scmp.lt.s32.totalorder %s22, 2
      // Predicated region
      $region21: #{tpu_custom_call.1} parent=5 // pred_check
        %p216 = pneg %p215
      $region22: #{tpu_custom_call.1} parent=5 // pred_check_branch
        %218 = sbr.rel (%p216) target = $region24
      $region23: #{tpu_custom_call.1} parent=5 // pred_region
        // Predicated region
        $region25: #{tpu_custom_call.1} parent=23 // pred_check
          %p219 = pneg %p42
        $region26: #{tpu_custom_call.1} parent=23 // pred_check_branch
          %221 = sbr.rel (%p219) target = $region28
        $region27: #{tpu_custom_call.1} parent=23 // pred_region
          %p222 = scmp.lt.s32.totalorder %s22, 1
          %s223 = scalar_select %p222, %s22, 1
          %s224 = smul.addr %s223, 54
          %s225 = smul.addr %s224, 8
          %s226 = scalar_lea.vmem %s0, %s225
        $region28: #{tpu_custom_call.1} parent=23 // pred_fallthru
          _
      $region24: #{tpu_custom_call.1} parent=5 // pred_fallthru
        _
      %p227 = scmp.le.s32.totalorder 1, %s22
      %p228 = scmp.lt.s32.totalorder %s22, 3
      %p229 = pnand %p227, %p228
      %p230 = pneg %p229
      // Predicated region
      $region29: #{tpu_custom_call.1} parent=5 // pred_check
        _
      $region30: #{tpu_custom_call.1} parent=5 // pred_check_branch
        %232 = sbr.rel (%p229) target = $region32
      $region31: #{tpu_custom_call.1} parent=5 // pred_region
        %s233 = ssub.s32 %s22, 1
        %p234 = scmp.lt.s32.totalorder %s27, 1
        %s235 = scalar_select %p234, %s27, 1
        %s236 = smul.addr %s235, 54
        %s237 = smul.addr %s236, 8
        %s238 = scalar_lea.vmem %s0, %s237
        %p239 = pneg %p48
        %p240 = pneg %p45
        %p241 = pneg %p69
        %p242 = pneg %p66
        %p243 = pneg %p90
        %p244 = pneg %p87
        %p245 = pneg %p116
        %p246 = pneg %p113
        %s247 = sand.u32 %s103, 1
        %s248 = scalar_lea.sflag [#allocation3], %s247
        %s249 = sand.u32 %s103, 1
        %s250 = smul.addr %s249, 256
        %s251 = scalar_lea.vmem [#allocation2], %s250
        %p252 = pneg %p142
        %p253 = pneg %p139
        %s254 = sand.u32 %s27, 1
        %s255 = scalar_lea.sflag [#allocation5], %s254
        %s256 = sand.u32 %s129, 1
        %s257 = smul.addr %s256, 2
        %s258 = scalar_lea.vmem [#allocation4], %s257
        %p259 = pneg %p168
        %p260 = pneg %p165
        %s261 = sand.u32 %s27, 1
        %s262 = scalar_lea.sflag [#allocation5], %s261
        %s263 = sand.u32 %s155, 1
        %s264 = smul.addr %s263, 256
        %s265 = scalar_lea.vmem [#allocation6], %s264
        %p266 = pneg %p194
        %p267 = pneg %p191
        %s268 = sand.u32 %s181, 1
        %s269 = scalar_lea.sflag [#allocation8], %s268
        %s270 = sand.u32 %s181, 1
        %s271 = smul.addr %s270, 2
        %s272 = scalar_lea.vmem [#allocation7], %s271
        %p273 = scmp.lt.s32.totalorder %s27, 1
        %s274 = scalar_select %p273, %s27, 1
        %s275 = smul.addr %s274, 54
        %s276 = smul.addr %s275, 8
        %s277 = scalar_lea.vmem %s0, %s276
        %v278 = vld [vmem:[%s277] sm:$0xff]
        %v279 = vld [vmem:[%s277 + $0x8] sm:$0xff]
        %v280 = vld [vmem:[%s277 + $0x18] sm:$0xff]
        %v281 = vld [vmem:[%s277 + $0x20] sm:$0xff]
        %v282 = vld [vmem:[%s277 + $0x30] sm:$0xff]
        %v283 = vld [vmem:[%s277 + $0x38] sm:$0xff]
        %v284 = vld [vmem:[%s277 + $0x48] sm:$0xff]
        %v285 = vld [vmem:[%s277 + $0x50] sm:$0xff]
        %v286 = vld [vmem:[%s277 + $0x60] sm:$0xff]
        %v287 = vld [vmem:[%s277 + $0x68] sm:$0xff]
        %v288 = vld [vmem:[%s277 + $0x78] sm:$0xff]
        %v289 = vld [vmem:[%s277 + $0x80] sm:$0xff]
        %v290 = vld [vmem:[%s277 + $0x90] sm:$0xff]
        %v291 = vld [vmem:[%s277 + $0x98] sm:$0xff]
        %v292 = vld [vmem:[%s277 + $0xa8] sm:$0xff]
        %v293 = vld [vmem:[%s277 + $0xb0] sm:$0xff]
        %v294 = vld [vmem:[%s277 + $0xc0] sm:$0xff]
        %v295 = vld [vmem:[%s277 + $0xc8] sm:$0xff]
        %v296 = vld [vmem:[%s277 + $0xd8] sm:$0xff]
        %v297 = vld [vmem:[%s277 + $0xe0] sm:$0xff]
        %v298 = vld [vmem:[%s277 + $0xf0] sm:$0xff]
        %v299 = vld [vmem:[%s277 + $0xf8] sm:$0xff]
        %v300 = vld [vmem:[%s277 + $0x108] sm:$0xff]
        %v301 = vld [vmem:[%s277 + $0x110] sm:$0xff]
        %v302 = vld [vmem:[%s277 + $0x120] sm:$0xff]
        %v303 = vld [vmem:[%s277 + $0x128] sm:$0xff]
        %v304 = vld [vmem:[%s277 + $0x138] sm:$0xff]
        %v305 = vld [vmem:[%s277 + $0x140] sm:$0xff]
        %v306 = vld [vmem:[%s277 + $0x150] sm:$0xff]
        %v307 = vld [vmem:[%s277 + $0x158] sm:$0xff]
        %v308 = vld [vmem:[%s277 + $0x168] sm:$0xff]
        %v309 = vld [vmem:[%s277 + $0x170] sm:$0xff]
        %v310 = vld [vmem:[%s1] sm:$0xff]
        %v311 = vld [vmem:[%s1 + $0x8] sm:$0xff]
        %v312 = vld [vmem:[%s1 + $0x10] sm:$0xff]
        %v313 = vld [vmem:[%s1 + $0x18] sm:$0xff]
        %v314 = vld [vmem:[%s1 + $0x20] sm:$0xff]
        %v315 = vld [vmem:[%s1 + $0x28] sm:$0xff]
        %v316 = vld [vmem:[%s1 + $0x30] sm:$0xff]
        %v317 = vld [vmem:[%s1 + $0x38] sm:$0xff]
        %v318 = vld [vmem:[%s1 + $0x40] sm:$0xff]
        %v319 = vld [vmem:[%s1 + $0x48] sm:$0xff]
        %v320 = vld [vmem:[%s1 + $0x50] sm:$0xff]
        %v321 = vld [vmem:[%s1 + $0x58] sm:$0xff]
        %v322 = vld [vmem:[%s1 + $0x60] sm:$0xff]
        %v323 = vld [vmem:[%s1 + $0x68] sm:$0xff]
        %v324 = vld [vmem:[%s1 + $0x70] sm:$0xff]
        %v325 = vld [vmem:[%s1 + $0x78] sm:$0xff]
        %v326 = vld [vmem:[%s277 + $0x1] sm:$0xff]
        %v327 = vld [vmem:[%s277 + $0x9] sm:$0xff]
        %v328 = vld [vmem:[%s277 + $0x19] sm:$0xff]
        %v329 = vld [vmem:[%s277 + $0x21] sm:$0xff]
        %v330 = vld [vmem:[%s277 + $0x31] sm:$0xff]
        %v331 = vld [vmem:[%s277 + $0x39] sm:$0xff]
        %v332 = vld [vmem:[%s277 + $0x49] sm:$0xff]
        %v333 = vld [vmem:[%s277 + $0x51] sm:$0xff]
        %v334 = vld [vmem:[%s277 + $0x61] sm:$0xff]
        %v335 = vld [vmem:[%s277 + $0x69] sm:$0xff]
        %v336 = vld [vmem:[%s277 + $0x79] sm:$0xff]
        %v337 = vld [vmem:[%s277 + $0x81] sm:$0xff]
        %v338 = vld [vmem:[%s277 + $0x91] sm:$0xff]
        %v339 = vld [vmem:[%s277 + $0x99] sm:$0xff]
        %v340 = vld [vmem:[%s277 + $0xa9] sm:$0xff]
        %v341 = vld [vmem:[%s277 + $0xb1] sm:$0xff]
        %v342 = vld [vmem:[%s277 + $0xc1] sm:$0xff]
        %v343 = vld [vmem:[%s277 + $0xc9] sm:$0xff]
        %v344 = vld [vmem:[%s277 + $0xd9] sm:$0xff]
        %v345 = vld [vmem:[%s277 + $0xe1] sm:$0xff]
        %v346 = vld [vmem:[%s277 + $0xf1] sm:$0xff]
        %v347 = vld [vmem:[%s277 + $0xf9] sm:$0xff]
        %v348 = vld [vmem:[%s277 + $0x109] sm:$0xff]
        %v349 = vld [vmem:[%s277 + $0x111] sm:$0xff]
        %v350 = vld [vmem:[%s277 + $0x121] sm:$0xff]
        %v351 = vld [vmem:[%s277 + $0x129] sm:$0xff]
        %v352 = vld [vmem:[%s277 + $0x139] sm:$0xff]
        %v353 = vld [vmem:[%s277 + $0x141] sm:$0xff]
        %v354 = vld [vmem:[%s277 + $0x151] sm:$0xff]
        %v355 = vld [vmem:[%s277 + $0x159] sm:$0xff]
        %v356 = vld [vmem:[%s277 + $0x169] sm:$0xff]
        %v357 = vld [vmem:[%s277 + $0x171] sm:$0xff]
        %s358 = scalar_lea.vmem %s1, 128
        %v359 = vld [vmem:[%s358] sm:$0xff]
        %v360 = vld [vmem:[%s358 + $0x8] sm:$0xff]
        %v361 = vld [vmem:[%s358 + $0x10] sm:$0xff]
        %v362 = vld [vmem:[%s358 + $0x18] sm:$0xff]
        %v363 = vld [vmem:[%s358 + $0x20] sm:$0xff]
        %v364 = vld [vmem:[%s358 + $0x28] sm:$0xff]
        %v365 = vld [vmem:[%s358 + $0x30] sm:$0xff]
        %v366 = vld [vmem:[%s358 + $0x38] sm:$0xff]
        %v367 = vld [vmem:[%s358 + $0x40] sm:$0xff]
        %v368 = vld [vmem:[%s358 + $0x48] sm:$0xff]
        %v369 = vld [vmem:[%s358 + $0x50] sm:$0xff]
        %v370 = vld [vmem:[%s358 + $0x58] sm:$0xff]
        %v371 = vld [vmem:[%s358 + $0x60] sm:$0xff]
        %v372 = vld [vmem:[%s358 + $0x68] sm:$0xff]
        %v373 = vld [vmem:[%s358 + $0x70] sm:$0xff]
        %v374 = vld [vmem:[%s358 + $0x78] sm:$0xff]
        %375 = vmatprep.subr.mxu0 0.0
        %376 = vmatpush1.msra.mxu0 %v359
        %377 = vmatprep.subr.mxu0 0.0
        %378 = vmatpush1.msra.mxu0 %v360
        %379 = vmatprep.subr.mxu0 0.0
        %380 = vmatpush1.msra.mxu0 %v361
        %381 = vmatprep.subr.mxu0 0.0
        %382 = vmatpush1.msra.mxu0 %v362
        %383 = vmatprep.subr.mxu0 0.0
        %384 = vmatpush1.msra.mxu0 %v363
        %385 = vmatprep.subr.mxu0 0.0
        %386 = vmatpush1.msra.mxu0 %v364
        %387 = vmatprep.subr.mxu0 0.0
        %388 = vmatpush1.msra.mxu0 %v365
        %389 = vmatprep.subr.mxu0 0.0
        %390 = vmatpush1.msra.mxu0 %v366
        %391 = vmatprep.subr.mxu0 0.0
        %392 = vmatpush1.msra.mxu0 %v367
        %393 = vmatprep.subr.mxu0 0.0
        %394 = vmatpush1.msra.mxu0 %v368
        %395 = vmatprep.subr.mxu0 0.0
        %396 = vmatpush1.msra.mxu0 %v369
        %397 = vmatprep.subr.mxu0 0.0
        %398 = vmatpush1.msra.mxu0 %v370
        %399 = vmatprep.subr.mxu0 0.0
        %400 = vmatpush1.msra.mxu0 %v371
        %401 = vmatprep.subr.mxu0 0.0
        %402 = vmatpush1.msra.mxu0 %v372
        %403 = vmatprep.subr.mxu0 0.0
        %404 = vmatpush1.msra.mxu0 %v373
        %405 = vmatprep.subr.mxu0 0.0
        %406 = vmatpush1.msra.mxu0 %v374
        %407 = vmatprep.subr.mxu0 0.0
        %408 = vmatpush1.msra.mxu0 0.0
        %409 = vmatprep.subr.mxu0 0.0
        %410 = vmatpush1.msra.mxu0 0.0
        %411 = vmatprep.subr.mxu0 0.0
        %412 = vmatpush1.msra.mxu0 0.0
        %413 = vmatprep.subr.mxu0 0.0
        %414 = vmatpush1.msra.mxu0 0.0
        %415 = vmatprep.subr.mxu0 0.0
        %416 = vmatpush1.msra.mxu0 0.0
        %417 = vmatprep.subr.mxu0 0.0
        %418 = vmatpush1.msra.mxu0 0.0
        %419 = vmatprep.subr.mxu0 0.0
        %420 = vmatpush1.msra.mxu0 0.0
        %421 = vmatprep.subr.mxu0 0.0
        %422 = vmatpush1.msra.mxu0 0.0
        %423 = vmatprep.subr.mxu0 0.0
        %424 = vmatpush1.msra.mxu0 0.0
        %425 = vmatprep.subr.mxu0 0.0
        %426 = vmatpush1.msra.mxu0 0.0
        %427 = vmatprep.subr.mxu0 0.0
        %428 = vmatpush1.msra.mxu0 0.0
        %429 = vmatprep.subr.mxu0 0.0
        %430 = vmatpush1.msra.mxu0 0.0
        %431 = vmatprep.subr.mxu0 0.0
        %432 = vmatpush1.msra.mxu0 0.0
        %433 = vmatprep.subr.mxu0 0.0
        %434 = vmatpush1.msra.mxu0 0.0
        %435 = vmatprep.subr.mxu0 0.0
        %436 = vmatpush1.msra.mxu0 0.0
        %437 = vmatprep.subr.mxu0 0.0
        %438 = vmatpush1.msra.mxu0 0.0
        %439 = vmatprep.mubr.f32.mxu0 0.0
        %440 = vmatmul.mubr.f32.gmra.mrb[0].mxu0 %v326
        %v441 = vpop.f32.mrb[0].mxu0
        %v442 = vadd.f32 0.0, %v441
        %v443 = vpop.f32.mrb[0].mxu0
        %444 = vmatprep.mubr.f32.mxu0 0.0
        %445 = vmatmul.mubr.f32.gmra.mrb[0].mxu0 %v327
        %v446 = vpop.f32.mrb[0].mxu0
        %v447 = vadd.f32 0.0, %v446
        %v448 = vpop.f32.mrb[0].mxu0
        %449 = vmatprep.mubr.f32.mxu0 0.0
        %450 = vmatmul.mubr.f32.gmra.mrb[0].mxu0 %v328
        %v451 = vpop.f32.mrb[0].mxu0
        %v452 = vadd.f32 0.0, %v451
        %v453 = vpop.f32.mrb[0].mxu0
        %454 = vmatprep.mubr.f32.mxu0 0.0
        %455 = vmatmul.mubr.f32.gmra.mrb[0].mxu0 %v329
        %v456 = vpop.f32.mrb[0].mxu0
        %v457 = vadd.f32 0.0, %v456
        %v458 = vpop.f32.mrb[0].mxu0
        %459 = vmatprep.mubr.f32.mxu0 0.0
        %460 = vmatmul.mubr.f32.gmra.mrb[0].mxu0 %v330
        %v461 = vpop.f32.mrb[0].mxu0
        %v462 = vadd.f32 0.0, %v461
        %v463 = vpop.f32.mrb[0].mxu0
        %464 = vmatprep.mubr.f32.mxu0 0.0
        %465 = vmatmul.mubr.f32.gmra.mrb[0].mxu0 %v331
        %v466 = vpop.f32.mrb[0].mxu0
        %v467 = vadd.f32 0.0, %v466
        %v468 = vpop.f32.mrb[0].mxu0
        %469 = vmatprep.mubr.f32.mxu0 0.0
        %470 = vmatmul.mubr.f32.gmra.mrb[0].mxu0 %v332
        %v471 = vpop.f32.mrb[0].mxu0
        %v472 = vadd.f32 0.0, %v471
        %v473 = vpop.f32.mrb[0].mxu0
        %474 = vmatprep.mubr.f32.mxu0 0.0
        %475 = vmatmul.mubr.f32.gmra.mrb[0].mxu0 %v333
        %v476 = vpop.f32.mrb[0].mxu0
        %v477 = vadd.f32 0.0, %v476
        %v478 = vpop.f32.mrb[0].mxu0
        %479 = vmatprep.mubr.f32.mxu0 0.0
        %480 = vmatmul.mubr.f32.gmra.mrb[0].mxu0 %v334
        %v481 = vpop.f32.mrb[0].mxu0
        %v482 = vadd.f32 0.0, %v481
        %v483 = vpop.f32.mrb[0].mxu0
        %484 = vmatprep.mubr.f32.mxu0 0.0
        %485 = vmatmul.mubr.f32.gmra.mrb[0].mxu0 %v335
        %v486 = vpop.f32.mrb[0].mxu0
        %v487 = vadd.f32 0.0, %v486
        %v488 = vpop.f32.mrb[0].mxu0
        %489 = vmatprep.mubr.f32.mxu0 0.0
        %490 = vmatmul.mubr.f32.gmra.mrb[0].mxu0 %v336
        %v491 = vpop.f32.mrb[0].mxu0
        %v492 = vadd.f32 0.0, %v491
        %v493 = vpop.f32.mrb[0].mxu0
        %494 = vmatprep.mubr.f32.mxu0 0.0
        %495 = vmatmul.mubr.f32.gmra.mrb[0].mxu0 %v337
        %v496 = vpop.f32.mrb[0].mxu0
        %v497 = vadd.f32 0.0, %v496
        %v498 = vpop.f32.mrb[0].mxu0
        %499 = vmatprep.mubr.f32.mxu0 0.0
        %500 = vmatmul.mubr.f32.gmra.mrb[0].mxu0 %v338
        %v501 = vpop.f32.mrb[0].mxu0
        %v502 = vadd.f32 0.0, %v501
        %v503 = vpop.f32.mrb[0].mxu0
        %504 = vmatprep.mubr.f32.mxu0 0.0
        %505 = vmatmul.mubr.f32.gmra.mrb[0].mxu0 %v339
        %v506 = vpop.f32.mrb[0].mxu0
        %v507 = vadd.f32 0.0, %v506
        %v508 = vpop.f32.mrb[0].mxu0
        %509 = vmatprep.mubr.f32.mxu0 0.0
        %510 = vmatmul.mubr.f32.gmra.mrb[0].mxu0 %v340
        %v511 = vpop.f32.mrb[0].mxu0
        %v512 = vadd.f32 0.0, %v511
        %v513 = vpop.f32.mrb[0].mxu0
        %514 = vmatprep.mubr.f32.mxu0 0.0
        %515 = vmatmul.mubr.f32.gmra.mrb[0].mxu0 %v341
        %v516 = vpop.f32.mrb[0].mxu0
        %v517 = vadd.f32 0.0, %v516
        %v518 = vpop.f32.mrb[0].mxu0
        %519 = vmatprep.mubr.f32.mxu0 0.0
        %520 = vmatmul.mubr.f32.gmra.mrb[0].mxu0 %v342
        %v521 = vpop.f32.mrb[0].mxu0
        %v522 = vadd.f32 0.0, %v521
        %v523 = vpop.f32.mrb[0].mxu0
        %524 = vmatprep.mubr.f32.mxu0 0.0
        %525 = vmatmul.mubr.f32.gmra.mrb[0].mxu0 %v343
        %v526 = vpop.f32.mrb[0].mxu0
        %v527 = vadd.f32 0.0, %v526
        %v528 = vpop.f32.mrb[0].mxu0
        %529 = vmatprep.mubr.f32.mxu0 0.0
        %530 = vmatmul.mubr.f32.gmra.mrb[0].mxu0 %v344
        %v531 = vpop.f32.mrb[0].mxu0
        %v532 = vadd.f32 0.0, %v531
        %v533 = vpop.f32.mrb[0].mxu0
        %534 = vmatprep.mubr.f32.mxu0 0.0
        %535 = vmatmul.mubr.f32.gmra.mrb[0].mxu0 %v345
        %v536 = vpop.f32.mrb[0].mxu0
        %v537 = vadd.f32 0.0, %v536
        %v538 = vpop.f32.mrb[0].mxu0
        %539 = vmatprep.mubr.f32.mxu0 0.0
        %540 = vmatmul.mubr.f32.gmra.mrb[0].mxu0 %v346
        %v541 = vpop.f32.mrb[0].mxu0
        %v542 = vadd.f32 0.0, %v541
        %v543 = vpop.f32.mrb[0].mxu0
        %544 = vmatprep.mubr.f32.mxu0 0.0
        %545 = vmatmul.mubr.f32.gmra.mrb[0].mxu0 %v347
        %v546 = vpop.f32.mrb[0].mxu0
        %v547 = vadd.f32 0.0, %v546
        %v548 = vpop.f32.mrb[0].mxu0
        %549 = vmatprep.mubr.f32.mxu0 0.0
        %550 = vmatmul.mubr.f32.gmra.mrb[0].mxu0 %v348
        %v551 = vpop.f32.mrb[0].mxu0
        %v552 = vadd.f32 0.0, %v551
        %v553 = vpop.f32.mrb[0].mxu0
        %554 = vmatprep.mubr.f32.mxu0 0.0
        %555 = vmatmul.mubr.f32.gmra.mrb[0].mxu0 %v349
        %v556 = vpop.f32.mrb[0].mxu0
        %v557 = vadd.f32 0.0, %v556
        %v558 = vpop.f32.mrb[0].mxu0
        %559 = vmatprep.mubr.f32.mxu0 0.0
        %560 = vmatmul.mubr.f32.gmra.mrb[0].mxu0 %v350
        %v561 = vpop.f32.mrb[0].mxu0
        %v562 = vadd.f32 0.0, %v561
        %v563 = vpop.f32.mrb[0].mxu0
        %564 = vmatprep.mubr.f32.mxu0 0.0
        %565 = vmatmul.mubr.f32.gmra.mrb[0].mxu0 %v351
        %v566 = vpop.f32.mrb[0].mxu0
        %v567 = vadd.f32 0.0, %v566
        %v568 = vpop.f32.mrb[0].mxu0
        %569 = vmatprep.mubr.f32.mxu0 0.0
        %570 = vmatmul.mubr.f32.gmra.mrb[0].mxu0 %v352
        %v571 = vpop.f32.mrb[0].mxu0
        %v572 = vadd.f32 0.0, %v571
        %v573 = vpop.f32.mrb[0].mxu0
        %574 = vmatprep.mubr.f32.mxu0 0.0
        %575 = vmatmul.mubr.f32.gmra.mrb[0].mxu0 %v353
        %v576 = vpop.f32.mrb[0].mxu0
        %v577 = vadd.f32 0.0, %v576
        %v578 = vpop.f32.mrb[0].mxu0
        %579 = vmatprep.mubr.f32.mxu0 0.0
        %580 = vmatmul.mubr.f32.gmra.mrb[0].mxu0 %v354
        %v581 = vpop.f32.mrb[0].mxu0
        %v582 = vadd.f32 0.0, %v581
        %v583 = vpop.f32.mrb[0].mxu0
        %584 = vmatprep.mubr.f32.mxu0 0.0
        %585 = vmatmul.mubr.f32.gmra.mrb[0].mxu0 %v355
        %v586 = vpop.f32.mrb[0].mxu0
        %v587 = vadd.f32 0.0, %v586
        %v588 = vpop.f32.mrb[0].mxu0
        %589 = vmatprep.mubr.f32.mxu0 0.0
        %590 = vmatmul.mubr.f32.gmra.mrb[0].mxu0 %v356
        %v591 = vpop.f32.mrb[0].mxu0
        %v592 = vadd.f32 0.0, %v591
        %v593 = vpop.f32.mrb[0].mxu0
        %594 = vmatprep.mubr.f32.mxu0 0.0
        %595 = vmatmul.mubr.f32.gmra.mrb[0].mxu0 %v357
        %v596 = vpop.f32.mrb[0].mxu0
        %v597 = vadd.f32 0.0, %v596
        %v598 = vpop.f32.mrb[0].mxu0
        %599 = vdwg.mxu0
        %600 = vmatprep.subr.mxu0 0.0
        %601 = vmatpush1.msra.mxu0 %v310
        %602 = vmatprep.subr.mxu0 0.0
        %603 = vmatpush1.msra.mxu0 %v311
        %604 = vmatprep.subr.mxu0 0.0
        %605 = vmatpush1.msra.mxu0 %v312
        %606 = vmatprep.subr.mxu0 0.0
        %607 = vmatpush1.msra.mxu0 %v313
        %608 = vmatprep.subr.mxu0 0.0
        %609 = vmatpush1.msra.mxu0 %v314
        %610 = vmatprep.subr.mxu0 0.0
        %611 = vmatpush1.msra.mxu0 %v315
        %612 = vmatprep.subr.mxu0 0.0
        %613 = vmatpush1.msra.mxu0 %v316
        %614 = vmatprep.subr.mxu0 0.0
        %615 = vmatpush1.msra.mxu0 %v317
        %616 = vmatprep.subr.mxu0 0.0
        %617 = vmatpush1.msra.mxu0 %v318
        %618 = vmatprep.subr.mxu0 0.0
        %619 = vmatpush1.msra.mxu0 %v319
        %620 = vmatprep.subr.mxu0 0.0
        %621 = vmatpush1.msra.mxu0 %v320
        %622 = vmatprep.subr.mxu0 0.0
        %623 = vmatpush1.msra.mxu0 %v321
        %624 = vmatprep.subr.mxu0 0.0
        %625 = vmatpush1.msra.mxu0 %v322
        %626 = vmatprep.subr.mxu0 0.0
        %627 = vmatpush1.msra.mxu0 %v323
        %628 = vmatprep.subr.mxu0 0.0
        %629 = vmatpush1.msra.mxu0 %v324
        %630 = vmatprep.subr.mxu0 0.0
        %631 = vmatpush1.msra.mxu0 %v325
        %632 = vmatprep.subr.mxu0 0.0
        %633 = vmatpush1.msra.mxu0 0.0
        %634 = vmatprep.subr.mxu0 0.0
        %635 = vmatpush1.msra.mxu0 0.0
        %636 = vmatprep.subr.mxu0 0.0
        %637 = vmatpush1.msra.mxu0 0.0
        %638 = vmatprep.subr.mxu0 0.0
        %639 = vmatpush1.msra.mxu0 0.0
        %640 = vmatprep.subr.mxu0 0.0
        %641 = vmatpush1.msra.mxu0 0.0
        %642 = vmatprep.subr.mxu0 0.0
        %643 = vmatpush1.msra.mxu0 0.0
        %644 = vmatprep.subr.mxu0 0.0
        %645 = vmatpush1.msra.mxu0 0.0
        %646 = vmatprep.subr.mxu0 0.0
        %647 = vmatpush1.msra.mxu0 0.0
        %648 = vmatprep.subr.mxu0 0.0
        %649 = vmatpush1.msra.mxu0 0.0
        %650 = vmatprep.subr.mxu0 0.0
        %651 = vmatpush1.msra.mxu0 0.0
        %652 = vmatprep.subr.mxu0 0.0
        %653 = vmatpush1.msra.mxu0 0.0
        %654 = vmatprep.subr.mxu0 0.0
        %655 = vmatpush1.msra.mxu0 0.0
        %656 = vmatprep.subr.mxu0 0.0
        %657 = vmatpush1.msra.mxu0 0.0
        %658 = vmatprep.subr.mxu0 0.0
        %659 = vmatpush1.msra.mxu0 0.0
        %660 = vmatprep.subr.mxu0 0.0
        %661 = vmatpush1.msra.mxu0 0.0
        %662 = vmatprep.subr.mxu0 0.0
        %663 = vmatpush1.msra.mxu0 0.0
        %664 = vmatprep.mubr.f32.mxu0 0.0
        %665 = vmatmul.mubr.f32.gmra.mrb[0].mxu0 %v278
        %v666 = vpop.f32.mrb[0].mxu0
        %v667 = vadd.f32 %v442, %v666
        %v668 = vpop.f32.mrb[0].mxu0
        %669 = vmatprep.mubr.f32.mxu0 0.0
        %670 = vmatmul.mubr.f32.gmra.mrb[0].mxu0 %v279
        %v671 = vpop.f32.mrb[0].mxu0
        %v672 = vadd.f32 %v447, %v671
        %v673 = vpop.f32.mrb[0].mxu0
        %674 = vmatprep.mubr.f32.mxu0 0.0
        %675 = vmatmul.mubr.f32.gmra.mrb[0].mxu0 %v280
        %v676 = vpop.f32.mrb[0].mxu0
        %v677 = vadd.f32 %v452, %v676
        %v678 = vpop.f32.mrb[0].mxu0
        %679 = vmatprep.mubr.f32.mxu0 0.0
        %680 = vmatmul.mubr.f32.gmra.mrb[0].mxu0 %v281
        %v681 = vpop.f32.mrb[0].mxu0
        %v682 = vadd.f32 %v457, %v681
        %v683 = vpop.f32.mrb[0].mxu0
        %684 = vmatprep.mubr.f32.mxu0 0.0
        %685 = vmatmul.mubr.f32.gmra.mrb[0].mxu0 %v282
        %v686 = vpop.f32.mrb[0].mxu0
        %v687 = vadd.f32 %v462, %v686
        %v688 = vpop.f32.mrb[0].mxu0
        %689 = vmatprep.mubr.f32.mxu0 0.0
        %690 = vmatmul.mubr.f32.gmra.mrb[0].mxu0 %v283
        %v691 = vpop.f32.mrb[0].mxu0
        %v692 = vadd.f32 %v467, %v691
        %v693 = vpop.f32.mrb[0].mxu0
        %694 = vmatprep.mubr.f32.mxu0 0.0
        %695 = vmatmul.mubr.f32.gmra.mrb[0].mxu0 %v284
        %v696 = vpop.f32.mrb[0].mxu0
        %v697 = vadd.f32 %v472, %v696
        %v698 = vpop.f32.mrb[0].mxu0
        %699 = vmatprep.mubr.f32.mxu0 0.0
        %700 = vmatmul.mubr.f32.gmra.mrb[0].mxu0 %v285
        %v701 = vpop.f32.mrb[0].mxu0
        %v702 = vadd.f32 %v477, %v701
        %v703 = vpop.f32.mrb[0].mxu0
        %704 = vmatprep.mubr.f32.mxu0 0.0
        %705 = vmatmul.mubr.f32.gmra.mrb[0].mxu0 %v286
        %v706 = vpop.f32.mrb[0].mxu0
        %v707 = vadd.f32 %v482, %v706
        %v708 = vpop.f32.mrb[0].mxu0
        %709 = vmatprep.mubr.f32.mxu0 0.0
        %710 = vmatmul.mubr.f32.gmra.mrb[0].mxu0 %v287
        %v711 = vpop.f32.mrb[0].mxu0
        %v712 = vadd.f32 %v487, %v711
        %v713 = vpop.f32.mrb[0].mxu0
        %714 = vmatprep.mubr.f32.mxu0 0.0
        %715 = vmatmul.mubr.f32.gmra.mrb[0].mxu0 %v288
        %v716 = vpop.f32.mrb[0].mxu0
        %v717 = vadd.f32 %v492, %v716
        %v718 = vpop.f32.mrb[0].mxu0
        %719 = vmatprep.mubr.f32.mxu0 0.0
        %720 = vmatmul.mubr.f32.gmra.mrb[0].mxu0 %v289
        %v721 = vpop.f32.mrb[0].mxu0
        %v722 = vadd.f32 %v497, %v721
        %v723 = vpop.f32.mrb[0].mxu0
        %724 = vmatprep.mubr.f32.mxu0 0.0
        %725 = vmatmul.mubr.f32.gmra.mrb[0].mxu0 %v290
        %v726 = vpop.f32.mrb[0].mxu0
        %v727 = vadd.f32 %v502, %v726
        %v728 = vpop.f32.mrb[0].mxu0
        %729 = vmatprep.mubr.f32.mxu0 0.0
        %730 = vmatmul.mubr.f32.gmra.mrb[0].mxu0 %v291
        %v731 = vpop.f32.mrb[0].mxu0
        %v732 = vadd.f32 %v507, %v731
        %v733 = vpop.f32.mrb[0].mxu0
        %734 = vmatprep.mubr.f32.mxu0 0.0
        %735 = vmatmul.mubr.f32.gmra.mrb[0].mxu0 %v292
        %v736 = vpop.f32.mrb[0].mxu0
        %v737 = vadd.f32 %v512, %v736
        %v738 = vpop.f32.mrb[0].mxu0
        %739 = vmatprep.mubr.f32.mxu0 0.0
        %740 = vmatmul.mubr.f32.gmra.mrb[0].mxu0 %v293
        %v741 = vpop.f32.mrb[0].mxu0
        %v742 = vadd.f32 %v517, %v741
        %v743 = vpop.f32.mrb[0].mxu0
        %744 = vmatprep.mubr.f32.mxu0 0.0
        %745 = vmatmul.mubr.f32.gmra.mrb[0].mxu0 %v294
        %v746 = vpop.f32.mrb[0].mxu0
        %v747 = vadd.f32 %v522, %v746
        %v748 = vpop.f32.mrb[0].mxu0
        %749 = vmatprep.mubr.f32.mxu0 0.0
        %750 = vmatmul.mubr.f32.gmra.mrb[0].mxu0 %v295
        %v751 = vpop.f32.mrb[0].mxu0
        %v752 = vadd.f32 %v527, %v751
        %v753 = vpop.f32.mrb[0].mxu0
        %754 = vmatprep.mubr.f32.mxu0 0.0
        %755 = vmatmul.mubr.f32.gmra.mrb[0].mxu0 %v296
        %v756 = vpop.f32.mrb[0].mxu0
        %v757 = vadd.f32 %v532, %v756
        %v758 = vpop.f32.mrb[0].mxu0
        %759 = vmatprep.mubr.f32.mxu0 0.0
        %760 = vmatmul.mubr.f32.gmra.mrb[0].mxu0 %v297
        %v761 = vpop.f32.mrb[0].mxu0
        %v762 = vadd.f32 %v537, %v761
        %v763 = vpop.f32.mrb[0].mxu0
        %764 = vmatprep.mubr.f32.mxu0 0.0
        %765 = vmatmul.mubr.f32.gmra.mrb[0].mxu0 %v298
        %v766 = vpop.f32.mrb[0].mxu0
        %v767 = vadd.f32 %v542, %v766
        %v768 = vpop.f32.mrb[0].mxu0
        %769 = vmatprep.mubr.f32.mxu0 0.0
        %770 = vmatmul.mubr.f32.gmra.mrb[0].mxu0 %v299
        %v771 = vpop.f32.mrb[0].mxu0
        %v772 = vadd.f32 %v547, %v771
        %v773 = vpop.f32.mrb[0].mxu0
        %774 = vmatprep.mubr.f32.mxu0 0.0
        %775 = vmatmul.mubr.f32.gmra.mrb[0].mxu0 %v300
        %v776 = vpop.f32.mrb[0].mxu0
        %v777 = vadd.f32 %v552, %v776
        %v778 = vpop.f32.mrb[0].mxu0
        %779 = vmatprep.mubr.f32.mxu0 0.0
        %780 = vmatmul.mubr.f32.gmra.mrb[0].mxu0 %v301
        %v781 = vpop.f32.mrb[0].mxu0
        %v782 = vadd.f32 %v557, %v781
        %v783 = vpop.f32.mrb[0].mxu0
        %784 = vmatprep.mubr.f32.mxu0 0.0
        %785 = vmatmul.mubr.f32.gmra.mrb[0].mxu0 %v302
        %v786 = vpop.f32.mrb[0].mxu0
        %v787 = vadd.f32 %v562, %v786
        %v788 = vpop.f32.mrb[0].mxu0
        %789 = vmatprep.mubr.f32.mxu0 0.0
        %790 = vmatmul.mubr.f32.gmra.mrb[0].mxu0 %v303
        %v791 = vpop.f32.mrb[0].mxu0
        %v792 = vadd.f32 %v567, %v791
        %v793 = vpop.f32.mrb[0].mxu0
        %794 = vmatprep.mubr.f32.mxu0 0.0
        %795 = vmatmul.mubr.f32.gmra.mrb[0].mxu0 %v304
        %v796 = vpop.f32.mrb[0].mxu0
        %v797 = vadd.f32 %v572, %v796
        %v798 = vpop.f32.mrb[0].mxu0
        %799 = vmatprep.mubr.f32.mxu0 0.0
        %800 = vmatmul.mubr.f32.gmra.mrb[0].mxu0 %v305
        %v801 = vpop.f32.mrb[0].mxu0
        %v802 = vadd.f32 %v577, %v801
        %v803 = vpop.f32.mrb[0].mxu0
        %804 = vmatprep.mubr.f32.mxu0 0.0
        %805 = vmatmul.mubr.f32.gmra.mrb[0].mxu0 %v306
        %v806 = vpop.f32.mrb[0].mxu0
        %v807 = vadd.f32 %v582, %v806
        %v808 = vpop.f32.mrb[0].mxu0
        %809 = vmatprep.mubr.f32.mxu0 0.0
        %810 = vmatmul.mubr.f32.gmra.mrb[0].mxu0 %v307
        %v811 = vpop.f32.mrb[0].mxu0
        %v812 = vadd.f32 %v587, %v811
        %v813 = vpop.f32.mrb[0].mxu0
        %814 = vmatprep.mubr.f32.mxu0 0.0
        %815 = vmatmul.mubr.f32.gmra.mrb[0].mxu0 %v308
        %v816 = vpop.f32.mrb[0].mxu0
        %v817 = vadd.f32 %v592, %v816
        %v818 = vpop.f32.mrb[0].mxu0
        %819 = vmatprep.mubr.f32.mxu0 0.0
        %820 = vmatmul.mubr.f32.gmra.mrb[0].mxu0 %v309
        %v821 = vpop.f32.mrb[0].mxu0
        %v822 = vadd.f32 %v597, %v821
        %v823 = vpop.f32.mrb[0].mxu0
        %824 = vdwg.mxu0
        %v825 = vld [vmem:[%s277 + $0x2] sm:$0xff]
        %v826 = vld [vmem:[%s277 + $0xa] sm:$0xff]
        %v827 = vld [vmem:[%s277 + $0x1a] sm:$0xff]
        %v828 = vld [vmem:[%s277 + $0x22] sm:$0xff]
        %v829 = vld [vmem:[%s277 + $0x32] sm:$0xff]
        %v830 = vld [vmem:[%s277 + $0x3a] sm:$0xff]
        %v831 = vld [vmem:[%s277 + $0x4a] sm:$0xff]
        %v832 = vld [vmem:[%s277 + $0x52] sm:$0xff]
        %v833 = vld [vmem:[%s277 + $0x62] sm:$0xff]
        %v834 = vld [vmem:[%s277 + $0x6a] sm:$0xff]
        %v835 = vld [vmem:[%s277 + $0x7a] sm:$0xff]
        %v836 = vld [vmem:[%s277 + $0x82] sm:$0xff]
        %v837 = vld [vmem:[%s277 + $0x92] sm:$0xff]
        %v838 = vld [vmem:[%s277 + $0x9a] sm:$0xff]
        %v839 = vld [vmem:[%s277 + $0xaa] sm:$0xff]
        %v840 = vld [vmem:[%s277 + $0xb2] sm:$0xff]
        %v841 = vld [vmem:[%s277 + $0xc2] sm:$0xff]
        %v842 = vld [vmem:[%s277 + $0xca] sm:$0xff]
        %v843 = vld [vmem:[%s277 + $0xda] sm:$0xff]
        %v844 = vld [vmem:[%s277 + $0xe2] sm:$0xff]
        %v845 = vld [vmem:[%s277 + $0xf2] sm:$0xff]
        %v846 = vld [vmem:[%s277 + $0xfa] sm:$0xff]
        %v847 = vld [vmem:[%s277 + $0x10a] sm:$0xff]
        %v848 = vld [vmem:[%s277 + $0x112] sm:$0xff]
        %v849 = vld [vmem:[%s277 + $0x122] sm:$0xff]
        %v850 = vld [vmem:[%s277 + $0x12a] sm:$0xff]
        %v851 = vld [vmem:[%s277 + $0x13a] sm:$0xff]
        %v852 = vld [vmem:[%s277 + $0x142] sm:$0xff]
        %v853 = vld [vmem:[%s277 + $0x152] sm:$0xff]
        %v854 = vld [vmem:[%s277 + $0x15a] sm:$0xff]
        %v855 = vld [vmem:[%s277 + $0x16a] sm:$0xff]
        %v856 = vld [vmem:[%s277 + $0x172] sm:$0xff]
        %s857 = scalar_lea.vmem %s1, 256
        %v858 = vld [vmem:[%s857] sm:$0xff]
        %v859 = vld [vmem:[%s857 + $0x8] sm:$0xff]
        %v860 = vld [vmem:[%s857 + $0x10] sm:$0xff]
        %v861 = vld [vmem:[%s857 + $0x18] sm:$0xff]
        %v862 = vld [vmem:[%s857 + $0x20] sm:$0xff]
        %v863 = vld [vmem:[%s857 + $0x28] sm:$0xff]
        %v864 = vld [vmem:[%s857 + $0x30] sm:$0xff]
        %v865 = vld [vmem:[%s857 + $0x38] sm:$0xff]
        %v866 = vld [vmem:[%s857 + $0x40] sm:$0xff]
        %v867 = vld [vmem:[%s857 + $0x48] sm:$0xff]
        %v868 = vld [vmem:[%s857 + $0x50] sm:$0xff]
        %v869 = vld [vmem:[%s857 + $0x58] sm:$0xff]
        %v870 = vld [vmem:[%s857 + $0x60] sm:$0xff]
        %v871 = vld [vmem:[%s857 + $0x68] sm:$0xff]
        %v872 = vld [vmem:[%s857 + $0x70] sm:$0xff]
        %v873 = vld [vmem:[%s857 + $0x78] sm:$0xff]
        %874 = vmatprep.subr.mxu0 0.0
        %875 = vmatpush1.msra.mxu0 %v858
        %876 = vmatprep.subr.mxu0 0.0
        %877 = vmatpush1.msra.mxu0 %v859
        %878 = vmatprep.subr.mxu0 0.0
        %879 = vmatpush1.msra.mxu0 %v860
        %880 = vmatprep.subr.mxu0 0.0
        %881 = vmatpush1.msra.mxu0 %v861
        %882 = vmatprep.subr.mxu0 0.0
        %883 = vmatpush1.msra.mxu0 %v862
        %884 = vmatprep.subr.mxu0 0.0
        %885 = vmatpush1.msra.mxu0 %v863
        %886 = vmatprep.subr.mxu0 0.0
        %887 = vmatpush1.msra.mxu0 %v864
        %888 = vmatprep.subr.mxu0 0.0
        %889 = vmatpush1.msra.mxu0 %v865
        %890 = vmatprep.subr.mxu0 0.0
        %891 = vmatpush1.msra.mxu0 %v866
        %892 = vmatprep.subr.mxu0 0.0
        %893 = vmatpush1.msra.mxu0 %v867
        %894 = vmatprep.subr.mxu0 0.0
        %895 = vmatpush1.msra.mxu0 %v868
        %896 = vmatprep.subr.mxu0 0.0
        %897 = vmatpush1.msra.mxu0 %v869
        %898 = vmatprep.subr.mxu0 0.0
        %899 = vmatpush1.msra.mxu0 %v870
        %900 = vmatprep.subr.mxu0 0.0
        %901 = vmatpush1.msra.mxu0 %v871
        %902 = vmatprep.subr.mxu0 0.0
        %903 = vmatpush1.msra.mxu0 %v872
        %904 = vmatprep.subr.mxu0 0.0
        %905 = vmatpush1.msra.mxu0 %v873
        %906 = vmatprep.subr.mxu0 0.0
        %907 = vmatpush1.msra.mxu0 0.0
        %908 = vmatprep.subr.mxu0 0.0
        %909 = vmatpush1.msra.mxu0 0.0
        %910 = vmatprep.subr.mxu0 0.0
        %911 = vmatpush1.msra.mxu0 0.0
        %912 = vmatprep.subr.mxu0 0.0
        %913 = vmatpush1.msra.mxu0 0.0
        %914 = vmatprep.subr.mxu0 0.0
        %915 = vmatpush1.msra.mxu0 0.0
        %916 = vmatprep.subr.mxu0 0.0
        %917 = vmatpush1.msra.mxu0 0.0
        %918 = vmatprep.subr.mxu0 0.0
        %919 = vmatpush1.msra.mxu0 0.0
        %920 = vmatprep.subr.mxu0 0.0
        %921 = vmatpush1.msra.mxu0 0.0
        %922 = vmatprep.subr.mxu0 0.0
        %923 = vmatpush1.msra.mxu0 0.0
        %924 = vmatprep.subr.mxu0 0.0
        %925 = vmatpush1.msra.mxu0 0.0
        %926 = vmatprep.subr.mxu0 0.0
        %927 = vmatpush1.msra.mxu0 0.0
        %928 = vmatprep.subr.mxu0 0.0
        %929 = vmatpush1.msra.mxu0 0.0
        %930 = vmatprep.subr.mxu0 0.0
        %931 = vmatpush1.msra.mxu0 0.0
        %932 = vmatprep.subr.mxu0 0.0
        %933 = vmatpush1.msra.mxu0 0.0
        %934 = vmatprep.subr.mxu0 0.0
        %935 = vmatpush1.msra.mxu0 0.0
        %936 = vmatprep.subr.mxu0 0.0
        %937 = vmatpush1.msra.mxu0 0.0
        %938 = vmatprep.mubr.f32.mxu0 0.0
        %939 = vmatmul.mubr.f32.gmra.mrb[0].mxu0 %v825
        %v940 = vpop.f32.mrb[0].mxu0
        %v941 = vadd.f32 0.0, %v940
        %v942 = vpop.f32.mrb[0].mxu0
        %943 = vmatprep.mubr.f32.mxu0 0.0
        %944 = vmatmul.mubr.f32.gmra.mrb[0].mxu0 %v826
        %v945 = vpop.f32.mrb[0].mxu0
        %v946 = vadd.f32 0.0, %v945
        %v947 = vpop.f32.mrb[0].mxu0
        %948 = vmatprep.mubr.f32.mxu0 0.0
        %949 = vmatmul.mubr.f32.gmra.mrb[0].mxu0 %v827
        %v950 = vpop.f32.mrb[0].mxu0
        %v951 = vadd.f32 0.0, %v950
        %v952 = vpop.f32.mrb[0].mxu0
        %953 = vmatprep.mubr.f32.mxu0 0.0
        %954 = vmatmul.mubr.f32.gmra.mrb[0].mxu0 %v828
        %v955 = vpop.f32.mrb[0].mxu0
        %v956 = vadd.f32 0.0, %v955
        %v957 = vpop.f32.mrb[0].mxu0
        %958 = vmatprep.mubr.f32.mxu0 0.0
        %959 = vmatmul.mubr.f32.gmra.mrb[0].mxu0 %v829
        %v960 = vpop.f32.mrb[0].mxu0
        %v961 = vadd.f32 0.0, %v960
        %v962 = vpop.f32.mrb[0].mxu0
        %963 = vmatprep.mubr.f32.mxu0 0.0
        %964 = vmatmul.mubr.f32.gmra.mrb[0].mxu0 %v830
        %v965 = vpop.f32.mrb[0].mxu0
        %v966 = vadd.f32 0.0, %v965
        %v967 = vpop.f32.mrb[0].mxu0
        %968 = vmatprep.mubr.f32.mxu0 0.0
        %969 = vmatmul.mubr.f32.gmra.mrb[0].mxu0 %v831
        %v970 = vpop.f32.mrb[0].mxu0
        %v971 = vadd.f32 0.0, %v970
        %v972 = vpop.f32.mrb[0].mxu0
        %973 = vmatprep.mubr.f32.mxu0 0.0
        %974 = vmatmul.mubr.f32.gmra.mrb[0].mxu0 %v832
        %v975 = vpop.f32.mrb[0].mxu0
        %v976 = vadd.f32 0.0, %v975
        %v977 = vpop.f32.mrb[0].mxu0
        %978 = vmatprep.mubr.f32.mxu0 0.0
        %979 = vmatmul.mubr.f32.gmra.mrb[0].mxu0 %v833
        %v980 = vpop.f32.mrb[0].mxu0
        %v981 = vadd.f32 0.0, %v980
        %v982 = vpop.f32.mrb[0].mxu0
        %983 = vmatprep.mubr.f32.mxu0 0.0
        %984 = vmatmul.mubr.f32.gmra.mrb[0].mxu0 %v834
        %v985 = vpop.f32.mrb[0].mxu0
        %v986 = vadd.f32 0.0, %v985
        %v987 = vpop.f32.mrb[0].mxu0
        %988 = vmatprep.mubr.f32.mxu0 0.0
        %989 = vmatmul.mubr.f32.gmra.mrb[0].mxu0 %v835
        %v990 = vpop.f32.mrb[0].mxu0
        %v991 = vadd.f32 0.0, %v990
        %v992 = vpop.f32.mrb[0].mxu0
        %993 = vmatprep.mubr.f32.mxu0 0.0
        %994 = vmatmul.mubr.f32.gmra.mrb[0].mxu0 %v836
        %v995 = vpop.f32.mrb[0].mxu0
        %v996 = vadd.f32 0.0, %v995
        %v997 = vpop.f32.mrb[0].mxu0
        %998 = vmatprep.mubr.f32.mxu0 0.0
        %999 = vmatmul.mubr.f32.gmra.mrb[0].mxu0 %v837
        %v1000 = vpop.f32.mrb[0].mxu0
        %v1001 = vadd.f32 0.0, %v1000
        %v1002 = vpop.f32.mrb[0].mxu0
        %1003 = vmatprep.mubr.f32.mxu0 0.0
        %1004 = vmatmul.mubr.f32.gmra.mrb[0].mxu0 %v838
        %v1005 = vpop.f32.mrb[0].mxu0
        %v1006 = vadd.f32 0.0, %v1005
        %v1007 = vpop.f32.mrb[0].mxu0
        %1008 = vmatprep.mubr.f32.mxu0 0.0
        %1009 = vmatmul.mubr.f32.gmra.mrb[0].mxu0 %v839
        %v1010 = vpop.f32.mrb[0].mxu0
        %v1011 = vadd.f32 0.0, %v1010
        %v1012 = vpop.f32.mrb[0].mxu0
        %1013 = vmatprep.mubr.f32.mxu0 0.0
        %1014 = vmatmul.mubr.f32.gmra.mrb[0].mxu0 %v840
        %v1015 = vpop.f32.mrb[0].mxu0
        %v1016 = vadd.f32 0.0, %v1015
        %v1017 = vpop.f32.mrb[0].mxu0
        %1018 = vmatprep.mubr.f32.mxu0 0.0
        %1019 = vmatmul.mubr.f32.gmra.mrb[0].mxu0 %v841
        %v1020 = vpop.f32.mrb[0].mxu0
        %v1021 = vadd.f32 0.0, %v1020
        %v1022 = vpop.f32.mrb[0].mxu0
        %1023 = vmatprep.mubr.f32.mxu0 0.0
        %1024 = vmatmul.mubr.f32.gmra.mrb[0].mxu0 %v842
        %v1025 = vpop.f32.mrb[0].mxu0
        %v1026 = vadd.f32 0.0, %v1025
        %v1027 = vpop.f32.mrb[0].mxu0
        %1028 = vmatprep.mubr.f32.mxu0 0.0
        %1029 = vmatmul.mubr.f32.gmra.mrb[0].mxu0 %v843
        %v1030 = vpop.f32.mrb[0].mxu0
        %v1031 = vadd.f32 0.0, %v1030
        %v1032 = vpop.f32.mrb[0].mxu0
        %1033 = vmatprep.mubr.f32.mxu0 0.0
        %1034 = vmatmul.mubr.f32.gmra.mrb[0].mxu0 %v844
        %v1035 = vpop.f32.mrb[0].mxu0
        %v1036 = vadd.f32 0.0, %v1035
        %v1037 = vpop.f32.mrb[0].mxu0
        %1038 = vmatprep.mubr.f32.mxu0 0.0
        %1039 = vmatmul.mubr.f32.gmra.mrb[0].mxu0 %v845
        %v1040 = vpop.f32.mrb[0].mxu0
        %v1041 = vadd.f32 0.0, %v1040
        %v1042 = vpop.f32.mrb[0].mxu0
        %1043 = vmatprep.mubr.f32.mxu0 0.0
        %1044 = vmatmul.mubr.f32.gmra.mrb[0].mxu0 %v846
        %v1045 = vpop.f32.mrb[0].mxu0
        %v1046 = vadd.f32 0.0, %v1045
        %v1047 = vpop.f32.mrb[0].mxu0
        %1048 = vmatprep.mubr.f32.mxu0 0.0
        %1049 = vmatmul.mubr.f32.gmra.mrb[0].mxu0 %v847
        %v1050 = vpop.f32.mrb[0].mxu0
        %v1051 = vadd.f32 0.0, %v1050
        %v1052 = vpop.f32.mrb[0].mxu0
        %1053 = vmatprep.mubr.f32.mxu0 0.0
        %1054 = vmatmul.mubr.f32.gmra.mrb[0].mxu0 %v848
        %v1055 = vpop.f32.mrb[0].mxu0
        %v1056 = vadd.f32 0.0, %v1055
        %v1057 = vpop.f32.mrb[0].mxu0
        %1058 = vmatprep.mubr.f32.mxu0 0.0
        %1059 = vmatmul.mubr.f32.gmra.mrb[0].mxu0 %v849
        %v1060 = vpop.f32.mrb[0].mxu0
        %v1061 = vadd.f32 0.0, %v1060
        %v1062 = vpop.f32.mrb[0].mxu0
        %1063 = vmatprep.mubr.f32.mxu0 0.0
        %1064 = vmatmul.mubr.f32.gmra.mrb[0].mxu0 %v850
        %v1065 = vpop.f32.mrb[0].mxu0
        %v1066 = vadd.f32 0.0, %v1065
        %v1067 = vpop.f32.mrb[0].mxu0
        %1068 = vmatprep.mubr.f32.mxu0 0.0
        %1069 = vmatmul.mubr.f32.gmra.mrb[0].mxu0 %v851
        %v1070 = vpop.f32.mrb[0].mxu0
        %v1071 = vadd.f32 0.0, %v1070
        %v1072 = vpop.f32.mrb[0].mxu0
        %1073 = vmatprep.mubr.f32.mxu0 0.0
        %1074 = vmatmul.mubr.f32.gmra.mrb[0].mxu0 %v852
        %v1075 = vpop.f32.mrb[0].mxu0
        %v1076 = vadd.f32 0.0, %v1075
        %v1077 = vpop.f32.mrb[0].mxu0
        %1078 = vmatprep.mubr.f32.mxu0 0.0
        %1079 = vmatmul.mubr.f32.gmra.mrb[0].mxu0 %v853
        %v1080 = vpop.f32.mrb[0].mxu0
        %v1081 = vadd.f32 0.0, %v1080
        %v1082 = vpop.f32.mrb[0].mxu0
        %1083 = vmatprep.mubr.f32.mxu0 0.0
        %1084 = vmatmul.mubr.f32.gmra.mrb[0].mxu0 %v854
        %v1085 = vpop.f32.mrb[0].mxu0
        %v1086 = vadd.f32 0.0, %v1085
        %v1087 = vpop.f32.mrb[0].mxu0
        %1088 = vmatprep.mubr.f32.mxu0 0.0
        %1089 = vmatmul.mubr.f32.gmra.mrb[0].mxu0 %v855
        %v1090 = vpop.f32.mrb[0].mxu0
        %v1091 = vadd.f32 0.0, %v1090
        %v1092 = vpop.f32.mrb[0].mxu0
        %1093 = vmatprep.mubr.f32.mxu0 0.0
        %1094 = vmatmul.mubr.f32.gmra.mrb[0].mxu0 %v856
        %v1095 = vpop.f32.mrb[0].mxu0
        %v1096 = vadd.f32 0.0, %v1095
        %v1097 = vpop.f32.mrb[0].mxu0
        %1098 = vdwg.mxu0
        %v1099 = vadd.f32 %v667, %v941
        %v1100 = vadd.f32 %v672, %v946
        %v1101 = vadd.f32 %v677, %v951
        %v1102 = vadd.f32 %v682, %v956
        %v1103 = vadd.f32 %v687, %v961
        %v1104 = vadd.f32 %v692, %v966
        %v1105 = vadd.f32 %v697, %v971
        %v1106 = vadd.f32 %v702, %v976
        %v1107 = vadd.f32 %v707, %v981
        %v1108 = vadd.f32 %v712, %v986
        %v1109 = vadd.f32 %v717, %v991
        %v1110 = vadd.f32 %v722, %v996
        %v1111 = vadd.f32 %v727, %v1001
        %v1112 = vadd.f32 %v732, %v1006
        %v1113 = vadd.f32 %v737, %v1011
        %v1114 = vadd.f32 %v742, %v1016
        %v1115 = vadd.f32 %v747, %v1021
        %v1116 = vadd.f32 %v752, %v1026
        %v1117 = vadd.f32 %v757, %v1031
        %v1118 = vadd.f32 %v762, %v1036
        %v1119 = vadd.f32 %v767, %v1041
        %v1120 = vadd.f32 %v772, %v1046
        %v1121 = vadd.f32 %v777, %v1051
        %v1122 = vadd.f32 %v782, %v1056
        %v1123 = vadd.f32 %v787, %v1061
        %v1124 = vadd.f32 %v792, %v1066
        %v1125 = vadd.f32 %v797, %v1071
        %v1126 = vadd.f32 %v802, %v1076
        %v1127 = vadd.f32 %v807, %v1081
        %v1128 = vadd.f32 %v812, %v1086
        %v1129 = vadd.f32 %v817, %v1091
        %v1130 = vadd.f32 %v822, %v1096
        %s1131 = scalar_lea.vmem %s277, 24
        %v1132 = vld [vmem:[%s1131] sm:$0xff]
        %v1133 = vld [vmem:[%s1131 + $0x8] sm:$0xff]
        %v1134 = vld [vmem:[%s1131 + $0x18] sm:$0xff]
        %v1135 = vld [vmem:[%s1131 + $0x20] sm:$0xff]
        %v1136 = vld [vmem:[%s1131 + $0x30] sm:$0xff]
        %v1137 = vld [vmem:[%s1131 + $0x38] sm:$0xff]
        %v1138 = vld [vmem:[%s1131 + $0x48] sm:$0xff]
        %v1139 = vld [vmem:[%s1131 + $0x50] sm:$0xff]
        %v1140 = vld [vmem:[%s1131 + $0x60] sm:$0xff]
        %v1141 = vld [vmem:[%s1131 + $0x68] sm:$0xff]
        %v1142 = vld [vmem:[%s1131 + $0x78] sm:$0xff]
        %v1143 = vld [vmem:[%s1131 + $0x80] sm:$0xff]
        %v1144 = vld [vmem:[%s1131 + $0x90] sm:$0xff]
        %v1145 = vld [vmem:[%s1131 + $0x98] sm:$0xff]
        %v1146 = vld [vmem:[%s1131 + $0xa8] sm:$0xff]
        %v1147 = vld [vmem:[%s1131 + $0xb0] sm:$0xff]
        %v1148 = vld [vmem:[%s1131 + $0xc0] sm:$0xff]
        %v1149 = vld [vmem:[%s1131 + $0xc8] sm:$0xff]
        %v1150 = vld [vmem:[%s1131 + $0xd8] sm:$0xff]
        %v1151 = vld [vmem:[%s1131 + $0xe0] sm:$0xff]
        %v1152 = vld [vmem:[%s1131 + $0xf0] sm:$0xff]
        %v1153 = vld [vmem:[%s1131 + $0xf8] sm:$0xff]
        %v1154 = vld [vmem:[%s1131 + $0x108] sm:$0xff]
        %v1155 = vld [vmem:[%s1131 + $0x110] sm:$0xff]
        %v1156 = vld [vmem:[%s1131 + $0x120] sm:$0xff]
        %v1157 = vld [vmem:[%s1131 + $0x128] sm:$0xff]
        %v1158 = vld [vmem:[%s1131 + $0x138] sm:$0xff]
        %v1159 = vld [vmem:[%s1131 + $0x140] sm:$0xff]
        %v1160 = vld [vmem:[%s1131 + $0x150] sm:$0xff]
        %v1161 = vld [vmem:[%s1131 + $0x158] sm:$0xff]
        %v1162 = vld [vmem:[%s1131 + $0x168] sm:$0xff]
        %v1163 = vld [vmem:[%s1131 + $0x170] sm:$0xff]
        %s1164 = scalar_lea.vmem %s1, 384
        %v1165 = vld [vmem:[%s1164] sm:$0xff]
        %v1166 = vld [vmem:[%s1164 + $0x8] sm:$0xff]
        %v1167 = vld [vmem:[%s1164 + $0x10] sm:$0xff]
        %v1168 = vld [vmem:[%s1164 + $0x18] sm:$0xff]
        %v1169 = vld [vmem:[%s1164 + $0x20] sm:$0xff]
        %v1170 = vld [vmem:[%s1164 + $0x28] sm:$0xff]
        %v1171 = vld [vmem:[%s1164 + $0x30] sm:$0xff]
        %v1172 = vld [vmem:[%s1164 + $0x38] sm:$0xff]
        %v1173 = vld [vmem:[%s1164 + $0x40] sm:$0xff]
        %v1174 = vld [vmem:[%s1164 + $0x48] sm:$0xff]
        %v1175 = vld [vmem:[%s1164 + $0x50] sm:$0xff]
        %v1176 = vld [vmem:[%s1164 + $0x58] sm:$0xff]
        %v1177 = vld [vmem:[%s1164 + $0x60] sm:$0xff]
        %v1178 = vld [vmem:[%s1164 + $0x68] sm:$0xff]
        %v1179 = vld [vmem:[%s1164 + $0x70] sm:$0xff]
        %v1180 = vld [vmem:[%s1164 + $0x78] sm:$0xff]
        %1181 = vmatprep.subr.mxu0 0.0
        %1182 = vmatpush1.msra.mxu0 %v1165
        %1183 = vmatprep.subr.mxu0 0.0
        %1184 = vmatpush1.msra.mxu0 %v1166
        %1185 = vmatprep.subr.mxu0 0.0
        %1186 = vmatpush1.msra.mxu0 %v1167
        %1187 = vmatprep.subr.mxu0 0.0
        %1188 = vmatpush1.msra.mxu0 %v1168
        %1189 = vmatprep.subr.mxu0 0.0
        %1190 = vmatpush1.msra.mxu0 %v1169
        %1191 = vmatprep.subr.mxu0 0.0
        %1192 = vmatpush1.msra.mxu0 %v1170
        %1193 = vmatprep.subr.mxu0 0.0
        %1194 = vmatpush1.msra.mxu0 %v1171
        %1195 = vmatprep.subr.mxu0 0.0
        %1196 = vmatpush1.msra.mxu0 %v1172
        %1197 = vmatprep.subr.mxu0 0.0
        %1198 = vmatpush1.msra.mxu0 %v1173
        %1199 = vmatprep.subr.mxu0 0.0
        %1200 = vmatpush1.msra.mxu0 %v1174
        %1201 = vmatprep.subr.mxu0 0.0
        %1202 = vmatpush1.msra.mxu0 %v1175
        %1203 = vmatprep.subr.mxu0 0.0
        %1204 = vmatpush1.msra.mxu0 %v1176
        %1205 = vmatprep.subr.mxu0 0.0
        %1206 = vmatpush1.msra.mxu0 %v1177
        %1207 = vmatprep.subr.mxu0 0.0
        %1208 = vmatpush1.msra.mxu0 %v1178
        %1209 = vmatprep.subr.mxu0 0.0
        %1210 = vmatpush1.msra.mxu0 %v1179
        %1211 = vmatprep.subr.mxu0 0.0
        %1212 = vmatpush1.msra.mxu0 %v1180
        %1213 = vmatprep.subr.mxu0 0.0
        %1214 = vmatpush1.msra.mxu0 0.0
        %1215 = vmatprep.subr.mxu0 0.0
        %1216 = vmatpush1.msra.mxu0 0.0
        %1217 = vmatprep.subr.mxu0 0.0
        %1218 = vmatpush1.msra.mxu0 0.0
        %1219 = vmatprep.subr.mxu0 0.0
        %1220 = vmatpush1.msra.mxu0 0.0
        %1221 = vmatprep.subr.mxu0 0.0
        %1222 = vmatpush1.msra.mxu0 0.0
        %1223 = vmatprep.subr.mxu0 0.0
        %1224 = vmatpush1.msra.mxu0 0.0
        %1225 = vmatprep.subr.mxu0 0.0
        %1226 = vmatpush1.msra.mxu0 0.0
        %1227 = vmatprep.subr.mxu0 0.0
        %1228 = vmatpush1.msra.mxu0 0.0
        %1229 = vmatprep.subr.mxu0 0.0
        %1230 = vmatpush1.msra.mxu0 0.0
        %1231 = vmatprep.subr.mxu0 0.0
        %1232 = vmatpush1.msra.mxu0 0.0
        %1233 = vmatprep.subr.mxu0 0.0
        %1234 = vmatpush1.msra.mxu0 0.0
        %1235 = vmatprep.subr.mxu0 0.0
        %1236 = vmatpush1.msra.mxu0 0.0
        %1237 = vmatprep.subr.mxu0 0.0
        %1238 = vmatpush1.msra.mxu0 0.0
        %1239 = vmatprep.subr.mxu0 0.0
        %1240 = vmatpush1.msra.mxu0 0.0
        %1241 = vmatprep.subr.mxu0 0.0
        %1242 = vmatpush1.msra.mxu0 0.0
        %1243 = vmatprep.subr.mxu0 0.0
        %1244 = vmatpush1.msra.mxu0 0.0
        %1245 = vmatprep.mubr.f32.mxu0 0.0
        %1246 = vmatmul.mubr.f32.gmra.mrb[0].mxu0 %v1132
        %v1247 = vpop.f32.mrb[0].mxu0
        %v1248 = vadd.f32 0.0, %v1247
        %v1249 = vpop.f32.mrb[0].mxu0
        %1250 = vmatprep.mubr.f32.mxu0 0.0
        %1251 = vmatmul.mubr.f32.gmra.mrb[0].mxu0 %v1133
        %v1252 = vpop.f32.mrb[0].mxu0
        %v1253 = vadd.f32 0.0, %v1252
        %v1254 = vpop.f32.mrb[0].mxu0
        %1255 = vmatprep.mubr.f32.mxu0 0.0
        %1256 = vmatmul.mubr.f32.gmra.mrb[0].mxu0 %v1134
        %v1257 = vpop.f32.mrb[0].mxu0
        %v1258 = vadd.f32 0.0, %v1257
        %v1259 = vpop.f32.mrb[0].mxu0
        %1260 = vmatprep.mubr.f32.mxu0 0.0
        %1261 = vmatmul.mubr.f32.gmra.mrb[0].mxu0 %v1135
        %v1262 = vpop.f32.mrb[0].mxu0
        %v1263 = vadd.f32 0.0, %v1262
        %v1264 = vpop.f32.mrb[0].mxu0
        %1265 = vmatprep.mubr.f32.mxu0 0.0
        %1266 = vmatmul.mubr.f32.gmra.mrb[0].mxu0 %v1136
        %v1267 = vpop.f32.mrb[0].mxu0
        %v1268 = vadd.f32 0.0, %v1267
        %v1269 = vpop.f32.mrb[0].mxu0
        %1270 = vmatprep.mubr.f32.mxu0 0.0
        %1271 = vmatmul.mubr.f32.gmra.mrb[0].mxu0 %v1137
        %v1272 = vpop.f32.mrb[0].mxu0
        %v1273 = vadd.f32 0.0, %v1272
        %v1274 = vpop.f32.mrb[0].mxu0
        %1275 = vmatprep.mubr.f32.mxu0 0.0
        %1276 = vmatmul.mubr.f32.gmra.mrb[0].mxu0 %v1138
        %v1277 = vpop.f32.mrb[0].mxu0
        %v1278 = vadd.f32 0.0, %v1277
        %v1279 = vpop.f32.mrb[0].mxu0
        %1280 = vmatprep.mubr.f32.mxu0 0.0
        %1281 = vmatmul.mubr.f32.gmra.mrb[0].mxu0 %v1139
        %v1282 = vpop.f32.mrb[0].mxu0
        %v1283 = vadd.f32 0.0, %v1282
        %v1284 = vpop.f32.mrb[0].mxu0
        %1285 = vmatprep.mubr.f32.mxu0 0.0
        %1286 = vmatmul.mubr.f32.gmra.mrb[0].mxu0 %v1140
        %v1287 = vpop.f32.mrb[0].mxu0
        %v1288 = vadd.f32 0.0, %v1287
        %v1289 = vpop.f32.mrb[0].mxu0
        %1290 = vmatprep.mubr.f32.mxu0 0.0
        %1291 = vmatmul.mubr.f32.gmra.mrb[0].mxu0 %v1141
        %v1292 = vpop.f32.mrb[0].mxu0
        %v1293 = vadd.f32 0.0, %v1292
        %v1294 = vpop.f32.mrb[0].mxu0
        %1295 = vmatprep.mubr.f32.mxu0 0.0
        %1296 = vmatmul.mubr.f32.gmra.mrb[0].mxu0 %v1142
        %v1297 = vpop.f32.mrb[0].mxu0
        %v1298 = vadd.f32 0.0, %v1297
        %v1299 = vpop.f32.mrb[0].mxu0
        %1300 = vmatprep.mubr.f32.mxu0 0.0
        %1301 = vmatmul.mubr.f32.gmra.mrb[0].mxu0 %v1143
        %v1302 = vpop.f32.mrb[0].mxu0
        %v1303 = vadd.f32 0.0, %v1302
        %v1304 = vpop.f32.mrb[0].mxu0
        %1305 = vmatprep.mubr.f32.mxu0 0.0
        %1306 = vmatmul.mubr.f32.gmra.mrb[0].mxu0 %v1144
        %v1307 = vpop.f32.mrb[0].mxu0
        %v1308 = vadd.f32 0.0, %v1307
        %v1309 = vpop.f32.mrb[0].mxu0
        %1310 = vmatprep.mubr.f32.mxu0 0.0
        %1311 = vmatmul.mubr.f32.gmra.mrb[0].mxu0 %v1145
        %v1312 = vpop.f32.mrb[0].mxu0
        %v1313 = vadd.f32 0.0, %v1312
        %v1314 = vpop.f32.mrb[0].mxu0
        %1315 = vmatprep.mubr.f32.mxu0 0.0
        %1316 = vmatmul.mubr.f32.gmra.mrb[0].mxu0 %v1146
        %v1317 = vpop.f32.mrb[0].mxu0
        %v1318 = vadd.f32 0.0, %v1317
        %v1319 = vpop.f32.mrb[0].mxu0
        %1320 = vmatprep.mubr.f32.mxu0 0.0
        %1321 = vmatmul.mubr.f32.gmra.mrb[0].mxu0 %v1147
        %v1322 = vpop.f32.mrb[0].mxu0
        %v1323 = vadd.f32 0.0, %v1322
        %v1324 = vpop.f32.mrb[0].mxu0
        %1325 = vmatprep.mubr.f32.mxu0 0.0
        %1326 = vmatmul.mubr.f32.gmra.mrb[0].mxu0 %v1148
        %v1327 = vpop.f32.mrb[0].mxu0
        %v1328 = vadd.f32 0.0, %v1327
        %v1329 = vpop.f32.mrb[0].mxu0
        %1330 = vmatprep.mubr.f32.mxu0 0.0
        %1331 = vmatmul.mubr.f32.gmra.mrb[0].mxu0 %v1149
        %v1332 = vpop.f32.mrb[0].mxu0
        %v1333 = vadd.f32 0.0, %v1332
        %v1334 = vpop.f32.mrb[0].mxu0
        %1335 = vmatprep.mubr.f32.mxu0 0.0
        %1336 = vmatmul.mubr.f32.gmra.mrb[0].mxu0 %v1150
        %v1337 = vpop.f32.mrb[0].mxu0
        %v1338 = vadd.f32 0.0, %v1337
        %v1339 = vpop.f32.mrb[0].mxu0
        %1340 = vmatprep.mubr.f32.mxu0 0.0
        %1341 = vmatmul.mubr.f32.gmra.mrb[0].mxu0 %v1151
        %v1342 = vpop.f32.mrb[0].mxu0
        %v1343 = vadd.f32 0.0, %v1342
        %v1344 = vpop.f32.mrb[0].mxu0
        %1345 = vmatprep.mubr.f32.mxu0 0.0
        %1346 = vmatmul.mubr.f32.gmra.mrb[0].mxu0 %v1152
        %v1347 = vpop.f32.mrb[0].mxu0
        %v1348 = vadd.f32 0.0, %v1347
        %v1349 = vpop.f32.mrb[0].mxu0
        %1350 = vmatprep.mubr.f32.mxu0 0.0
        %1351 = vmatmul.mubr.f32.gmra.mrb[0].mxu0 %v1153
        %v1352 = vpop.f32.mrb[0].mxu0
        %v1353 = vadd.f32 0.0, %v1352
        %v1354 = vpop.f32.mrb[0].mxu0
        %1355 = vmatprep.mubr.f32.mxu0 0.0
        %1356 = vmatmul.mubr.f32.gmra.mrb[0].mxu0 %v1154
        %v1357 = vpop.f32.mrb[0].mxu0
        %v1358 = vadd.f32 0.0, %v1357
        %v1359 = vpop.f32.mrb[0].mxu0
        %1360 = vmatprep.mubr.f32.mxu0 0.0
        %1361 = vmatmul.mubr.f32.gmra.mrb[0].mxu0 %v1155
        %v1362 = vpop.f32.mrb[0].mxu0
        %v1363 = vadd.f32 0.0, %v1362
        %v1364 = vpop.f32.mrb[0].mxu0
        %1365 = vmatprep.mubr.f32.mxu0 0.0
        %1366 = vmatmul.mubr.f32.gmra.mrb[0].mxu0 %v1156
        %v1367 = vpop.f32.mrb[0].mxu0
        %v1368 = vadd.f32 0.0, %v1367
        %v1369 = vpop.f32.mrb[0].mxu0
        %1370 = vmatprep.mubr.f32.mxu0 0.0
        %1371 = vmatmul.mubr.f32.gmra.mrb[0].mxu0 %v1157
        %v1372 = vpop.f32.mrb[0].mxu0
        %v1373 = vadd.f32 0.0, %v1372
        %v1374 = vpop.f32.mrb[0].mxu0
        %1375 = vmatprep.mubr.f32.mxu0 0.0
        %1376 = vmatmul.mubr.f32.gmra.mrb[0].mxu0 %v1158
        %v1377 = vpop.f32.mrb[0].mxu0
        %v1378 = vadd.f32 0.0, %v1377
        %v1379 = vpop.f32.mrb[0].mxu0
        %1380 = vmatprep.mubr.f32.mxu0 0.0
        %1381 = vmatmul.mubr.f32.gmra.mrb[0].mxu0 %v1159
        %v1382 = vpop.f32.mrb[0].mxu0
        %v1383 = vadd.f32 0.0, %v1382
        %v1384 = vpop.f32.mrb[0].mxu0
        %1385 = vmatprep.mubr.f32.mxu0 0.0
        %1386 = vmatmul.mubr.f32.gmra.mrb[0].mxu0 %v1160
        %v1387 = vpop.f32.mrb[0].mxu0
        %v1388 = vadd.f32 0.0, %v1387
        %v1389 = vpop.f32.mrb[0].mxu0
        %1390 = vmatprep.mubr.f32.mxu0 0.0
        %1391 = vmatmul.mubr.f32.gmra.mrb[0].mxu0 %v1161
        %v1392 = vpop.f32.mrb[0].mxu0
        %v1393 = vadd.f32 0.0, %v1392
        %v1394 = vpop.f32.mrb[0].mxu0
        %1395 = vmatprep.mubr.f32.mxu0 0.0
        %1396 = vmatmul.mubr.f32.gmra.mrb[0].mxu0 %v1162
        %v1397 = vpop.f32.mrb[0].mxu0
        %v1398 = vadd.f32 0.0, %v1397
        %v1399 = vpop.f32.mrb[0].mxu0
        %1400 = vmatprep.mubr.f32.mxu0 0.0
        %1401 = vmatmul.mubr.f32.gmra.mrb[0].mxu0 %v1163
        %v1402 = vpop.f32.mrb[0].mxu0
        %v1403 = vadd.f32 0.0, %v1402
        %v1404 = vpop.f32.mrb[0].mxu0
        %1405 = vdwg.mxu0
        %v1406 = vadd.f32 %v1099, %v1248
        %v1407 = vadd.f32 %v1100, %v1253
        %v1408 = vadd.f32 %v1101, %v1258
        %v1409 = vadd.f32 %v1102, %v1263
        %v1410 = vadd.f32 %v1103, %v1268
        %v1411 = vadd.f32 %v1104, %v1273
        %v1412 = vadd.f32 %v1105, %v1278
        %v1413 = vadd.f32 %v1106, %v1283
        %v1414 = vadd.f32 %v1107, %v1288
        %v1415 = vadd.f32 %v1108, %v1293
        %v1416 = vadd.f32 %v1109, %v1298
        %v1417 = vadd.f32 %v1110, %v1303
        %v1418 = vadd.f32 %v1111, %v1308
        %v1419 = vadd.f32 %v1112, %v1313
        %v1420 = vadd.f32 %v1113, %v1318
        %v1421 = vadd.f32 %v1114, %v1323
        %v1422 = vadd.f32 %v1115, %v1328
        %v1423 = vadd.f32 %v1116, %v1333
        %v1424 = vadd.f32 %v1117, %v1338
        %v1425 = vadd.f32 %v1118, %v1343
        %v1426 = vadd.f32 %v1119, %v1348
        %v1427 = vadd.f32 %v1120, %v1353
        %v1428 = vadd.f32 %v1121, %v1358
        %v1429 = vadd.f32 %v1122, %v1363
        %v1430 = vadd.f32 %v1123, %v1368
        %v1431 = vadd.f32 %v1124, %v1373
        %v1432 = vadd.f32 %v1125, %v1378
        %v1433 = vadd.f32 %v1126, %v1383
        %v1434 = vadd.f32 %v1127, %v1388
        %v1435 = vadd.f32 %v1128, %v1393
        %v1436 = vadd.f32 %v1129, %v1398
        %v1437 = vadd.f32 %v1130, %v1403
        %v1438 = vld [vmem:[%s1131 + $0x1] sm:$0xff]
        %v1439 = vld [vmem:[%s1131 + $0x9] sm:$0xff]
        %v1440 = vld [vmem:[%s1131 + $0x19] sm:$0xff]
        %v1441 = vld [vmem:[%s1131 + $0x21] sm:$0xff]
        %v1442 = vld [vmem:[%s1131 + $0x31] sm:$0xff]
        %v1443 = vld [vmem:[%s1131 + $0x39] sm:$0xff]
        %v1444 = vld [vmem:[%s1131 + $0x49] sm:$0xff]
        %v1445 = vld [vmem:[%s1131 + $0x51] sm:$0xff]
        %v1446 = vld [vmem:[%s1131 + $0x61] sm:$0xff]
        %v1447 = vld [vmem:[%s1131 + $0x69] sm:$0xff]
        %v1448 = vld [vmem:[%s1131 + $0x79] sm:$0xff]
        %v1449 = vld [vmem:[%s1131 + $0x81] sm:$0xff]
        %v1450 = vld [vmem:[%s1131 + $0x91] sm:$0xff]
        %v1451 = vld [vmem:[%s1131 + $0x99] sm:$0xff]
        %v1452 = vld [vmem:[%s1131 + $0xa9] sm:$0xff]
        %v1453 = vld [vmem:[%s1131 + $0xb1] sm:$0xff]
        %v1454 = vld [vmem:[%s1131 + $0xc1] sm:$0xff]
        %v1455 = vld [vmem:[%s1131 + $0xc9] sm:$0xff]
        %v1456 = vld [vmem:[%s1131 + $0xd9] sm:$0xff]
        %v1457 = vld [vmem:[%s1131 + $0xe1] sm:$0xff]
        %v1458 = vld [vmem:[%s1131 + $0xf1] sm:$0xff]
        %v1459 = vld [vmem:[%s1131 + $0xf9] sm:$0xff]
        %v1460 = vld [vmem:[%s1131 + $0x109] sm:$0xff]
        %v1461 = vld [vmem:[%s1131 + $0x111] sm:$0xff]
        %v1462 = vld [vmem:[%s1131 + $0x121] sm:$0xff]
        %v1463 = vld [vmem:[%s1131 + $0x129] sm:$0xff]
        %v1464 = vld [vmem:[%s1131 + $0x139] sm:$0xff]
        %v1465 = vld [vmem:[%s1131 + $0x141] sm:$0xff]
        %v1466 = vld [vmem:[%s1131 + $0x151] sm:$0xff]
        %v1467 = vld [vmem:[%s1131 + $0x159] sm:$0xff]
        %v1468 = vld [vmem:[%s1131 + $0x169] sm:$0xff]
        %v1469 = vld [vmem:[%s1131 + $0x171] sm:$0xff]
        %s1470 = scalar_lea.vmem %s1, 512
        %v1471 = vld [vmem:[%s1470] sm:$0xff]
        %v1472 = vld [vmem:[%s1470 + $0x8] sm:$0xff]
        %v1473 = vld [vmem:[%s1470 + $0x10] sm:$0xff]
        %v1474 = vld [vmem:[%s1470 + $0x18] sm:$0xff]
        %v1475 = vld [vmem:[%s1470 + $0x20] sm:$0xff]
        %v1476 = vld [vmem:[%s1470 + $0x28] sm:$0xff]
        %v1477 = vld [vmem:[%s1470 + $0x30] sm:$0xff]
        %v1478 = vld [vmem:[%s1470 + $0x38] sm:$0xff]
        %v1479 = vld [vmem:[%s1470 + $0x40] sm:$0xff]
        %v1480 = vld [vmem:[%s1470 + $0x48] sm:$0xff]
        %v1481 = vld [vmem:[%s1470 + $0x50] sm:$0xff]
        %v1482 = vld [vmem:[%s1470 + $0x58] sm:$0xff]
        %v1483 = vld [vmem:[%s1470 + $0x60] sm:$0xff]
        %v1484 = vld [vmem:[%s1470 + $0x68] sm:$0xff]
        %v1485 = vld [vmem:[%s1470 + $0x70] sm:$0xff]
        %v1486 = vld [vmem:[%s1470 + $0x78] sm:$0xff]
        %1487 = vmatprep.subr.mxu0 0.0
        %1488 = vmatpush1.msra.mxu0 %v1471
        %1489 = vmatprep.subr.mxu0 0.0
        %1490 = vmatpush1.msra.mxu0 %v1472
        %1491 = vmatprep.subr.mxu0 0.0
        %1492 = vmatpush1.msra.mxu0 %v1473
        %1493 = vmatprep.subr.mxu0 0.0
        %1494 = vmatpush1.msra.mxu0 %v1474
        %1495 = vmatprep.subr.mxu0 0.0
        %1496 = vmatpush1.msra.mxu0 %v1475
        %1497 = vmatprep.subr.mxu0 0.0
        %1498 = vmatpush1.msra.mxu0 %v1476
        %1499 = vmatprep.subr.mxu0 0.0
        %1500 = vmatpush1.msra.mxu0 %v1477
        %1501 = vmatprep.subr.mxu0 0.0
        %1502 = vmatpush1.msra.mxu0 %v1478
        %1503 = vmatprep.subr.mxu0 0.0
        %1504 = vmatpush1.msra.mxu0 %v1479
        %1505 = vmatprep.subr.mxu0 0.0
        %1506 = vmatpush1.msra.mxu0 %v1480
        %1507 = vmatprep.subr.mxu0 0.0
        %1508 = vmatpush1.msra.mxu0 %v1481
        %1509 = vmatprep.subr.mxu0 0.0
        %1510 = vmatpush1.msra.mxu0 %v1482
        %1511 = vmatprep.subr.mxu0 0.0
        %1512 = vmatpush1.msra.mxu0 %v1483
        %1513 = vmatprep.subr.mxu0 0.0
        %1514 = vmatpush1.msra.mxu0 %v1484
        %1515 = vmatprep.subr.mxu0 0.0
        %1516 = vmatpush1.msra.mxu0 %v1485
        %1517 = vmatprep.subr.mxu0 0.0
        %1518 = vmatpush1.msra.mxu0 %v1486
        %1519 = vmatprep.subr.mxu0 0.0
        %1520 = vmatpush1.msra.mxu0 0.0
        %1521 = vmatprep.subr.mxu0 0.0
        %1522 = vmatpush1.msra.mxu0 0.0
        %1523 = vmatprep.subr.mxu0 0.0
        %1524 = vmatpush1.msra.mxu0 0.0
        %1525 = vmatprep.subr.mxu0 0.0
        %1526 = vmatpush1.msra.mxu0 0.0
        %1527 = vmatprep.subr.mxu0 0.0
        %1528 = vmatpush1.msra.mxu0 0.0
        %1529 = vmatprep.subr.mxu0 0.0
        %1530 = vmatpush1.msra.mxu0 0.0
        %1531 = vmatprep.subr.mxu0 0.0
        %1532 = vmatpush1.msra.mxu0 0.0
        %1533 = vmatprep.subr.mxu0 0.0
        %1534 = vmatpush1.msra.mxu0 0.0
        %1535 = vmatprep.subr.mxu0 0.0
        %1536 = vmatpush1.msra.mxu0 0.0
        %1537 = vmatprep.subr.mxu0 0.0
        %1538 = vmatpush1.msra.mxu0 0.0
        %1539 = vmatprep.subr.mxu0 0.0
        %1540 = vmatpush1.msra.mxu0 0.0
        %1541 = vmatprep.subr.mxu0 0.0
        %1542 = vmatpush1.msra.mxu0 0.0
        %1543 = vmatprep.subr.mxu0 0.0
        %1544 = vmatpush1.msra.mxu0 0.0
        %1545 = vmatprep.subr.mxu0 0.0
        %1546 = vmatpush1.msra.mxu0 0.0
        %1547 = vmatprep.subr.mxu0 0.0
        %1548 = vmatpush1.msra.mxu0 0.0
        %1549 = vmatprep.subr.mxu0 0.0
        %1550 = vmatpush1.msra.mxu0 0.0
        %1551 = vmatprep.mubr.f32.mxu0 0.0
        %1552 = vmatmul.mubr.f32.gmra.mrb[0].mxu0 %v1438
        %v1553 = vpop.f32.mrb[0].mxu0
        %v1554 = vadd.f32 0.0, %v1553
        %v1555 = vpop.f32.mrb[0].mxu0
        %1556 = vmatprep.mubr.f32.mxu0 0.0
        %1557 = vmatmul.mubr.f32.gmra.mrb[0].mxu0 %v1439
        %v1558 = vpop.f32.mrb[0].mxu0
        %v1559 = vadd.f32 0.0, %v1558
        %v1560 = vpop.f32.mrb[0].mxu0
        %1561 = vmatprep.mubr.f32.mxu0 0.0
        %1562 = vmatmul.mubr.f32.gmra.mrb[0].mxu0 %v1440
        %v1563 = vpop.f32.mrb[0].mxu0
        %v1564 = vadd.f32 0.0, %v1563
        %v1565 = vpop.f32.mrb[0].mxu0
        %1566 = vmatprep.mubr.f32.mxu0 0.0
        %1567 = vmatmul.mubr.f32.gmra.mrb[0].mxu0 %v1441
        %v1568 = vpop.f32.mrb[0].mxu0
        %v1569 = vadd.f32 0.0, %v1568
        %v1570 = vpop.f32.mrb[0].mxu0
        %1571 = vmatprep.mubr.f32.mxu0 0.0
        %1572 = vmatmul.mubr.f32.gmra.mrb[0].mxu0 %v1442
        %v1573 = vpop.f32.mrb[0].mxu0
        %v1574 = vadd.f32 0.0, %v1573
        %v1575 = vpop.f32.mrb[0].mxu0
        %1576 = vmatprep.mubr.f32.mxu0 0.0
        %1577 = vmatmul.mubr.f32.gmra.mrb[0].mxu0 %v1443
        %v1578 = vpop.f32.mrb[0].mxu0
        %v1579 = vadd.f32 0.0, %v1578
        %v1580 = vpop.f32.mrb[0].mxu0
        %1581 = vmatprep.mubr.f32.mxu0 0.0
        %1582 = vmatmul.mubr.f32.gmra.mrb[0].mxu0 %v1444
        %v1583 = vpop.f32.mrb[0].mxu0
        %v1584 = vadd.f32 0.0, %v1583
        %v1585 = vpop.f32.mrb[0].mxu0
        %1586 = vmatprep.mubr.f32.mxu0 0.0
        %1587 = vmatmul.mubr.f32.gmra.mrb[0].mxu0 %v1445
        %v1588 = vpop.f32.mrb[0].mxu0
        %v1589 = vadd.f32 0.0, %v1588
        %v1590 = vpop.f32.mrb[0].mxu0
        %1591 = vmatprep.mubr.f32.mxu0 0.0
        %1592 = vmatmul.mubr.f32.gmra.mrb[0].mxu0 %v1446
        %v1593 = vpop.f32.mrb[0].mxu0
        %v1594 = vadd.f32 0.0, %v1593
        %v1595 = vpop.f32.mrb[0].mxu0
        %1596 = vmatprep.mubr.f32.mxu0 0.0
        %1597 = vmatmul.mubr.f32.gmra.mrb[0].mxu0 %v1447
        %v1598 = vpop.f32.mrb[0].mxu0
        %v1599 = vadd.f32 0.0, %v1598
        %v1600 = vpop.f32.mrb[0].mxu0
        %1601 = vmatprep.mubr.f32.mxu0 0.0
        %1602 = vmatmul.mubr.f32.gmra.mrb[0].mxu0 %v1448
        %v1603 = vpop.f32.mrb[0].mxu0
        %v1604 = vadd.f32 0.0, %v1603
        %v1605 = vpop.f32.mrb[0].mxu0
        %1606 = vmatprep.mubr.f32.mxu0 0.0
        %1607 = vmatmul.mubr.f32.gmra.mrb[0].mxu0 %v1449
        %v1608 = vpop.f32.mrb[0].mxu0
        %v1609 = vadd.f32 0.0, %v1608
        %v1610 = vpop.f32.mrb[0].mxu0
        %1611 = vmatprep.mubr.f32.mxu0 0.0
        %1612 = vmatmul.mubr.f32.gmra.mrb[0].mxu0 %v1450
        %v1613 = vpop.f32.mrb[0].mxu0
        %v1614 = vadd.f32 0.0, %v1613
        %v1615 = vpop.f32.mrb[0].mxu0
        %1616 = vmatprep.mubr.f32.mxu0 0.0
        %1617 = vmatmul.mubr.f32.gmra.mrb[0].mxu0 %v1451
        %v1618 = vpop.f32.mrb[0].mxu0
        %v1619 = vadd.f32 0.0, %v1618
        %v1620 = vpop.f32.mrb[0].mxu0
        %1621 = vmatprep.mubr.f32.mxu0 0.0
        %1622 = vmatmul.mubr.f32.gmra.mrb[0].mxu0 %v1452
        %v1623 = vpop.f32.mrb[0].mxu0
        %v1624 = vadd.f32 0.0, %v1623
        %v1625 = vpop.f32.mrb[0].mxu0
        %1626 = vmatprep.mubr.f32.mxu0 0.0
        %1627 = vmatmul.mubr.f32.gmra.mrb[0].mxu0 %v1453
        %v1628 = vpop.f32.mrb[0].mxu0
        %v1629 = vadd.f32 0.0, %v1628
        %v1630 = vpop.f32.mrb[0].mxu0
        %1631 = vmatprep.mubr.f32.mxu0 0.0
        %1632 = vmatmul.mubr.f32.gmra.mrb[0].mxu0 %v1454
        %v1633 = vpop.f32.mrb[0].mxu0
        %v1634 = vadd.f32 0.0, %v1633
        %v1635 = vpop.f32.mrb[0].mxu0
        %1636 = vmatprep.mubr.f32.mxu0 0.0
        %1637 = vmatmul.mubr.f32.gmra.mrb[0].mxu0 %v1455
        %v1638 = vpop.f32.mrb[0].mxu0
        %v1639 = vadd.f32 0.0, %v1638
        %v1640 = vpop.f32.mrb[0].mxu0
        %1641 = vmatprep.mubr.f32.mxu0 0.0
        %1642 = vmatmul.mubr.f32.gmra.mrb[0].mxu0 %v1456
        %v1643 = vpop.f32.mrb[0].mxu0
        %v1644 = vadd.f32 0.0, %v1643
        %v1645 = vpop.f32.mrb[0].mxu0
        %1646 = vmatprep.mubr.f32.mxu0 0.0
        %1647 = vmatmul.mubr.f32.gmra.mrb[0].mxu0 %v1457
        %v1648 = vpop.f32.mrb[0].mxu0
        %v1649 = vadd.f32 0.0, %v1648
        %v1650 = vpop.f32.mrb[0].mxu0
        %1651 = vmatprep.mubr.f32.mxu0 0.0
        %1652 = vmatmul.mubr.f32.gmra.mrb[0].mxu0 %v1458
        %v1653 = vpop.f32.mrb[0].mxu0
        %v1654 = vadd.f32 0.0, %v1653
        %v1655 = vpop.f32.mrb[0].mxu0
        %1656 = vmatprep.mubr.f32.mxu0 0.0
        %1657 = vmatmul.mubr.f32.gmra.mrb[0].mxu0 %v1459
        %v1658 = vpop.f32.mrb[0].mxu0
        %v1659 = vadd.f32 0.0, %v1658
        %v1660 = vpop.f32.mrb[0].mxu0
        %1661 = vmatprep.mubr.f32.mxu0 0.0
        %1662 = vmatmul.mubr.f32.gmra.mrb[0].mxu0 %v1460
        %v1663 = vpop.f32.mrb[0].mxu0
        %v1664 = vadd.f32 0.0, %v1663
        %v1665 = vpop.f32.mrb[0].mxu0
        %1666 = vmatprep.mubr.f32.mxu0 0.0
        %1667 = vmatmul.mubr.f32.gmra.mrb[0].mxu0 %v1461
        %v1668 = vpop.f32.mrb[0].mxu0
        %v1669 = vadd.f32 0.0, %v1668
        %v1670 = vpop.f32.mrb[0].mxu0
        %1671 = vmatprep.mubr.f32.mxu0 0.0
        %1672 = vmatmul.mubr.f32.gmra.mrb[0].mxu0 %v1462
        %v1673 = vpop.f32.mrb[0].mxu0
        %v1674 = vadd.f32 0.0, %v1673
        %v1675 = vpop.f32.mrb[0].mxu0
        %1676 = vmatprep.mubr.f32.mxu0 0.0
        %1677 = vmatmul.mubr.f32.gmra.mrb[0].mxu0 %v1463
        %v1678 = vpop.f32.mrb[0].mxu0
        %v1679 = vadd.f32 0.0, %v1678
        %v1680 = vpop.f32.mrb[0].mxu0
        %1681 = vmatprep.mubr.f32.mxu0 0.0
        %1682 = vmatmul.mubr.f32.gmra.mrb[0].mxu0 %v1464
        %v1683 = vpop.f32.mrb[0].mxu0
        %v1684 = vadd.f32 0.0, %v1683
        %v1685 = vpop.f32.mrb[0].mxu0
        %1686 = vmatprep.mubr.f32.mxu0 0.0
        %1687 = vmatmul.mubr.f32.gmra.mrb[0].mxu0 %v1465
        %v1688 = vpop.f32.mrb[0].mxu0
        %v1689 = vadd.f32 0.0, %v1688
        %v1690 = vpop.f32.mrb[0].mxu0
        %1691 = vmatprep.mubr.f32.mxu0 0.0
        %1692 = vmatmul.mubr.f32.gmra.mrb[0].mxu0 %v1466
        %v1693 = vpop.f32.mrb[0].mxu0
        %v1694 = vadd.f32 0.0, %v1693
        %v1695 = vpop.f32.mrb[0].mxu0
        %1696 = vmatprep.mubr.f32.mxu0 0.0
        %1697 = vmatmul.mubr.f32.gmra.mrb[0].mxu0 %v1467
        %v1698 = vpop.f32.mrb[0].mxu0
        %v1699 = vadd.f32 0.0, %v1698
        %v1700 = vpop.f32.mrb[0].mxu0
        %1701 = vmatprep.mubr.f32.mxu0 0.0
        %1702 = vmatmul.mubr.f32.gmra.mrb[0].mxu0 %v1468
        %v1703 = vpop.f32.mrb[0].mxu0
        %v1704 = vadd.f32 0.0, %v1703
        %v1705 = vpop.f32.mrb[0].mxu0
        %1706 = vmatprep.mubr.f32.mxu0 0.0
        %1707 = vmatmul.mubr.f32.gmra.mrb[0].mxu0 %v1469
        %v1708 = vpop.f32.mrb[0].mxu0
        %v1709 = vadd.f32 0.0, %v1708
        %v1710 = vpop.f32.mrb[0].mxu0
        %1711 = vdwg.mxu0
        %v1712 = vadd.f32 %v1406, %v1554
        %v1713 = vadd.f32 %v1407, %v1559
        %v1714 = vadd.f32 %v1408, %v1564
        %v1715 = vadd.f32 %v1409, %v1569
        %v1716 = vadd.f32 %v1410, %v1574
        %v1717 = vadd.f32 %v1411, %v1579
        %v1718 = vadd.f32 %v1412, %v1584
        %v1719 = vadd.f32 %v1413, %v1589
        %v1720 = vadd.f32 %v1414, %v1594
        %v1721 = vadd.f32 %v1415, %v1599
        %v1722 = vadd.f32 %v1416, %v1604
        %v1723 = vadd.f32 %v1417, %v1609
        %v1724 = vadd.f32 %v1418, %v1614
        %v1725 = vadd.f32 %v1419, %v1619
        %v1726 = vadd.f32 %v1420, %v1624
        %v1727 = vadd.f32 %v1421, %v1629
        %v1728 = vadd.f32 %v1422, %v1634
        %v1729 = vadd.f32 %v1423, %v1639
        %v1730 = vadd.f32 %v1424, %v1644
        %v1731 = vadd.f32 %v1425, %v1649
        %v1732 = vadd.f32 %v1426, %v1654
        %v1733 = vadd.f32 %v1427, %v1659
        %v1734 = vadd.f32 %v1428, %v1664
        %v1735 = vadd.f32 %v1429, %v1669
        %v1736 = vadd.f32 %v1430, %v1674
        %v1737 = vadd.f32 %v1431, %v1679
        %v1738 = vadd.f32 %v1432, %v1684
        %v1739 = vadd.f32 %v1433, %v1689
        %v1740 = vadd.f32 %v1434, %v1694
        %v1741 = vadd.f32 %v1435, %v1699
        %v1742 = vadd.f32 %v1436, %v1704
        %v1743 = vadd.f32 %v1437, %v1709
        %v1744 = vld [vmem:[%s1131 + $0x2] sm:$0xff]
        %v1745 = vld [vmem:[%s1131 + $0xa] sm:$0xff]
        %v1746 = vld [vmem:[%s1131 + $0x1a] sm:$0xff]
        %v1747 = vld [vmem:[%s1131 + $0x22] sm:$0xff]
        %v1748 = vld [vmem:[%s1131 + $0x32] sm:$0xff]
        %v1749 = vld [vmem:[%s1131 + $0x3a] sm:$0xff]
        %v1750 = vld [vmem:[%s1131 + $0x4a] sm:$0xff]
        %v1751 = vld [vmem:[%s1131 + $0x52] sm:$0xff]
        %v1752 = vld [vmem:[%s1131 + $0x62] sm:$0xff]
        %v1753 = vld [vmem:[%s1131 + $0x6a] sm:$0xff]
        %v1754 = vld [vmem:[%s1131 + $0x7a] sm:$0xff]
        %v1755 = vld [vmem:[%s1131 + $0x82] sm:$0xff]
        %v1756 = vld [vmem:[%s1131 + $0x92] sm:$0xff]
        %v1757 = vld [vmem:[%s1131 + $0x9a] sm:$0xff]
        %v1758 = vld [vmem:[%s1131 + $0xaa] sm:$0xff]
        %v1759 = vld [vmem:[%s1131 + $0xb2] sm:$0xff]
        %v1760 = vld [vmem:[%s1131 + $0xc2] sm:$0xff]
        %v1761 = vld [vmem:[%s1131 + $0xca] sm:$0xff]
        %v1762 = vld [vmem:[%s1131 + $0xda] sm:$0xff]
        %v1763 = vld [vmem:[%s1131 + $0xe2] sm:$0xff]
        %v1764 = vld [vmem:[%s1131 + $0xf2] sm:$0xff]
        %v1765 = vld [vmem:[%s1131 + $0xfa] sm:$0xff]
        %v1766 = vld [vmem:[%s1131 + $0x10a] sm:$0xff]
        %v1767 = vld [vmem:[%s1131 + $0x112] sm:$0xff]
        %v1768 = vld [vmem:[%s1131 + $0x122] sm:$0xff]
        %v1769 = vld [vmem:[%s1131 + $0x12a] sm:$0xff]
        %v1770 = vld [vmem:[%s1131 + $0x13a] sm:$0xff]
        %v1771 = vld [vmem:[%s1131 + $0x142] sm:$0xff]
        %v1772 = vld [vmem:[%s1131 + $0x152] sm:$0xff]
        %v1773 = vld [vmem:[%s1131 + $0x15a] sm:$0xff]
        %v1774 = vld [vmem:[%s1131 + $0x16a] sm:$0xff]
        %v1775 = vld [vmem:[%s1131 + $0x172] sm:$0xff]
        %s1776 = scalar_lea.vmem %s1, 640
        %v1777 = vld [vmem:[%s1776] sm:$0xff]
        %v1778 = vld [vmem:[%s1776 + $0x8] sm:$0xff]
        %v1779 = vld [vmem:[%s1776 + $0x10] sm:$0xff]
        %v1780 = vld [vmem:[%s1776 + $0x18] sm:$0xff]
        %v1781 = vld [vmem:[%s1776 + $0x20] sm:$0xff]
        %v1782 = vld [vmem:[%s1776 + $0x28] sm:$0xff]
        %v1783 = vld [vmem:[%s1776 + $0x30] sm:$0xff]
        %v1784 = vld [vmem:[%s1776 + $0x38] sm:$0xff]
        %v1785 = vld [vmem:[%s1776 + $0x40] sm:$0xff]
        %v1786 = vld [vmem:[%s1776 + $0x48] sm:$0xff]
        %v1787 = vld [vmem:[%s1776 + $0x50] sm:$0xff]
        %v1788 = vld [vmem:[%s1776 + $0x58] sm:$0xff]
        %v1789 = vld [vmem:[%s1776 + $0x60] sm:$0xff]
        %v1790 = vld [vmem:[%s1776 + $0x68] sm:$0xff]
        %v1791 = vld [vmem:[%s1776 + $0x70] sm:$0xff]
        %v1792 = vld [vmem:[%s1776 + $0x78] sm:$0xff]
        %1793 = vmatprep.subr.mxu0 0.0
        %1794 = vmatpush1.msra.mxu0 %v1777
        %1795 = vmatprep.subr.mxu0 0.0
        %1796 = vmatpush1.msra.mxu0 %v1778
        %1797 = vmatprep.subr.mxu0 0.0
        %1798 = vmatpush1.msra.mxu0 %v1779
        %1799 = vmatprep.subr.mxu0 0.0
        %1800 = vmatpush1.msra.mxu0 %v1780
        %1801 = vmatprep.subr.mxu0 0.0
        %1802 = vmatpush1.msra.mxu0 %v1781
        %1803 = vmatprep.subr.mxu0 0.0
        %1804 = vmatpush1.msra.mxu0 %v1782
        %1805 = vmatprep.subr.mxu0 0.0
        %1806 = vmatpush1.msra.mxu0 %v1783
        %1807 = vmatprep.subr.mxu0 0.0
        %1808 = vmatpush1.msra.mxu0 %v1784
        %1809 = vmatprep.subr.mxu0 0.0
        %1810 = vmatpush1.msra.mxu0 %v1785
        %1811 = vmatprep.subr.mxu0 0.0
        %1812 = vmatpush1.msra.mxu0 %v1786
        %1813 = vmatprep.subr.mxu0 0.0
        %1814 = vmatpush1.msra.mxu0 %v1787
        %1815 = vmatprep.subr.mxu0 0.0
        %1816 = vmatpush1.msra.mxu0 %v1788
        %1817 = vmatprep.subr.mxu0 0.0
        %1818 = vmatpush1.msra.mxu0 %v1789
        %1819 = vmatprep.subr.mxu0 0.0
        %1820 = vmatpush1.msra.mxu0 %v1790
        %1821 = vmatprep.subr.mxu0 0.0
        %1822 = vmatpush1.msra.mxu0 %v1791
        %1823 = vmatprep.subr.mxu0 0.0
        %1824 = vmatpush1.msra.mxu0 %v1792
        %1825 = vmatprep.subr.mxu0 0.0
        %1826 = vmatpush1.msra.mxu0 0.0
        %1827 = vmatprep.subr.mxu0 0.0
        %1828 = vmatpush1.msra.mxu0 0.0
        %1829 = vmatprep.subr.mxu0 0.0
        %1830 = vmatpush1.msra.mxu0 0.0
        %1831 = vmatprep.subr.mxu0 0.0
        %1832 = vmatpush1.msra.mxu0 0.0
        %1833 = vmatprep.subr.mxu0 0.0
        %1834 = vmatpush1.msra.mxu0 0.0
        %1835 = vmatprep.subr.mxu0 0.0
        %1836 = vmatpush1.msra.mxu0 0.0
        %1837 = vmatprep.subr.mxu0 0.0
        %1838 = vmatpush1.msra.mxu0 0.0
        %1839 = vmatprep.subr.mxu0 0.0
        %1840 = vmatpush1.msra.mxu0 0.0
        %1841 = vmatprep.subr.mxu0 0.0
        %1842 = vmatpush1.msra.mxu0 0.0
        %1843 = vmatprep.subr.mxu0 0.0
        %1844 = vmatpush1.msra.mxu0 0.0
        %1845 = vmatprep.subr.mxu0 0.0
        %1846 = vmatpush1.msra.mxu0 0.0
        %1847 = vmatprep.subr.mxu0 0.0
        %1848 = vmatpush1.msra.mxu0 0.0
        %1849 = vmatprep.subr.mxu0 0.0
        %1850 = vmatpush1.msra.mxu0 0.0
        %1851 = vmatprep.subr.mxu0 0.0
        %1852 = vmatpush1.msra.mxu0 0.0
        %1853 = vmatprep.subr.mxu0 0.0
        %1854 = vmatpush1.msra.mxu0 0.0
        %1855 = vmatprep.subr.mxu0 0.0
        %1856 = vmatpush1.msra.mxu0 0.0
        %1857 = vmatprep.mubr.f32.mxu0 0.0
        %1858 = vmatmul.mubr.f32.gmra.mrb[0].mxu0 %v1744
        %v1859 = vpop.f32.mrb[0].mxu0
        %v1860 = vadd.f32 0.0, %v1859
        %v1861 = vpop.f32.mrb[0].mxu0
        %1862 = vmatprep.mubr.f32.mxu0 0.0
        %1863 = vmatmul.mubr.f32.gmra.mrb[0].mxu0 %v1745
        %v1864 = vpop.f32.mrb[0].mxu0
        %v1865 = vadd.f32 0.0, %v1864
        %v1866 = vpop.f32.mrb[0].mxu0
        %1867 = vmatprep.mubr.f32.mxu0 0.0
        %1868 = vmatmul.mubr.f32.gmra.mrb[0].mxu0 %v1746
        %v1869 = vpop.f32.mrb[0].mxu0
        %v1870 = vadd.f32 0.0, %v1869
        %v1871 = vpop.f32.mrb[0].mxu0
        %1872 = vmatprep.mubr.f32.mxu0 0.0
        %1873 = vmatmul.mubr.f32.gmra.mrb[0].mxu0 %v1747
        %v1874 = vpop.f32.mrb[0].mxu0
        %v1875 = vadd.f32 0.0, %v1874
        %v1876 = vpop.f32.mrb[0].mxu0
        %1877 = vmatprep.mubr.f32.mxu0 0.0
        %1878 = vmatmul.mubr.f32.gmra.mrb[0].mxu0 %v1748
        %v1879 = vpop.f32.mrb[0].mxu0
        %v1880 = vadd.f32 0.0, %v1879
        %v1881 = vpop.f32.mrb[0].mxu0
        %1882 = vmatprep.mubr.f32.mxu0 0.0
        %1883 = vmatmul.mubr.f32.gmra.mrb[0].mxu0 %v1749
        %v1884 = vpop.f32.mrb[0].mxu0
        %v1885 = vadd.f32 0.0, %v1884
        %v1886 = vpop.f32.mrb[0].mxu0
        %1887 = vmatprep.mubr.f32.mxu0 0.0
        %1888 = vmatmul.mubr.f32.gmra.mrb[0].mxu0 %v1750
        %v1889 = vpop.f32.mrb[0].mxu0
        %v1890 = vadd.f32 0.0, %v1889
        %v1891 = vpop.f32.mrb[0].mxu0
        %1892 = vmatprep.mubr.f32.mxu0 0.0
        %1893 = vmatmul.mubr.f32.gmra.mrb[0].mxu0 %v1751
        %v1894 = vpop.f32.mrb[0].mxu0
        %v1895 = vadd.f32 0.0, %v1894
        %v1896 = vpop.f32.mrb[0].mxu0
        %1897 = vmatprep.mubr.f32.mxu0 0.0
        %1898 = vmatmul.mubr.f32.gmra.mrb[0].mxu0 %v1752
        %v1899 = vpop.f32.mrb[0].mxu0
        %v1900 = vadd.f32 0.0, %v1899
        %v1901 = vpop.f32.mrb[0].mxu0
        %1902 = vmatprep.mubr.f32.mxu0 0.0
        %1903 = vmatmul.mubr.f32.gmra.mrb[0].mxu0 %v1753
        %v1904 = vpop.f32.mrb[0].mxu0
        %v1905 = vadd.f32 0.0, %v1904
        %v1906 = vpop.f32.mrb[0].mxu0
        %1907 = vmatprep.mubr.f32.mxu0 0.0
        %1908 = vmatmul.mubr.f32.gmra.mrb[0].mxu0 %v1754
        %v1909 = vpop.f32.mrb[0].mxu0
        %v1910 = vadd.f32 0.0, %v1909
        %v1911 = vpop.f32.mrb[0].mxu0
        %1912 = vmatprep.mubr.f32.mxu0 0.0
        %1913 = vmatmul.mubr.f32.gmra.mrb[0].mxu0 %v1755
        %v1914 = vpop.f32.mrb[0].mxu0
        %v1915 = vadd.f32 0.0, %v1914
        %v1916 = vpop.f32.mrb[0].mxu0
        %1917 = vmatprep.mubr.f32.mxu0 0.0
        %1918 = vmatmul.mubr.f32.gmra.mrb[0].mxu0 %v1756
        %v1919 = vpop.f32.mrb[0].mxu0
        %v1920 = vadd.f32 0.0, %v1919
        %v1921 = vpop.f32.mrb[0].mxu0
        %1922 = vmatprep.mubr.f32.mxu0 0.0
        %1923 = vmatmul.mubr.f32.gmra.mrb[0].mxu0 %v1757
        %v1924 = vpop.f32.mrb[0].mxu0
        %v1925 = vadd.f32 0.0, %v1924
        %v1926 = vpop.f32.mrb[0].mxu0
        %1927 = vmatprep.mubr.f32.mxu0 0.0
        %1928 = vmatmul.mubr.f32.gmra.mrb[0].mxu0 %v1758
        %v1929 = vpop.f32.mrb[0].mxu0
        %v1930 = vadd.f32 0.0, %v1929
        %v1931 = vpop.f32.mrb[0].mxu0
        %1932 = vmatprep.mubr.f32.mxu0 0.0
        %1933 = vmatmul.mubr.f32.gmra.mrb[0].mxu0 %v1759
        %v1934 = vpop.f32.mrb[0].mxu0
        %v1935 = vadd.f32 0.0, %v1934
        %v1936 = vpop.f32.mrb[0].mxu0
        %1937 = vmatprep.mubr.f32.mxu0 0.0
        %1938 = vmatmul.mubr.f32.gmra.mrb[0].mxu0 %v1760
        %v1939 = vpop.f32.mrb[0].mxu0
        %v1940 = vadd.f32 0.0, %v1939
        %v1941 = vpop.f32.mrb[0].mxu0
        %1942 = vmatprep.mubr.f32.mxu0 0.0
        %1943 = vmatmul.mubr.f32.gmra.mrb[0].mxu0 %v1761
        %v1944 = vpop.f32.mrb[0].mxu0
        %v1945 = vadd.f32 0.0, %v1944
        %v1946 = vpop.f32.mrb[0].mxu0
        %1947 = vmatprep.mubr.f32.mxu0 0.0
        %1948 = vmatmul.mubr.f32.gmra.mrb[0].mxu0 %v1762
        %v1949 = vpop.f32.mrb[0].mxu0
        %v1950 = vadd.f32 0.0, %v1949
        %v1951 = vpop.f32.mrb[0].mxu0
        %1952 = vmatprep.mubr.f32.mxu0 0.0
        %1953 = vmatmul.mubr.f32.gmra.mrb[0].mxu0 %v1763
        %v1954 = vpop.f32.mrb[0].mxu0
        %v1955 = vadd.f32 0.0, %v1954
        %v1956 = vpop.f32.mrb[0].mxu0
        %1957 = vmatprep.mubr.f32.mxu0 0.0
        %1958 = vmatmul.mubr.f32.gmra.mrb[0].mxu0 %v1764
        %v1959 = vpop.f32.mrb[0].mxu0
        %v1960 = vadd.f32 0.0, %v1959
        %v1961 = vpop.f32.mrb[0].mxu0
        %1962 = vmatprep.mubr.f32.mxu0 0.0
        %1963 = vmatmul.mubr.f32.gmra.mrb[0].mxu0 %v1765
        %v1964 = vpop.f32.mrb[0].mxu0
        %v1965 = vadd.f32 0.0, %v1964
        %v1966 = vpop.f32.mrb[0].mxu0
        %1967 = vmatprep.mubr.f32.mxu0 0.0
        %1968 = vmatmul.mubr.f32.gmra.mrb[0].mxu0 %v1766
        %v1969 = vpop.f32.mrb[0].mxu0
        %v1970 = vadd.f32 0.0, %v1969
        %v1971 = vpop.f32.mrb[0].mxu0
        %1972 = vmatprep.mubr.f32.mxu0 0.0
        %1973 = vmatmul.mubr.f32.gmra.mrb[0].mxu0 %v1767
        %v1974 = vpop.f32.mrb[0].mxu0
        %v1975 = vadd.f32 0.0, %v1974
        %v1976 = vpop.f32.mrb[0].mxu0
        %1977 = vmatprep.mubr.f32.mxu0 0.0
        %1978 = vmatmul.mubr.f32.gmra.mrb[0].mxu0 %v1768
        %v1979 = vpop.f32.mrb[0].mxu0
        %v1980 = vadd.f32 0.0, %v1979
        %v1981 = vpop.f32.mrb[0].mxu0
        %1982 = vmatprep.mubr.f32.mxu0 0.0
        %1983 = vmatmul.mubr.f32.gmra.mrb[0].mxu0 %v1769
        %v1984 = vpop.f32.mrb[0].mxu0
        %v1985 = vadd.f32 0.0, %v1984
        %v1986 = vpop.f32.mrb[0].mxu0
        %1987 = vmatprep.mubr.f32.mxu0 0.0
        %1988 = vmatmul.mubr.f32.gmra.mrb[0].mxu0 %v1770
        %v1989 = vpop.f32.mrb[0].mxu0
        %v1990 = vadd.f32 0.0, %v1989
        %v1991 = vpop.f32.mrb[0].mxu0
        %1992 = vmatprep.mubr.f32.mxu0 0.0
        %1993 = vmatmul.mubr.f32.gmra.mrb[0].mxu0 %v1771
        %v1994 = vpop.f32.mrb[0].mxu0
        %v1995 = vadd.f32 0.0, %v1994
        %v1996 = vpop.f32.mrb[0].mxu0
        %1997 = vmatprep.mubr.f32.mxu0 0.0
        %1998 = vmatmul.mubr.f32.gmra.mrb[0].mxu0 %v1772
        %v1999 = vpop.f32.mrb[0].mxu0
        %v2000 = vadd.f32 0.0, %v1999
        %v2001 = vpop.f32.mrb[0].mxu0
        %2002 = vmatprep.mubr.f32.mxu0 0.0
        %2003 = vmatmul.mubr.f32.gmra.mrb[0].mxu0 %v1773
        %v2004 = vpop.f32.mrb[0].mxu0
        %v2005 = vadd.f32 0.0, %v2004
        %v2006 = vpop.f32.mrb[0].mxu0
        %2007 = vmatprep.mubr.f32.mxu0 0.0
        %2008 = vmatmul.mubr.f32.gmra.mrb[0].mxu0 %v1774
        %v2009 = vpop.f32.mrb[0].mxu0
        %v2010 = vadd.f32 0.0, %v2009
        %v2011 = vpop.f32.mrb[0].mxu0
        %2012 = vmatprep.mubr.f32.mxu0 0.0
        %2013 = vmatmul.mubr.f32.gmra.mrb[0].mxu0 %v1775
        %v2014 = vpop.f32.mrb[0].mxu0
        %v2015 = vadd.f32 0.0, %v2014
        %v2016 = vpop.f32.mrb[0].mxu0
        %2017 = vdwg.mxu0
        %v2018 = vadd.f32 %v1712, %v1860
        %v2019 = vadd.f32 %v1713, %v1865
        %v2020 = vadd.f32 %v1714, %v1870
        %v2021 = vadd.f32 %v1715, %v1875
        %v2022 = vadd.f32 %v1716, %v1880
        %v2023 = vadd.f32 %v1717, %v1885
        %v2024 = vadd.f32 %v1718, %v1890
        %v2025 = vadd.f32 %v1719, %v1895
        %v2026 = vadd.f32 %v1720, %v1900
        %v2027 = vadd.f32 %v1721, %v1905
        %v2028 = vadd.f32 %v1722, %v1910
        %v2029 = vadd.f32 %v1723, %v1915
        %v2030 = vadd.f32 %v1724, %v1920
        %v2031 = vadd.f32 %v1725, %v1925
        %v2032 = vadd.f32 %v1726, %v1930
        %v2033 = vadd.f32 %v1727, %v1935
        %v2034 = vadd.f32 %v1728, %v1940
        %v2035 = vadd.f32 %v1729, %v1945
        %v2036 = vadd.f32 %v1730, %v1950
        %v2037 = vadd.f32 %v1731, %v1955
        %v2038 = vadd.f32 %v1732, %v1960
        %v2039 = vadd.f32 %v1733, %v1965
        %v2040 = vadd.f32 %v1734, %v1970
        %v2041 = vadd.f32 %v1735, %v1975
        %v2042 = vadd.f32 %v1736, %v1980
        %v2043 = vadd.f32 %v1737, %v1985
        %v2044 = vadd.f32 %v1738, %v1990
        %v2045 = vadd.f32 %v1739, %v1995
        %v2046 = vadd.f32 %v1740, %v2000
        %v2047 = vadd.f32 %v1741, %v2005
        %v2048 = vadd.f32 %v1742, %v2010
        %v2049 = vadd.f32 %v1743, %v2015
        %s2050 = scalar_lea.vmem %s277, 48
        %v2051 = vld [vmem:[%s2050] sm:$0xff]
        %v2052 = vld [vmem:[%s2050 + $0x8] sm:$0xff]
        %v2053 = vld [vmem:[%s2050 + $0x18] sm:$0xff]
        %v2054 = vld [vmem:[%s2050 + $0x20] sm:$0xff]
        %v2055 = vld [vmem:[%s2050 + $0x30] sm:$0xff]
        %v2056 = vld [vmem:[%s2050 + $0x38] sm:$0xff]
        %v2057 = vld [vmem:[%s2050 + $0x48] sm:$0xff]
        %v2058 = vld [vmem:[%s2050 + $0x50] sm:$0xff]
        %v2059 = vld [vmem:[%s2050 + $0x60] sm:$0xff]
        %v2060 = vld [vmem:[%s2050 + $0x68] sm:$0xff]
        %v2061 = vld [vmem:[%s2050 + $0x78] sm:$0xff]
        %v2062 = vld [vmem:[%s2050 + $0x80] sm:$0xff]
        %v2063 = vld [vmem:[%s2050 + $0x90] sm:$0xff]
        %v2064 = vld [vmem:[%s2050 + $0x98] sm:$0xff]
        %v2065 = vld [vmem:[%s2050 + $0xa8] sm:$0xff]
        %v2066 = vld [vmem:[%s2050 + $0xb0] sm:$0xff]
        %v2067 = vld [vmem:[%s2050 + $0xc0] sm:$0xff]
        %v2068 = vld [vmem:[%s2050 + $0xc8] sm:$0xff]
        %v2069 = vld [vmem:[%s2050 + $0xd8] sm:$0xff]
        %v2070 = vld [vmem:[%s2050 + $0xe0] sm:$0xff]
        %v2071 = vld [vmem:[%s2050 + $0xf0] sm:$0xff]
        %v2072 = vld [vmem:[%s2050 + $0xf8] sm:$0xff]
        %v2073 = vld [vmem:[%s2050 + $0x108] sm:$0xff]
        %v2074 = vld [vmem:[%s2050 + $0x110] sm:$0xff]
        %v2075 = vld [vmem:[%s2050 + $0x120] sm:$0xff]
        %v2076 = vld [vmem:[%s2050 + $0x128] sm:$0xff]
        %v2077 = vld [vmem:[%s2050 + $0x138] sm:$0xff]
        %v2078 = vld [vmem:[%s2050 + $0x140] sm:$0xff]
        %v2079 = vld [vmem:[%s2050 + $0x150] sm:$0xff]
        %v2080 = vld [vmem:[%s2050 + $0x158] sm:$0xff]
        %v2081 = vld [vmem:[%s2050 + $0x168] sm:$0xff]
        %v2082 = vld [vmem:[%s2050 + $0x170] sm:$0xff]
        %s2083 = scalar_lea.vmem %s1, 768
        %v2084 = vld [vmem:[%s2083] sm:$0xff]
        %v2085 = vld [vmem:[%s2083 + $0x8] sm:$0xff]
        %v2086 = vld [vmem:[%s2083 + $0x10] sm:$0xff]
        %v2087 = vld [vmem:[%s2083 + $0x18] sm:$0xff]
        %v2088 = vld [vmem:[%s2083 + $0x20] sm:$0xff]
        %v2089 = vld [vmem:[%s2083 + $0x28] sm:$0xff]
        %v2090 = vld [vmem:[%s2083 + $0x30] sm:$0xff]
        %v2091 = vld [vmem:[%s2083 + $0x38] sm:$0xff]
        %v2092 = vld [vmem:[%s2083 + $0x40] sm:$0xff]
        %v2093 = vld [vmem:[%s2083 + $0x48] sm:$0xff]
        %v2094 = vld [vmem:[%s2083 + $0x50] sm:$0xff]
        %v2095 = vld [vmem:[%s2083 + $0x58] sm:$0xff]
        %v2096 = vld [vmem:[%s2083 + $0x60] sm:$0xff]
        %v2097 = vld [vmem:[%s2083 + $0x68] sm:$0xff]
        %v2098 = vld [vmem:[%s2083 + $0x70] sm:$0xff]
        %v2099 = vld [vmem:[%s2083 + $0x78] sm:$0xff]
        %2100 = vmatprep.subr.mxu0 0.0
        %2101 = vmatpush1.msra.mxu0 %v2084
        %2102 = vmatprep.subr.mxu0 0.0
        %2103 = vmatpush1.msra.mxu0 %v2085
        %2104 = vmatprep.subr.mxu0 0.0
        %2105 = vmatpush1.msra.mxu0 %v2086
        %2106 = vmatprep.subr.mxu0 0.0
        %2107 = vmatpush1.msra.mxu0 %v2087
        %2108 = vmatprep.subr.mxu0 0.0
        %2109 = vmatpush1.msra.mxu0 %v2088
        %2110 = vmatprep.subr.mxu0 0.0
        %2111 = vmatpush1.msra.mxu0 %v2089
        %2112 = vmatprep.subr.mxu0 0.0
        %2113 = vmatpush1.msra.mxu0 %v2090
        %2114 = vmatprep.subr.mxu0 0.0
        %2115 = vmatpush1.msra.mxu0 %v2091
        %2116 = vmatprep.subr.mxu0 0.0
        %2117 = vmatpush1.msra.mxu0 %v2092
        %2118 = vmatprep.subr.mxu0 0.0
        %2119 = vmatpush1.msra.mxu0 %v2093
        %2120 = vmatprep.subr.mxu0 0.0
        %2121 = vmatpush1.msra.mxu0 %v2094
        %2122 = vmatprep.subr.mxu0 0.0
        %2123 = vmatpush1.msra.mxu0 %v2095
        %2124 = vmatprep.subr.mxu0 0.0
        %2125 = vmatpush1.msra.mxu0 %v2096
        %2126 = vmatprep.subr.mxu0 0.0
        %2127 = vmatpush1.msra.mxu0 %v2097
        %2128 = vmatprep.subr.mxu0 0.0
        %2129 = vmatpush1.msra.mxu0 %v2098
        %2130 = vmatprep.subr.mxu0 0.0
        %2131 = vmatpush1.msra.mxu0 %v2099
        %2132 = vmatprep.subr.mxu0 0.0
        %2133 = vmatpush1.msra.mxu0 0.0
        %2134 = vmatprep.subr.mxu0 0.0
        %2135 = vmatpush1.msra.mxu0 0.0
        %2136 = vmatprep.subr.mxu0 0.0
        %2137 = vmatpush1.msra.mxu0 0.0
        %2138 = vmatprep.subr.mxu0 0.0
        %2139 = vmatpush1.msra.mxu0 0.0
        %2140 = vmatprep.subr.mxu0 0.0
        %2141 = vmatpush1.msra.mxu0 0.0
        %2142 = vmatprep.subr.mxu0 0.0
        %2143 = vmatpush1.msra.mxu0 0.0
        %2144 = vmatprep.subr.mxu0 0.0
        %2145 = vmatpush1.msra.mxu0 0.0
        %2146 = vmatprep.subr.mxu0 0.0
        %2147 = vmatpush1.msra.mxu0 0.0
        %2148 = vmatprep.subr.mxu0 0.0
        %2149 = vmatpush1.msra.mxu0 0.0
        %2150 = vmatprep.subr.mxu0 0.0
        %2151 = vmatpush1.msra.mxu0 0.0
        %2152 = vmatprep.subr.mxu0 0.0
        %2153 = vmatpush1.msra.mxu0 0.0
        %2154 = vmatprep.subr.mxu0 0.0
        %2155 = vmatpush1.msra.mxu0 0.0
        %2156 = vmatprep.subr.mxu0 0.0
        %2157 = vmatpush1.msra.mxu0 0.0
        %2158 = vmatprep.subr.mxu0 0.0
        %2159 = vmatpush1.msra.mxu0 0.0
        %2160 = vmatprep.subr.mxu0 0.0
        %2161 = vmatpush1.msra.mxu0 0.0
        %2162 = vmatprep.subr.mxu0 0.0
        %2163 = vmatpush1.msra.mxu0 0.0
        %2164 = vmatprep.mubr.f32.mxu0 0.0
        %2165 = vmatmul.mubr.f32.gmra.mrb[0].mxu0 %v2051
        %v2166 = vpop.f32.mrb[0].mxu0
        %v2167 = vadd.f32 0.0, %v2166
        %v2168 = vpop.f32.mrb[0].mxu0
        %2169 = vmatprep.mubr.f32.mxu0 0.0
        %2170 = vmatmul.mubr.f32.gmra.mrb[0].mxu0 %v2052
        %v2171 = vpop.f32.mrb[0].mxu0
        %v2172 = vadd.f32 0.0, %v2171
        %v2173 = vpop.f32.mrb[0].mxu0
        %2174 = vmatprep.mubr.f32.mxu0 0.0
        %2175 = vmatmul.mubr.f32.gmra.mrb[0].mxu0 %v2053
        %v2176 = vpop.f32.mrb[0].mxu0
        %v2177 = vadd.f32 0.0, %v2176
        %v2178 = vpop.f32.mrb[0].mxu0
        %2179 = vmatprep.mubr.f32.mxu0 0.0
        %2180 = vmatmul.mubr.f32.gmra.mrb[0].mxu0 %v2054
        %v2181 = vpop.f32.mrb[0].mxu0
        %v2182 = vadd.f32 0.0, %v2181
        %v2183 = vpop.f32.mrb[0].mxu0
        %2184 = vmatprep.mubr.f32.mxu0 0.0
        %2185 = vmatmul.mubr.f32.gmra.mrb[0].mxu0 %v2055
        %v2186 = vpop.f32.mrb[0].mxu0
        %v2187 = vadd.f32 0.0, %v2186
        %v2188 = vpop.f32.mrb[0].mxu0
        %2189 = vmatprep.mubr.f32.mxu0 0.0
        %2190 = vmatmul.mubr.f32.gmra.mrb[0].mxu0 %v2056
        %v2191 = vpop.f32.mrb[0].mxu0
        %v2192 = vadd.f32 0.0, %v2191
        %v2193 = vpop.f32.mrb[0].mxu0
        %2194 = vmatprep.mubr.f32.mxu0 0.0
        %2195 = vmatmul.mubr.f32.gmra.mrb[0].mxu0 %v2057
        %v2196 = vpop.f32.mrb[0].mxu0
        %v2197 = vadd.f32 0.0, %v2196
        %v2198 = vpop.f32.mrb[0].mxu0
        %2199 = vmatprep.mubr.f32.mxu0 0.0
        %2200 = vmatmul.mubr.f32.gmra.mrb[0].mxu0 %v2058
        %v2201 = vpop.f32.mrb[0].mxu0
        %v2202 = vadd.f32 0.0, %v2201
        %v2203 = vpop.f32.mrb[0].mxu0
        %2204 = vmatprep.mubr.f32.mxu0 0.0
        %2205 = vmatmul.mubr.f32.gmra.mrb[0].mxu0 %v2059
        %v2206 = vpop.f32.mrb[0].mxu0
        %v2207 = vadd.f32 0.0, %v2206
        %v2208 = vpop.f32.mrb[0].mxu0
        %2209 = vmatprep.mubr.f32.mxu0 0.0
        %2210 = vmatmul.mubr.f32.gmra.mrb[0].mxu0 %v2060
        %v2211 = vpop.f32.mrb[0].mxu0
        %v2212 = vadd.f32 0.0, %v2211
        %v2213 = vpop.f32.mrb[0].mxu0
        %2214 = vmatprep.mubr.f32.mxu0 0.0
        %2215 = vmatmul.mubr.f32.gmra.mrb[0].mxu0 %v2061
        %v2216 = vpop.f32.mrb[0].mxu0
        %v2217 = vadd.f32 0.0, %v2216
        %v2218 = vpop.f32.mrb[0].mxu0
        %2219 = vmatprep.mubr.f32.mxu0 0.0
        %2220 = vmatmul.mubr.f32.gmra.mrb[0].mxu0 %v2062
        %v2221 = vpop.f32.mrb[0].mxu0
        %v2222 = vadd.f32 0.0, %v2221
        %v2223 = vpop.f32.mrb[0].mxu0
        %2224 = vmatprep.mubr.f32.mxu0 0.0
        %2225 = vmatmul.mubr.f32.gmra.mrb[0].mxu0 %v2063
        %v2226 = vpop.f32.mrb[0].mxu0
        %v2227 = vadd.f32 0.0, %v2226
        %v2228 = vpop.f32.mrb[0].mxu0
        %2229 = vmatprep.mubr.f32.mxu0 0.0
        %2230 = vmatmul.mubr.f32.gmra.mrb[0].mxu0 %v2064
        %v2231 = vpop.f32.mrb[0].mxu0
        %v2232 = vadd.f32 0.0, %v2231
        %v2233 = vpop.f32.mrb[0].mxu0
        %2234 = vmatprep.mubr.f32.mxu0 0.0
        %2235 = vmatmul.mubr.f32.gmra.mrb[0].mxu0 %v2065
        %v2236 = vpop.f32.mrb[0].mxu0
        %v2237 = vadd.f32 0.0, %v2236
        %v2238 = vpop.f32.mrb[0].mxu0
        %2239 = vmatprep.mubr.f32.mxu0 0.0
        %2240 = vmatmul.mubr.f32.gmra.mrb[0].mxu0 %v2066
        %v2241 = vpop.f32.mrb[0].mxu0
        %v2242 = vadd.f32 0.0, %v2241
        %v2243 = vpop.f32.mrb[0].mxu0
        %2244 = vmatprep.mubr.f32.mxu0 0.0
        %2245 = vmatmul.mubr.f32.gmra.mrb[0].mxu0 %v2067
        %v2246 = vpop.f32.mrb[0].mxu0
        %v2247 = vadd.f32 0.0, %v2246
        %v2248 = vpop.f32.mrb[0].mxu0
        %2249 = vmatprep.mubr.f32.mxu0 0.0
        %2250 = vmatmul.mubr.f32.gmra.mrb[0].mxu0 %v2068
        %v2251 = vpop.f32.mrb[0].mxu0
        %v2252 = vadd.f32 0.0, %v2251
        %v2253 = vpop.f32.mrb[0].mxu0
        %2254 = vmatprep.mubr.f32.mxu0 0.0
        %2255 = vmatmul.mubr.f32.gmra.mrb[0].mxu0 %v2069
        %v2256 = vpop.f32.mrb[0].mxu0
        %v2257 = vadd.f32 0.0, %v2256
        %v2258 = vpop.f32.mrb[0].mxu0
        %2259 = vmatprep.mubr.f32.mxu0 0.0
        %2260 = vmatmul.mubr.f32.gmra.mrb[0].mxu0 %v2070
        %v2261 = vpop.f32.mrb[0].mxu0
        %v2262 = vadd.f32 0.0, %v2261
        %v2263 = vpop.f32.mrb[0].mxu0
        %2264 = vmatprep.mubr.f32.mxu0 0.0
        %2265 = vmatmul.mubr.f32.gmra.mrb[0].mxu0 %v2071
        %v2266 = vpop.f32.mrb[0].mxu0
        %v2267 = vadd.f32 0.0, %v2266
        %v2268 = vpop.f32.mrb[0].mxu0
        %2269 = vmatprep.mubr.f32.mxu0 0.0
        %2270 = vmatmul.mubr.f32.gmra.mrb[0].mxu0 %v2072
        %v2271 = vpop.f32.mrb[0].mxu0
        %v2272 = vadd.f32 0.0, %v2271
        %v2273 = vpop.f32.mrb[0].mxu0
        %2274 = vmatprep.mubr.f32.mxu0 0.0
        %2275 = vmatmul.mubr.f32.gmra.mrb[0].mxu0 %v2073
        %v2276 = vpop.f32.mrb[0].mxu0
        %v2277 = vadd.f32 0.0, %v2276
        %v2278 = vpop.f32.mrb[0].mxu0
        %2279 = vmatprep.mubr.f32.mxu0 0.0
        %2280 = vmatmul.mubr.f32.gmra.mrb[0].mxu0 %v2074
        %v2281 = vpop.f32.mrb[0].mxu0
        %v2282 = vadd.f32 0.0, %v2281
        %v2283 = vpop.f32.mrb[0].mxu0
        %2284 = vmatprep.mubr.f32.mxu0 0.0
        %2285 = vmatmul.mubr.f32.gmra.mrb[0].mxu0 %v2075
        %v2286 = vpop.f32.mrb[0].mxu0
        %v2287 = vadd.f32 0.0, %v2286
        %v2288 = vpop.f32.mrb[0].mxu0
        %2289 = vmatprep.mubr.f32.mxu0 0.0
        %2290 = vmatmul.mubr.f32.gmra.mrb[0].mxu0 %v2076
        %v2291 = vpop.f32.mrb[0].mxu0
        %v2292 = vadd.f32 0.0, %v2291
        %v2293 = vpop.f32.mrb[0].mxu0
        %2294 = vmatprep.mubr.f32.mxu0 0.0
        %2295 = vmatmul.mubr.f32.gmra.mrb[0].mxu0 %v2077
        %v2296 = vpop.f32.mrb[0].mxu0
        %v2297 = vadd.f32 0.0, %v2296
        %v2298 = vpop.f32.mrb[0].mxu0
        %2299 = vmatprep.mubr.f32.mxu0 0.0
        %2300 = vmatmul.mubr.f32.gmra.mrb[0].mxu0 %v2078
        %v2301 = vpop.f32.mrb[0].mxu0
        %v2302 = vadd.f32 0.0, %v2301
        %v2303 = vpop.f32.mrb[0].mxu0
        %2304 = vmatprep.mubr.f32.mxu0 0.0
        %2305 = vmatmul.mubr.f32.gmra.mrb[0].mxu0 %v2079
        %v2306 = vpop.f32.mrb[0].mxu0
        %v2307 = vadd.f32 0.0, %v2306
        %v2308 = vpop.f32.mrb[0].mxu0
        %2309 = vmatprep.mubr.f32.mxu0 0.0
        %2310 = vmatmul.mubr.f32.gmra.mrb[0].mxu0 %v2080
        %v2311 = vpop.f32.mrb[0].mxu0
        %v2312 = vadd.f32 0.0, %v2311
        %v2313 = vpop.f32.mrb[0].mxu0
        %2314 = vmatprep.mubr.f32.mxu0 0.0
        %2315 = vmatmul.mubr.f32.gmra.mrb[0].mxu0 %v2081
        %v2316 = vpop.f32.mrb[0].mxu0
        %v2317 = vadd.f32 0.0, %v2316
        %v2318 = vpop.f32.mrb[0].mxu0
        %2319 = vmatprep.mubr.f32.mxu0 0.0
        %2320 = vmatmul.mubr.f32.gmra.mrb[0].mxu0 %v2082
        %v2321 = vpop.f32.mrb[0].mxu0
        %v2322 = vadd.f32 0.0, %v2321
        %v2323 = vpop.f32.mrb[0].mxu0
        %2324 = vdwg.mxu0
        %v2325 = vadd.f32 %v2018, %v2167
        %v2326 = vadd.f32 %v2019, %v2172
        %v2327 = vadd.f32 %v2020, %v2177
        %v2328 = vadd.f32 %v2021, %v2182
        %v2329 = vadd.f32 %v2022, %v2187
        %v2330 = vadd.f32 %v2023, %v2192
        %v2331 = vadd.f32 %v2024, %v2197
        %v2332 = vadd.f32 %v2025, %v2202
        %v2333 = vadd.f32 %v2026, %v2207
        %v2334 = vadd.f32 %v2027, %v2212
        %v2335 = vadd.f32 %v2028, %v2217
        %v2336 = vadd.f32 %v2029, %v2222
        %v2337 = vadd.f32 %v2030, %v2227
        %v2338 = vadd.f32 %v2031, %v2232
        %v2339 = vadd.f32 %v2032, %v2237
        %v2340 = vadd.f32 %v2033, %v2242
        %v2341 = vadd.f32 %v2034, %v2247
        %v2342 = vadd.f32 %v2035, %v2252
        %v2343 = vadd.f32 %v2036, %v2257
        %v2344 = vadd.f32 %v2037, %v2262
        %v2345 = vadd.f32 %v2038, %v2267
        %v2346 = vadd.f32 %v2039, %v2272
        %v2347 = vadd.f32 %v2040, %v2277
        %v2348 = vadd.f32 %v2041, %v2282
        %v2349 = vadd.f32 %v2042, %v2287
        %v2350 = vadd.f32 %v2043, %v2292
        %v2351 = vadd.f32 %v2044, %v2297
        %v2352 = vadd.f32 %v2045, %v2302
        %v2353 = vadd.f32 %v2046, %v2307
        %v2354 = vadd.f32 %v2047, %v2312
        %v2355 = vadd.f32 %v2048, %v2317
        %v2356 = vadd.f32 %v2049, %v2322
        %v2357 = vld [vmem:[%s2050 + $0x1] sm:$0xff]
        %v2358 = vld [vmem:[%s2050 + $0x9] sm:$0xff]
        %v2359 = vld [vmem:[%s2050 + $0x19] sm:$0xff]
        %v2360 = vld [vmem:[%s2050 + $0x21] sm:$0xff]
        %v2361 = vld [vmem:[%s2050 + $0x31] sm:$0xff]
        %v2362 = vld [vmem:[%s2050 + $0x39] sm:$0xff]
        %v2363 = vld [vmem:[%s2050 + $0x49] sm:$0xff]
        %v2364 = vld [vmem:[%s2050 + $0x51] sm:$0xff]
        %v2365 = vld [vmem:[%s2050 + $0x61] sm:$0xff]
        %v2366 = vld [vmem:[%s2050 + $0x69] sm:$0xff]
        %v2367 = vld [vmem:[%s2050 + $0x79] sm:$0xff]
        %v2368 = vld [vmem:[%s2050 + $0x81] sm:$0xff]
        %v2369 = vld [vmem:[%s2050 + $0x91] sm:$0xff]
        %v2370 = vld [vmem:[%s2050 + $0x99] sm:$0xff]
        %v2371 = vld [vmem:[%s2050 + $0xa9] sm:$0xff]
        %v2372 = vld [vmem:[%s2050 + $0xb1] sm:$0xff]
        %v2373 = vld [vmem:[%s2050 + $0xc1] sm:$0xff]
        %v2374 = vld [vmem:[%s2050 + $0xc9] sm:$0xff]
        %v2375 = vld [vmem:[%s2050 + $0xd9] sm:$0xff]
        %v2376 = vld [vmem:[%s2050 + $0xe1] sm:$0xff]
        %v2377 = vld [vmem:[%s2050 + $0xf1] sm:$0xff]
        %v2378 = vld [vmem:[%s2050 + $0xf9] sm:$0xff]
        %v2379 = vld [vmem:[%s2050 + $0x109] sm:$0xff]
        %v2380 = vld [vmem:[%s2050 + $0x111] sm:$0xff]
        %v2381 = vld [vmem:[%s2050 + $0x121] sm:$0xff]
        %v2382 = vld [vmem:[%s2050 + $0x129] sm:$0xff]
        %v2383 = vld [vmem:[%s2050 + $0x139] sm:$0xff]
        %v2384 = vld [vmem:[%s2050 + $0x141] sm:$0xff]
        %v2385 = vld [vmem:[%s2050 + $0x151] sm:$0xff]
        %v2386 = vld [vmem:[%s2050 + $0x159] sm:$0xff]
        %v2387 = vld [vmem:[%s2050 + $0x169] sm:$0xff]
        %v2388 = vld [vmem:[%s2050 + $0x171] sm:$0xff]
        %s2389 = scalar_lea.vmem %s1, 896
        %v2390 = vld [vmem:[%s2389] sm:$0xff]
        %v2391 = vld [vmem:[%s2389 + $0x8] sm:$0xff]
        %v2392 = vld [vmem:[%s2389 + $0x10] sm:$0xff]
        %v2393 = vld [vmem:[%s2389 + $0x18] sm:$0xff]
        %v2394 = vld [vmem:[%s2389 + $0x20] sm:$0xff]
        %v2395 = vld [vmem:[%s2389 + $0x28] sm:$0xff]
        %v2396 = vld [vmem:[%s2389 + $0x30] sm:$0xff]
        %v2397 = vld [vmem:[%s2389 + $0x38] sm:$0xff]
        %v2398 = vld [vmem:[%s2389 + $0x40] sm:$0xff]
        %v2399 = vld [vmem:[%s2389 + $0x48] sm:$0xff]
        %v2400 = vld [vmem:[%s2389 + $0x50] sm:$0xff]
        %v2401 = vld [vmem:[%s2389 + $0x58] sm:$0xff]
        %v2402 = vld [vmem:[%s2389 + $0x60] sm:$0xff]
        %v2403 = vld [vmem:[%s2389 + $0x68] sm:$0xff]
        %v2404 = vld [vmem:[%s2389 + $0x70] sm:$0xff]
        %v2405 = vld [vmem:[%s2389 + $0x78] sm:$0xff]
        %2406 = vmatprep.subr.mxu0 0.0
        %2407 = vmatpush1.msra.mxu0 %v2390
        %2408 = vmatprep.subr.mxu0 0.0
        %2409 = vmatpush1.msra.mxu0 %v2391
        %2410 = vmatprep.subr.mxu0 0.0
        %2411 = vmatpush1.msra.mxu0 %v2392
        %2412 = vmatprep.subr.mxu0 0.0
        %2413 = vmatpush1.msra.mxu0 %v2393
        %2414 = vmatprep.subr.mxu0 0.0
        %2415 = vmatpush1.msra.mxu0 %v2394
        %2416 = vmatprep.subr.mxu0 0.0
        %2417 = vmatpush1.msra.mxu0 %v2395
        %2418 = vmatprep.subr.mxu0 0.0
        %2419 = vmatpush1.msra.mxu0 %v2396
        %2420 = vmatprep.subr.mxu0 0.0
        %2421 = vmatpush1.msra.mxu0 %v2397
        %2422 = vmatprep.subr.mxu0 0.0
        %2423 = vmatpush1.msra.mxu0 %v2398
        %2424 = vmatprep.subr.mxu0 0.0
        %2425 = vmatpush1.msra.mxu0 %v2399
        %2426 = vmatprep.subr.mxu0 0.0
        %2427 = vmatpush1.msra.mxu0 %v2400
        %2428 = vmatprep.subr.mxu0 0.0
        %2429 = vmatpush1.msra.mxu0 %v2401
        %2430 = vmatprep.subr.mxu0 0.0
        %2431 = vmatpush1.msra.mxu0 %v2402
        %2432 = vmatprep.subr.mxu0 0.0
        %2433 = vmatpush1.msra.mxu0 %v2403
        %2434 = vmatprep.subr.mxu0 0.0
        %2435 = vmatpush1.msra.mxu0 %v2404
        %2436 = vmatprep.subr.mxu0 0.0
        %2437 = vmatpush1.msra.mxu0 %v2405
        %2438 = vmatprep.subr.mxu0 0.0
        %2439 = vmatpush1.msra.mxu0 0.0
        %2440 = vmatprep.subr.mxu0 0.0
        %2441 = vmatpush1.msra.mxu0 0.0
        %2442 = vmatprep.subr.mxu0 0.0
        %2443 = vmatpush1.msra.mxu0 0.0
        %2444 = vmatprep.subr.mxu0 0.0
        %2445 = vmatpush1.msra.mxu0 0.0
        %2446 = vmatprep.subr.mxu0 0.0
        %2447 = vmatpush1.msra.mxu0 0.0
        %2448 = vmatprep.subr.mxu0 0.0
        %2449 = vmatpush1.msra.mxu0 0.0
        %2450 = vmatprep.subr.mxu0 0.0
        %2451 = vmatpush1.msra.mxu0 0.0
        %2452 = vmatprep.subr.mxu0 0.0
        %2453 = vmatpush1.msra.mxu0 0.0
        %2454 = vmatprep.subr.mxu0 0.0
        %2455 = vmatpush1.msra.mxu0 0.0
        %2456 = vmatprep.subr.mxu0 0.0
        %2457 = vmatpush1.msra.mxu0 0.0
        %2458 = vmatprep.subr.mxu0 0.0
        %2459 = vmatpush1.msra.mxu0 0.0
        %2460 = vmatprep.subr.mxu0 0.0
        %2461 = vmatpush1.msra.mxu0 0.0
        %2462 = vmatprep.subr.mxu0 0.0
        %2463 = vmatpush1.msra.mxu0 0.0
        %2464 = vmatprep.subr.mxu0 0.0
        %2465 = vmatpush1.msra.mxu0 0.0
        %2466 = vmatprep.subr.mxu0 0.0
        %2467 = vmatpush1.msra.mxu0 0.0
        %2468 = vmatprep.subr.mxu0 0.0
        %2469 = vmatpush1.msra.mxu0 0.0
        %2470 = vmatprep.mubr.f32.mxu0 0.0
        %2471 = vmatmul.mubr.f32.gmra.mrb[0].mxu0 %v2357
        %v2472 = vpop.f32.mrb[0].mxu0
        %v2473 = vadd.f32 0.0, %v2472
        %v2474 = vpop.f32.mrb[0].mxu0
        %2475 = vmatprep.mubr.f32.mxu0 0.0
        %2476 = vmatmul.mubr.f32.gmra.mrb[0].mxu0 %v2358
        %v2477 = vpop.f32.mrb[0].mxu0
        %v2478 = vadd.f32 0.0, %v2477
        %v2479 = vpop.f32.mrb[0].mxu0
        %2480 = vmatprep.mubr.f32.mxu0 0.0
        %2481 = vmatmul.mubr.f32.gmra.mrb[0].mxu0 %v2359
        %v2482 = vpop.f32.mrb[0].mxu0
        %v2483 = vadd.f32 0.0, %v2482
        %v2484 = vpop.f32.mrb[0].mxu0
        %2485 = vmatprep.mubr.f32.mxu0 0.0
        %2486 = vmatmul.mubr.f32.gmra.mrb[0].mxu0 %v2360
        %v2487 = vpop.f32.mrb[0].mxu0
        %v2488 = vadd.f32 0.0, %v2487
        %v2489 = vpop.f32.mrb[0].mxu0
        %2490 = vmatprep.mubr.f32.mxu0 0.0
        %2491 = vmatmul.mubr.f32.gmra.mrb[0].mxu0 %v2361
        %v2492 = vpop.f32.mrb[0].mxu0
        %v2493 = vadd.f32 0.0, %v2492
        %v2494 = vpop.f32.mrb[0].mxu0
        %2495 = vmatprep.mubr.f32.mxu0 0.0
        %2496 = vmatmul.mubr.f32.gmra.mrb[0].mxu0 %v2362
        %v2497 = vpop.f32.mrb[0].mxu0
        %v2498 = vadd.f32 0.0, %v2497
        %v2499 = vpop.f32.mrb[0].mxu0
        %2500 = vmatprep.mubr.f32.mxu0 0.0
        %2501 = vmatmul.mubr.f32.gmra.mrb[0].mxu0 %v2363
        %v2502 = vpop.f32.mrb[0].mxu0
        %v2503 = vadd.f32 0.0, %v2502
        %v2504 = vpop.f32.mrb[0].mxu0
        %2505 = vmatprep.mubr.f32.mxu0 0.0
        %2506 = vmatmul.mubr.f32.gmra.mrb[0].mxu0 %v2364
        %v2507 = vpop.f32.mrb[0].mxu0
        %v2508 = vadd.f32 0.0, %v2507
        %v2509 = vpop.f32.mrb[0].mxu0
        %2510 = vmatprep.mubr.f32.mxu0 0.0
        %2511 = vmatmul.mubr.f32.gmra.mrb[0].mxu0 %v2365
        %v2512 = vpop.f32.mrb[0].mxu0
        %v2513 = vadd.f32 0.0, %v2512
        %v2514 = vpop.f32.mrb[0].mxu0
        %2515 = vmatprep.mubr.f32.mxu0 0.0
        %2516 = vmatmul.mubr.f32.gmra.mrb[0].mxu0 %v2366
        %v2517 = vpop.f32.mrb[0].mxu0
        %v2518 = vadd.f32 0.0, %v2517
        %v2519 = vpop.f32.mrb[0].mxu0
        %2520 = vmatprep.mubr.f32.mxu0 0.0
        %2521 = vmatmul.mubr.f32.gmra.mrb[0].mxu0 %v2367
        %v2522 = vpop.f32.mrb[0].mxu0
        %v2523 = vadd.f32 0.0, %v2522
        %v2524 = vpop.f32.mrb[0].mxu0
        %2525 = vmatprep.mubr.f32.mxu0 0.0
        %2526 = vmatmul.mubr.f32.gmra.mrb[0].mxu0 %v2368
        %v2527 = vpop.f32.mrb[0].mxu0
        %v2528 = vadd.f32 0.0, %v2527
        %v2529 = vpop.f32.mrb[0].mxu0
        %2530 = vmatprep.mubr.f32.mxu0 0.0
        %2531 = vmatmul.mubr.f32.gmra.mrb[0].mxu0 %v2369
        %v2532 = vpop.f32.mrb[0].mxu0
        %v2533 = vadd.f32 0.0, %v2532
        %v2534 = vpop.f32.mrb[0].mxu0
        %2535 = vmatprep.mubr.f32.mxu0 0.0
        %2536 = vmatmul.mubr.f32.gmra.mrb[0].mxu0 %v2370
        %v2537 = vpop.f32.mrb[0].mxu0
        %v2538 = vadd.f32 0.0, %v2537
        %v2539 = vpop.f32.mrb[0].mxu0
        %2540 = vmatprep.mubr.f32.mxu0 0.0
        %2541 = vmatmul.mubr.f32.gmra.mrb[0].mxu0 %v2371
        %v2542 = vpop.f32.mrb[0].mxu0
        %v2543 = vadd.f32 0.0, %v2542
        %v2544 = vpop.f32.mrb[0].mxu0
        %2545 = vmatprep.mubr.f32.mxu0 0.0
        %2546 = vmatmul.mubr.f32.gmra.mrb[0].mxu0 %v2372
        %v2547 = vpop.f32.mrb[0].mxu0
        %v2548 = vadd.f32 0.0, %v2547
        %v2549 = vpop.f32.mrb[0].mxu0
        %2550 = vmatprep.mubr.f32.mxu0 0.0
        %2551 = vmatmul.mubr.f32.gmra.mrb[0].mxu0 %v2373
        %v2552 = vpop.f32.mrb[0].mxu0
        %v2553 = vadd.f32 0.0, %v2552
        %v2554 = vpop.f32.mrb[0].mxu0
        %2555 = vmatprep.mubr.f32.mxu0 0.0
        %2556 = vmatmul.mubr.f32.gmra.mrb[0].mxu0 %v2374
        %v2557 = vpop.f32.mrb[0].mxu0
        %v2558 = vadd.f32 0.0, %v2557
        %v2559 = vpop.f32.mrb[0].mxu0
        %2560 = vmatprep.mubr.f32.mxu0 0.0
        %2561 = vmatmul.mubr.f32.gmra.mrb[0].mxu0 %v2375
        %v2562 = vpop.f32.mrb[0].mxu0
        %v2563 = vadd.f32 0.0, %v2562
        %v2564 = vpop.f32.mrb[0].mxu0
        %2565 = vmatprep.mubr.f32.mxu0 0.0
        %2566 = vmatmul.mubr.f32.gmra.mrb[0].mxu0 %v2376
        %v2567 = vpop.f32.mrb[0].mxu0
        %v2568 = vadd.f32 0.0, %v2567
        %v2569 = vpop.f32.mrb[0].mxu0
        %2570 = vmatprep.mubr.f32.mxu0 0.0
        %2571 = vmatmul.mubr.f32.gmra.mrb[0].mxu0 %v2377
        %v2572 = vpop.f32.mrb[0].mxu0
        %v2573 = vadd.f32 0.0, %v2572
        %v2574 = vpop.f32.mrb[0].mxu0
        %2575 = vmatprep.mubr.f32.mxu0 0.0
        %2576 = vmatmul.mubr.f32.gmra.mrb[0].mxu0 %v2378
        %v2577 = vpop.f32.mrb[0].mxu0
        %v2578 = vadd.f32 0.0, %v2577
        %v2579 = vpop.f32.mrb[0].mxu0
        %2580 = vmatprep.mubr.f32.mxu0 0.0
        %2581 = vmatmul.mubr.f32.gmra.mrb[0].mxu0 %v2379
        %v2582 = vpop.f32.mrb[0].mxu0
        %v2583 = vadd.f32 0.0, %v2582
        %v2584 = vpop.f32.mrb[0].mxu0
        %2585 = vmatprep.mubr.f32.mxu0 0.0
        %2586 = vmatmul.mubr.f32.gmra.mrb[0].mxu0 %v2380
        %v2587 = vpop.f32.mrb[0].mxu0
        %v2588 = vadd.f32 0.0, %v2587
        %v2589 = vpop.f32.mrb[0].mxu0
        %2590 = vmatprep.mubr.f32.mxu0 0.0
        %2591 = vmatmul.mubr.f32.gmra.mrb[0].mxu0 %v2381
        %v2592 = vpop.f32.mrb[0].mxu0
        %v2593 = vadd.f32 0.0, %v2592
        %v2594 = vpop.f32.mrb[0].mxu0
        %2595 = vmatprep.mubr.f32.mxu0 0.0
        %2596 = vmatmul.mubr.f32.gmra.mrb[0].mxu0 %v2382
        %v2597 = vpop.f32.mrb[0].mxu0
        %v2598 = vadd.f32 0.0, %v2597
        %v2599 = vpop.f32.mrb[0].mxu0
        %2600 = vmatprep.mubr.f32.mxu0 0.0
        %2601 = vmatmul.mubr.f32.gmra.mrb[0].mxu0 %v2383
        %v2602 = vpop.f32.mrb[0].mxu0
        %v2603 = vadd.f32 0.0, %v2602
        %v2604 = vpop.f32.mrb[0].mxu0
        %2605 = vmatprep.mubr.f32.mxu0 0.0
        %2606 = vmatmul.mubr.f32.gmra.mrb[0].mxu0 %v2384
        %v2607 = vpop.f32.mrb[0].mxu0
        %v2608 = vadd.f32 0.0, %v2607
        %v2609 = vpop.f32.mrb[0].mxu0
        %2610 = vmatprep.mubr.f32.mxu0 0.0
        %2611 = vmatmul.mubr.f32.gmra.mrb[0].mxu0 %v2385
        %v2612 = vpop.f32.mrb[0].mxu0
        %v2613 = vadd.f32 0.0, %v2612
        %v2614 = vpop.f32.mrb[0].mxu0
        %2615 = vmatprep.mubr.f32.mxu0 0.0
        %2616 = vmatmul.mubr.f32.gmra.mrb[0].mxu0 %v2386
        %v2617 = vpop.f32.mrb[0].mxu0
        %v2618 = vadd.f32 0.0, %v2617
        %v2619 = vpop.f32.mrb[0].mxu0
        %2620 = vmatprep.mubr.f32.mxu0 0.0
        %2621 = vmatmul.mubr.f32.gmra.mrb[0].mxu0 %v2387
        %v2622 = vpop.f32.mrb[0].mxu0
        %v2623 = vadd.f32 0.0, %v2622
        %v2624 = vpop.f32.mrb[0].mxu0
        %2625 = vmatprep.mubr.f32.mxu0 0.0
        %2626 = vmatmul.mubr.f32.gmra.mrb[0].mxu0 %v2388
        %v2627 = vpop.f32.mrb[0].mxu0
        %v2628 = vadd.f32 0.0, %v2627
        %v2629 = vpop.f32.mrb[0].mxu0
        %2630 = vdwg.mxu0
        %v2631 = vadd.f32 %v2325, %v2473
        %v2632 = vadd.f32 %v2326, %v2478
        %v2633 = vadd.f32 %v2327, %v2483
        %v2634 = vadd.f32 %v2328, %v2488
        %v2635 = vadd.f32 %v2329, %v2493
        %v2636 = vadd.f32 %v2330, %v2498
        %v2637 = vadd.f32 %v2331, %v2503
        %v2638 = vadd.f32 %v2332, %v2508
        %v2639 = vadd.f32 %v2333, %v2513
        %v2640 = vadd.f32 %v2334, %v2518
        %v2641 = vadd.f32 %v2335, %v2523
        %v2642 = vadd.f32 %v2336, %v2528
        %v2643 = vadd.f32 %v2337, %v2533
        %v2644 = vadd.f32 %v2338, %v2538
        %v2645 = vadd.f32 %v2339, %v2543
        %v2646 = vadd.f32 %v2340, %v2548
        %v2647 = vadd.f32 %v2341, %v2553
        %v2648 = vadd.f32 %v2342, %v2558
        %v2649 = vadd.f32 %v2343, %v2563
        %v2650 = vadd.f32 %v2344, %v2568
        %v2651 = vadd.f32 %v2345, %v2573
        %v2652 = vadd.f32 %v2346, %v2578
        %v2653 = vadd.f32 %v2347, %v2583
        %v2654 = vadd.f32 %v2348, %v2588
        %v2655 = vadd.f32 %v2349, %v2593
        %v2656 = vadd.f32 %v2350, %v2598
        %v2657 = vadd.f32 %v2351, %v2603
        %v2658 = vadd.f32 %v2352, %v2608
        %v2659 = vadd.f32 %v2353, %v2613
        %v2660 = vadd.f32 %v2354, %v2618
        %v2661 = vadd.f32 %v2355, %v2623
        %v2662 = vadd.f32 %v2356, %v2628
        %v2663 = vld [vmem:[%s2050 + $0x2] sm:$0xff]
        %v2664 = vld [vmem:[%s2050 + $0xa] sm:$0xff]
        %v2665 = vld [vmem:[%s2050 + $0x1a] sm:$0xff]
        %v2666 = vld [vmem:[%s2050 + $0x22] sm:$0xff]
        %v2667 = vld [vmem:[%s2050 + $0x32] sm:$0xff]
        %v2668 = vld [vmem:[%s2050 + $0x3a] sm:$0xff]
        %v2669 = vld [vmem:[%s2050 + $0x4a] sm:$0xff]
        %v2670 = vld [vmem:[%s2050 + $0x52] sm:$0xff]
        %v2671 = vld [vmem:[%s2050 + $0x62] sm:$0xff]
        %v2672 = vld [vmem:[%s2050 + $0x6a] sm:$0xff]
        %v2673 = vld [vmem:[%s2050 + $0x7a] sm:$0xff]
        %v2674 = vld [vmem:[%s2050 + $0x82] sm:$0xff]
        %v2675 = vld [vmem:[%s2050 + $0x92] sm:$0xff]
        %v2676 = vld [vmem:[%s2050 + $0x9a] sm:$0xff]
        %v2677 = vld [vmem:[%s2050 + $0xaa] sm:$0xff]
        %v2678 = vld [vmem:[%s2050 + $0xb2] sm:$0xff]
        %v2679 = vld [vmem:[%s2050 + $0xc2] sm:$0xff]
        %v2680 = vld [vmem:[%s2050 + $0xca] sm:$0xff]
        %v2681 = vld [vmem:[%s2050 + $0xda] sm:$0xff]
        %v2682 = vld [vmem:[%s2050 + $0xe2] sm:$0xff]
        %v2683 = vld [vmem:[%s2050 + $0xf2] sm:$0xff]
        %v2684 = vld [vmem:[%s2050 + $0xfa] sm:$0xff]
        %v2685 = vld [vmem:[%s2050 + $0x10a] sm:$0xff]
        %v2686 = vld [vmem:[%s2050 + $0x112] sm:$0xff]
        %v2687 = vld [vmem:[%s2050 + $0x122] sm:$0xff]
        %v2688 = vld [vmem:[%s2050 + $0x12a] sm:$0xff]
        %v2689 = vld [vmem:[%s2050 + $0x13a] sm:$0xff]
        %v2690 = vld [vmem:[%s2050 + $0x142] sm:$0xff]
        %v2691 = vld [vmem:[%s2050 + $0x152] sm:$0xff]
        %v2692 = vld [vmem:[%s2050 + $0x15a] sm:$0xff]
        %v2693 = vld [vmem:[%s2050 + $0x16a] sm:$0xff]
        %v2694 = vld [vmem:[%s2050 + $0x172] sm:$0xff]
        %s2695 = scalar_lea.vmem %s1, 1024
        %v2696 = vld [vmem:[%s2695] sm:$0xff]
        %v2697 = vld [vmem:[%s2695 + $0x8] sm:$0xff]
        %v2698 = vld [vmem:[%s2695 + $0x10] sm:$0xff]
        %v2699 = vld [vmem:[%s2695 + $0x18] sm:$0xff]
        %v2700 = vld [vmem:[%s2695 + $0x20] sm:$0xff]
        %v2701 = vld [vmem:[%s2695 + $0x28] sm:$0xff]
        %v2702 = vld [vmem:[%s2695 + $0x30] sm:$0xff]
        %v2703 = vld [vmem:[%s2695 + $0x38] sm:$0xff]
        %v2704 = vld [vmem:[%s2695 + $0x40] sm:$0xff]
        %v2705 = vld [vmem:[%s2695 + $0x48] sm:$0xff]
        %v2706 = vld [vmem:[%s2695 + $0x50] sm:$0xff]
        %v2707 = vld [vmem:[%s2695 + $0x58] sm:$0xff]
        %v2708 = vld [vmem:[%s2695 + $0x60] sm:$0xff]
        %v2709 = vld [vmem:[%s2695 + $0x68] sm:$0xff]
        %v2710 = vld [vmem:[%s2695 + $0x70] sm:$0xff]
        %v2711 = vld [vmem:[%s2695 + $0x78] sm:$0xff]
        %2712 = vmatprep.subr.mxu0 0.0
        %2713 = vmatpush1.msra.mxu0 %v2696
        %2714 = vmatprep.subr.mxu0 0.0
        %2715 = vmatpush1.msra.mxu0 %v2697
        %2716 = vmatprep.subr.mxu0 0.0
        %2717 = vmatpush1.msra.mxu0 %v2698
        %2718 = vmatprep.subr.mxu0 0.0
        %2719 = vmatpush1.msra.mxu0 %v2699
        %2720 = vmatprep.subr.mxu0 0.0
        %2721 = vmatpush1.msra.mxu0 %v2700
        %2722 = vmatprep.subr.mxu0 0.0
        %2723 = vmatpush1.msra.mxu0 %v2701
        %2724 = vmatprep.subr.mxu0 0.0
        %2725 = vmatpush1.msra.mxu0 %v2702
        %2726 = vmatprep.subr.mxu0 0.0
        %2727 = vmatpush1.msra.mxu0 %v2703
        %2728 = vmatprep.subr.mxu0 0.0
        %2729 = vmatpush1.msra.mxu0 %v2704
        %2730 = vmatprep.subr.mxu0 0.0
        %2731 = vmatpush1.msra.mxu0 %v2705
        %2732 = vmatprep.subr.mxu0 0.0
        %2733 = vmatpush1.msra.mxu0 %v2706
        %2734 = vmatprep.subr.mxu0 0.0
        %2735 = vmatpush1.msra.mxu0 %v2707
        %2736 = vmatprep.subr.mxu0 0.0
        %2737 = vmatpush1.msra.mxu0 %v2708
        %2738 = vmatprep.subr.mxu0 0.0
        %2739 = vmatpush1.msra.mxu0 %v2709
        %2740 = vmatprep.subr.mxu0 0.0
        %2741 = vmatpush1.msra.mxu0 %v2710
        %2742 = vmatprep.subr.mxu0 0.0
        %2743 = vmatpush1.msra.mxu0 %v2711
        %2744 = vmatprep.subr.mxu0 0.0
        %2745 = vmatpush1.msra.mxu0 0.0
        %2746 = vmatprep.subr.mxu0 0.0
        %2747 = vmatpush1.msra.mxu0 0.0
        %2748 = vmatprep.subr.mxu0 0.0
        %2749 = vmatpush1.msra.mxu0 0.0
        %2750 = vmatprep.subr.mxu0 0.0
        %2751 = vmatpush1.msra.mxu0 0.0
        %2752 = vmatprep.subr.mxu0 0.0
        %2753 = vmatpush1.msra.mxu0 0.0
        %2754 = vmatprep.subr.mxu0 0.0
        %2755 = vmatpush1.msra.mxu0 0.0
        %2756 = vmatprep.subr.mxu0 0.0
        %2757 = vmatpush1.msra.mxu0 0.0
        %2758 = vmatprep.subr.mxu0 0.0
        %2759 = vmatpush1.msra.mxu0 0.0
        %2760 = vmatprep.subr.mxu0 0.0
        %2761 = vmatpush1.msra.mxu0 0.0
        %2762 = vmatprep.subr.mxu0 0.0
        %2763 = vmatpush1.msra.mxu0 0.0
        %2764 = vmatprep.subr.mxu0 0.0
        %2765 = vmatpush1.msra.mxu0 0.0
        %2766 = vmatprep.subr.mxu0 0.0
        %2767 = vmatpush1.msra.mxu0 0.0
        %2768 = vmatprep.subr.mxu0 0.0
        %2769 = vmatpush1.msra.mxu0 0.0
        %2770 = vmatprep.subr.mxu0 0.0
        %2771 = vmatpush1.msra.mxu0 0.0
        %2772 = vmatprep.subr.mxu0 0.0
        %2773 = vmatpush1.msra.mxu0 0.0
        %2774 = vmatprep.subr.mxu0 0.0
        %2775 = vmatpush1.msra.mxu0 0.0
        %2776 = vmatprep.mubr.f32.mxu0 0.0
        %2777 = vmatmul.mubr.f32.gmra.mrb[0].mxu0 %v2663
        %v2778 = vpop.f32.mrb[0].mxu0
        %v2779 = vadd.f32 0.0, %v2778
        %v2780 = vpop.f32.mrb[0].mxu0
        %2781 = vmatprep.mubr.f32.mxu0 0.0
        %2782 = vmatmul.mubr.f32.gmra.mrb[0].mxu0 %v2664
        %v2783 = vpop.f32.mrb[0].mxu0
        %v2784 = vadd.f32 0.0, %v2783
        %v2785 = vpop.f32.mrb[0].mxu0
        %2786 = vmatprep.mubr.f32.mxu0 0.0
        %2787 = vmatmul.mubr.f32.gmra.mrb[0].mxu0 %v2665
        %v2788 = vpop.f32.mrb[0].mxu0
        %v2789 = vadd.f32 0.0, %v2788
        %v2790 = vpop.f32.mrb[0].mxu0
        %2791 = vmatprep.mubr.f32.mxu0 0.0
        %2792 = vmatmul.mubr.f32.gmra.mrb[0].mxu0 %v2666
        %v2793 = vpop.f32.mrb[0].mxu0
        %v2794 = vadd.f32 0.0, %v2793
        %v2795 = vpop.f32.mrb[0].mxu0
        %2796 = vmatprep.mubr.f32.mxu0 0.0
        %2797 = vmatmul.mubr.f32.gmra.mrb[0].mxu0 %v2667
        %v2798 = vpop.f32.mrb[0].mxu0
        %v2799 = vadd.f32 0.0, %v2798
        %v2800 = vpop.f32.mrb[0].mxu0
        %2801 = vmatprep.mubr.f32.mxu0 0.0
        %2802 = vmatmul.mubr.f32.gmra.mrb[0].mxu0 %v2668
        %v2803 = vpop.f32.mrb[0].mxu0
        %v2804 = vadd.f32 0.0, %v2803
        %v2805 = vpop.f32.mrb[0].mxu0
        %2806 = vmatprep.mubr.f32.mxu0 0.0
        %2807 = vmatmul.mubr.f32.gmra.mrb[0].mxu0 %v2669
        %v2808 = vpop.f32.mrb[0].mxu0
        %v2809 = vadd.f32 0.0, %v2808
        %v2810 = vpop.f32.mrb[0].mxu0
        %2811 = vmatprep.mubr.f32.mxu0 0.0
        %2812 = vmatmul.mubr.f32.gmra.mrb[0].mxu0 %v2670
        %v2813 = vpop.f32.mrb[0].mxu0
        %v2814 = vadd.f32 0.0, %v2813
        %v2815 = vpop.f32.mrb[0].mxu0
        %2816 = vmatprep.mubr.f32.mxu0 0.0
        %2817 = vmatmul.mubr.f32.gmra.mrb[0].mxu0 %v2671
        %v2818 = vpop.f32.mrb[0].mxu0
        %v2819 = vadd.f32 0.0, %v2818
        %v2820 = vpop.f32.mrb[0].mxu0
        %2821 = vmatprep.mubr.f32.mxu0 0.0
        %2822 = vmatmul.mubr.f32.gmra.mrb[0].mxu0 %v2672
        %v2823 = vpop.f32.mrb[0].mxu0
        %v2824 = vadd.f32 0.0, %v2823
        %v2825 = vpop.f32.mrb[0].mxu0
        %2826 = vmatprep.mubr.f32.mxu0 0.0
        %2827 = vmatmul.mubr.f32.gmra.mrb[0].mxu0 %v2673
        %v2828 = vpop.f32.mrb[0].mxu0
        %v2829 = vadd.f32 0.0, %v2828
        %v2830 = vpop.f32.mrb[0].mxu0
        %2831 = vmatprep.mubr.f32.mxu0 0.0
        %2832 = vmatmul.mubr.f32.gmra.mrb[0].mxu0 %v2674
        %v2833 = vpop.f32.mrb[0].mxu0
        %v2834 = vadd.f32 0.0, %v2833
        %v2835 = vpop.f32.mrb[0].mxu0
        %2836 = vmatprep.mubr.f32.mxu0 0.0
        %2837 = vmatmul.mubr.f32.gmra.mrb[0].mxu0 %v2675
        %v2838 = vpop.f32.mrb[0].mxu0
        %v2839 = vadd.f32 0.0, %v2838
        %v2840 = vpop.f32.mrb[0].mxu0
        %2841 = vmatprep.mubr.f32.mxu0 0.0
        %2842 = vmatmul.mubr.f32.gmra.mrb[0].mxu0 %v2676
        %v2843 = vpop.f32.mrb[0].mxu0
        %v2844 = vadd.f32 0.0, %v2843
        %v2845 = vpop.f32.mrb[0].mxu0
        %2846 = vmatprep.mubr.f32.mxu0 0.0
        %2847 = vmatmul.mubr.f32.gmra.mrb[0].mxu0 %v2677
        %v2848 = vpop.f32.mrb[0].mxu0
        %v2849 = vadd.f32 0.0, %v2848
        %v2850 = vpop.f32.mrb[0].mxu0
        %2851 = vmatprep.mubr.f32.mxu0 0.0
        %2852 = vmatmul.mubr.f32.gmra.mrb[0].mxu0 %v2678
        %v2853 = vpop.f32.mrb[0].mxu0
        %v2854 = vadd.f32 0.0, %v2853
        %v2855 = vpop.f32.mrb[0].mxu0
        %2856 = vmatprep.mubr.f32.mxu0 0.0
        %2857 = vmatmul.mubr.f32.gmra.mrb[0].mxu0 %v2679
        %v2858 = vpop.f32.mrb[0].mxu0
        %v2859 = vadd.f32 0.0, %v2858
        %v2860 = vpop.f32.mrb[0].mxu0
        %2861 = vmatprep.mubr.f32.mxu0 0.0
        %2862 = vmatmul.mubr.f32.gmra.mrb[0].mxu0 %v2680
        %v2863 = vpop.f32.mrb[0].mxu0
        %v2864 = vadd.f32 0.0, %v2863
        %v2865 = vpop.f32.mrb[0].mxu0
        %2866 = vmatprep.mubr.f32.mxu0 0.0
        %2867 = vmatmul.mubr.f32.gmra.mrb[0].mxu0 %v2681
        %v2868 = vpop.f32.mrb[0].mxu0
        %v2869 = vadd.f32 0.0, %v2868
        %v2870 = vpop.f32.mrb[0].mxu0
        %2871 = vmatprep.mubr.f32.mxu0 0.0
        %2872 = vmatmul.mubr.f32.gmra.mrb[0].mxu0 %v2682
        %v2873 = vpop.f32.mrb[0].mxu0
        %v2874 = vadd.f32 0.0, %v2873
        %v2875 = vpop.f32.mrb[0].mxu0
        %2876 = vmatprep.mubr.f32.mxu0 0.0
        %2877 = vmatmul.mubr.f32.gmra.mrb[0].mxu0 %v2683
        %v2878 = vpop.f32.mrb[0].mxu0
        %v2879 = vadd.f32 0.0, %v2878
        %v2880 = vpop.f32.mrb[0].mxu0
        %2881 = vmatprep.mubr.f32.mxu0 0.0
        %2882 = vmatmul.mubr.f32.gmra.mrb[0].mxu0 %v2684
        %v2883 = vpop.f32.mrb[0].mxu0
        %v2884 = vadd.f32 0.0, %v2883
        %v2885 = vpop.f32.mrb[0].mxu0
        %2886 = vmatprep.mubr.f32.mxu0 0.0
        %2887 = vmatmul.mubr.f32.gmra.mrb[0].mxu0 %v2685
        %v2888 = vpop.f32.mrb[0].mxu0
        %v2889 = vadd.f32 0.0, %v2888
        %v2890 = vpop.f32.mrb[0].mxu0
        %2891 = vmatprep.mubr.f32.mxu0 0.0
        %2892 = vmatmul.mubr.f32.gmra.mrb[0].mxu0 %v2686
        %v2893 = vpop.f32.mrb[0].mxu0
        %v2894 = vadd.f32 0.0, %v2893
        %v2895 = vpop.f32.mrb[0].mxu0
        %2896 = vmatprep.mubr.f32.mxu0 0.0
        %2897 = vmatmul.mubr.f32.gmra.mrb[0].mxu0 %v2687
        %v2898 = vpop.f32.mrb[0].mxu0
        %v2899 = vadd.f32 0.0, %v2898
        %v2900 = vpop.f32.mrb[0].mxu0
        %2901 = vmatprep.mubr.f32.mxu0 0.0
        %2902 = vmatmul.mubr.f32.gmra.mrb[0].mxu0 %v2688
        %v2903 = vpop.f32.mrb[0].mxu0
        %v2904 = vadd.f32 0.0, %v2903
        %v2905 = vpop.f32.mrb[0].mxu0
        %2906 = vmatprep.mubr.f32.mxu0 0.0
        %2907 = vmatmul.mubr.f32.gmra.mrb[0].mxu0 %v2689
        %v2908 = vpop.f32.mrb[0].mxu0
        %v2909 = vadd.f32 0.0, %v2908
        %v2910 = vpop.f32.mrb[0].mxu0
        %2911 = vmatprep.mubr.f32.mxu0 0.0
        %2912 = vmatmul.mubr.f32.gmra.mrb[0].mxu0 %v2690
        %v2913 = vpop.f32.mrb[0].mxu0
        %v2914 = vadd.f32 0.0, %v2913
        %v2915 = vpop.f32.mrb[0].mxu0
        %2916 = vmatprep.mubr.f32.mxu0 0.0
        %2917 = vmatmul.mubr.f32.gmra.mrb[0].mxu0 %v2691
        %v2918 = vpop.f32.mrb[0].mxu0
        %v2919 = vadd.f32 0.0, %v2918
        %v2920 = vpop.f32.mrb[0].mxu0
        %2921 = vmatprep.mubr.f32.mxu0 0.0
        %2922 = vmatmul.mubr.f32.gmra.mrb[0].mxu0 %v2692
        %v2923 = vpop.f32.mrb[0].mxu0
        %v2924 = vadd.f32 0.0, %v2923
        %v2925 = vpop.f32.mrb[0].mxu0
        %2926 = vmatprep.mubr.f32.mxu0 0.0
        %2927 = vmatmul.mubr.f32.gmra.mrb[0].mxu0 %v2693
        %v2928 = vpop.f32.mrb[0].mxu0
        %v2929 = vadd.f32 0.0, %v2928
        %v2930 = vpop.f32.mrb[0].mxu0
        %2931 = vmatprep.mubr.f32.mxu0 0.0
        %2932 = vmatmul.mubr.f32.gmra.mrb[0].mxu0 %v2694
        %v2933 = vpop.f32.mrb[0].mxu0
        %v2934 = vadd.f32 0.0, %v2933
        %v2935 = vpop.f32.mrb[0].mxu0
        %2936 = vdwg.mxu0
        %v2937 = vadd.f32 %v2631, %v2779
        %v2938 = vadd.f32 %v2632, %v2784
        %v2939 = vadd.f32 %v2633, %v2789
        %v2940 = vadd.f32 %v2634, %v2794
        %v2941 = vadd.f32 %v2635, %v2799
        %v2942 = vadd.f32 %v2636, %v2804
        %v2943 = vadd.f32 %v2637, %v2809
        %v2944 = vadd.f32 %v2638, %v2814
        %v2945 = vadd.f32 %v2639, %v2819
        %v2946 = vadd.f32 %v2640, %v2824
        %v2947 = vadd.f32 %v2641, %v2829
        %v2948 = vadd.f32 %v2642, %v2834
        %v2949 = vadd.f32 %v2643, %v2839
        %v2950 = vadd.f32 %v2644, %v2844
        %v2951 = vadd.f32 %v2645, %v2849
        %v2952 = vadd.f32 %v2646, %v2854
        %v2953 = vadd.f32 %v2647, %v2859
        %v2954 = vadd.f32 %v2648, %v2864
        %v2955 = vadd.f32 %v2649, %v2869
        %v2956 = vadd.f32 %v2650, %v2874
        %v2957 = vadd.f32 %v2651, %v2879
        %v2958 = vadd.f32 %v2652, %v2884
        %v2959 = vadd.f32 %v2653, %v2889
        %v2960 = vadd.f32 %v2654, %v2894
        %v2961 = vadd.f32 %v2655, %v2899
        %v2962 = vadd.f32 %v2656, %v2904
        %v2963 = vadd.f32 %v2657, %v2909
        %v2964 = vadd.f32 %v2658, %v2914
        %v2965 = vadd.f32 %v2659, %v2919
        %v2966 = vadd.f32 %v2660, %v2924
        %v2967 = vadd.f32 %v2661, %v2929
        %v2968 = vadd.f32 %v2662, %v2934
        %2969 = vst [vmem:[%s251] sm:$0xff] %v2937
        %2970 = vst [vmem:[%s251 + $0x8] sm:$0xff] %v2938
        %2971 = vst [vmem:[%s251 + $0x10] sm:$0xff] %v2939
        %2972 = vst [vmem:[%s251 + $0x18] sm:$0xff] %v2940
        %2973 = vst [vmem:[%s251 + $0x20] sm:$0xff] %v2941
        %2974 = vst [vmem:[%s251 + $0x28] sm:$0xff] %v2942
        %2975 = vst [vmem:[%s251 + $0x30] sm:$0xff] %v2943
        %2976 = vst [vmem:[%s251 + $0x38] sm:$0xff] %v2944
        %2977 = vst [vmem:[%s251 + $0x40] sm:$0xff] %v2945
        %2978 = vst [vmem:[%s251 + $0x48] sm:$0xff] %v2946
        %2979 = vst [vmem:[%s251 + $0x50] sm:$0xff] %v2947
        %2980 = vst [vmem:[%s251 + $0x58] sm:$0xff] %v2948
        %2981 = vst [vmem:[%s251 + $0x60] sm:$0xff] %v2949
        %2982 = vst [vmem:[%s251 + $0x68] sm:$0xff] %v2950
        %2983 = vst [vmem:[%s251 + $0x70] sm:$0xff] %v2951
        %2984 = vst [vmem:[%s251 + $0x78] sm:$0xff] %v2952
        %2985 = vst [vmem:[%s251 + $0x80] sm:$0xff] %v2953
        %2986 = vst [vmem:[%s251 + $0x88] sm:$0xff] %v2954
        %2987 = vst [vmem:[%s251 + $0x90] sm:$0xff] %v2955
        %2988 = vst [vmem:[%s251 + $0x98] sm:$0xff] %v2956
        %2989 = vst [vmem:[%s251 + $0xa0] sm:$0xff] %v2957
        %2990 = vst [vmem:[%s251 + $0xa8] sm:$0xff] %v2958
        %2991 = vst [vmem:[%s251 + $0xb0] sm:$0xff] %v2959
        %2992 = vst [vmem:[%s251 + $0xb8] sm:$0xff] %v2960
        %2993 = vst [vmem:[%s251 + $0xc0] sm:$0xff] %v2961
        %2994 = vst [vmem:[%s251 + $0xc8] sm:$0xff] %v2962
        %2995 = vst [vmem:[%s251 + $0xd0] sm:$0xff] %v2963
        %2996 = vst [vmem:[%s251 + $0xd8] sm:$0xff] %v2964
        %2997 = vst [vmem:[%s251 + $0xe0] sm:$0xff] %v2965
        %2998 = vst [vmem:[%s251 + $0xe8] sm:$0xff] %v2966
        %2999 = vst [vmem:[%s251 + $0xf0] sm:$0xff] %v2967
        %3000 = vst [vmem:[%s251 + $0xf8] sm:$0xff] %v2968
        %v3001 = vadd.f32 %v2937, %v2938
        %v3002 = vadd.f32 %v3001, %v2939
        %v3003 = vadd.f32 %v3002, %v2940
        %v3004 = vadd.f32 %v3003, %v2941
        %v3005 = vadd.f32 %v3004, %v2942
        %v3006 = vadd.f32 %v3005, %v2943
        %v3007 = vadd.f32 %v3006, %v2944
        %v3008 = vadd.f32 %v3007, %v2945
        %v3009 = vadd.f32 %v3008, %v2946
        %v3010 = vadd.f32 %v3009, %v2947
        %v3011 = vadd.f32 %v3010, %v2948
        %v3012 = vadd.f32 %v3011, %v2949
        %v3013 = vadd.f32 %v3012, %v2950
        %v3014 = vadd.f32 %v3013, %v2951
        %v3015 = vadd.f32 %v3014, %v2952
        %v3016 = vadd.f32 %v3015, %v2953
        %v3017 = vadd.f32 %v3016, %v2954
        %v3018 = vadd.f32 %v3017, %v2955
        %v3019 = vadd.f32 %v3018, %v2956
        %v3020 = vadd.f32 %v3019, %v2957
        %v3021 = vadd.f32 %v3020, %v2958
        %v3022 = vadd.f32 %v3021, %v2959
        %v3023 = vadd.f32 %v3022, %v2960
        %v3024 = vadd.f32 %v3023, %v2961
        %v3025 = vadd.f32 %v3024, %v2962
        %v3026 = vadd.f32 %v3025, %v2963
        %v3027 = vadd.f32 %v3026, %v2964
        %v3028 = vadd.f32 %v3027, %v2965
        %v3029 = vadd.f32 %v3028, %v2966
        %v3030 = vadd.f32 %v3029, %v2967
        %v3031 = vadd.f32 %v3030, %v2968
        %v3032 = vrot.slane %v3031, 4
        %v3033 = vadd.f32 %v3031, %v3032
        %v3034 = vrot.slane %v3033, 2
        %v3035 = vadd.f32 %v3033, %v3034
        %v3036 = vrot.slane %v3035, 1
        %v3037 = vadd.f32 %v3035, %v3036
        %v3038 = vmul.f32 %v3037, 0.00390625
        %v3039 = vsub.f32 %v2937, %v3038
        %v3040 = vsub.f32 %v2938, %v3038
        %v3041 = vsub.f32 %v2939, %v3038
        %v3042 = vsub.f32 %v2940, %v3038
        %v3043 = vsub.f32 %v2941, %v3038
        %v3044 = vsub.f32 %v2942, %v3038
        %v3045 = vsub.f32 %v2943, %v3038
        %v3046 = vsub.f32 %v2944, %v3038
        %v3047 = vsub.f32 %v2945, %v3038
        %v3048 = vsub.f32 %v2946, %v3038
        %v3049 = vsub.f32 %v2947, %v3038
        %v3050 = vsub.f32 %v2948, %v3038
        %v3051 = vsub.f32 %v2949, %v3038
        %v3052 = vsub.f32 %v2950, %v3038
        %v3053 = vsub.f32 %v2951, %v3038
        %v3054 = vsub.f32 %v2952, %v3038
        %v3055 = vsub.f32 %v2953, %v3038
        %v3056 = vsub.f32 %v2954, %v3038
        %v3057 = vsub.f32 %v2955, %v3038
        %v3058 = vsub.f32 %v2956, %v3038
        %v3059 = vsub.f32 %v2957, %v3038
        %v3060 = vsub.f32 %v2958, %v3038
        %v3061 = vsub.f32 %v2959, %v3038
        %v3062 = vsub.f32 %v2960, %v3038
        %v3063 = vsub.f32 %v2961, %v3038
        %v3064 = vsub.f32 %v2962, %v3038
        %v3065 = vsub.f32 %v2963, %v3038
        %v3066 = vsub.f32 %v2964, %v3038
        %v3067 = vsub.f32 %v2965, %v3038
        %v3068 = vsub.f32 %v2966, %v3038
        %v3069 = vsub.f32 %v2967, %v3038
        %v3070 = vsub.f32 %v2968, %v3038
        %3071 = vst [vmem:[%s258] sm:$0x1] %v3037
        %v3072 = vmul.f32 %v3039, %v3039
        %v3073 = vmul.f32 %v3040, %v3040
        %v3074 = vmul.f32 %v3041, %v3041
        %v3075 = vmul.f32 %v3042, %v3042
        %v3076 = vmul.f32 %v3043, %v3043
        %v3077 = vmul.f32 %v3044, %v3044
        %v3078 = vmul.f32 %v3045, %v3045
        %v3079 = vmul.f32 %v3046, %v3046
        %v3080 = vmul.f32 %v3047, %v3047
        %v3081 = vmul.f32 %v3048, %v3048
        %v3082 = vmul.f32 %v3049, %v3049
        %v3083 = vmul.f32 %v3050, %v3050
        %v3084 = vmul.f32 %v3051, %v3051
        %v3085 = vmul.f32 %v3052, %v3052
        %v3086 = vmul.f32 %v3053, %v3053
        %v3087 = vmul.f32 %v3054, %v3054
        %v3088 = vmul.f32 %v3055, %v3055
        %v3089 = vmul.f32 %v3056, %v3056
        %v3090 = vmul.f32 %v3057, %v3057
        %v3091 = vmul.f32 %v3058, %v3058
        %v3092 = vmul.f32 %v3059, %v3059
        %v3093 = vmul.f32 %v3060, %v3060
        %v3094 = vmul.f32 %v3061, %v3061
        %v3095 = vmul.f32 %v3062, %v3062
        %v3096 = vmul.f32 %v3063, %v3063
        %v3097 = vmul.f32 %v3064, %v3064
        %v3098 = vmul.f32 %v3065, %v3065
        %v3099 = vmul.f32 %v3066, %v3066
        %v3100 = vmul.f32 %v3067, %v3067
        %v3101 = vmul.f32 %v3068, %v3068
        %v3102 = vmul.f32 %v3069, %v3069
        %v3103 = vmul.f32 %v3070, %v3070
        %v3104 = vadd.f32 %v3072, %v3073
        %v3105 = vadd.f32 %v3104, %v3074
        %v3106 = vadd.f32 %v3105, %v3075
        %v3107 = vadd.f32 %v3106, %v3076
        %v3108 = vadd.f32 %v3107, %v3077
        %v3109 = vadd.f32 %v3108, %v3078
        %v3110 = vadd.f32 %v3109, %v3079
        %v3111 = vadd.f32 %v3110, %v3080
        %v3112 = vadd.f32 %v3111, %v3081
        %v3113 = vadd.f32 %v3112, %v3082
        %v3114 = vadd.f32 %v3113, %v3083
        %v3115 = vadd.f32 %v3114, %v3084
        %v3116 = vadd.f32 %v3115, %v3085
        %v3117 = vadd.f32 %v3116, %v3086
        %v3118 = vadd.f32 %v3117, %v3087
        %v3119 = vadd.f32 %v3118, %v3088
        %v3120 = vadd.f32 %v3119, %v3089
        %v3121 = vadd.f32 %v3120, %v3090
        %v3122 = vadd.f32 %v3121, %v3091
        %v3123 = vadd.f32 %v3122, %v3092
        %v3124 = vadd.f32 %v3123, %v3093
        %v3125 = vadd.f32 %v3124, %v3094
        %v3126 = vadd.f32 %v3125, %v3095
        %v3127 = vadd.f32 %v3126, %v3096
        %v3128 = vadd.f32 %v3127, %v3097
        %v3129 = vadd.f32 %v3128, %v3098
        %v3130 = vadd.f32 %v3129, %v3099
        %v3131 = vadd.f32 %v3130, %v3100
        %v3132 = vadd.f32 %v3131, %v3101
        %v3133 = vadd.f32 %v3132, %v3102
        %v3134 = vadd.f32 %v3133, %v3103
        %v3135 = vrot.slane %v3134, 4
        %v3136 = vadd.f32 %v3134, %v3135
        %v3137 = vrot.slane %v3136, 2
        %v3138 = vadd.f32 %v3136, %v3137
        %v3139 = vrot.slane %v3138, 1
        %v3140 = vadd.f32 %v3138, %v3139
        %3141 = vst [vmem:[%s258 + $0x1] sm:$0x1] %v3140
        %v3142 = vld [vmem:[%s1131 + $0x1] sm:$0xff]
        %v3143 = vld [vmem:[%s1131 + $0x9] sm:$0xff]
        %v3144 = vld [vmem:[%s1131 + $0x19] sm:$0xff]
        %v3145 = vld [vmem:[%s1131 + $0x21] sm:$0xff]
        %v3146 = vld [vmem:[%s1131 + $0x31] sm:$0xff]
        %v3147 = vld [vmem:[%s1131 + $0x39] sm:$0xff]
        %v3148 = vld [vmem:[%s1131 + $0x49] sm:$0xff]
        %v3149 = vld [vmem:[%s1131 + $0x51] sm:$0xff]
        %v3150 = vld [vmem:[%s1131 + $0x61] sm:$0xff]
        %v3151 = vld [vmem:[%s1131 + $0x69] sm:$0xff]
        %v3152 = vld [vmem:[%s1131 + $0x79] sm:$0xff]
        %v3153 = vld [vmem:[%s1131 + $0x81] sm:$0xff]
        %v3154 = vld [vmem:[%s1131 + $0x91] sm:$0xff]
        %v3155 = vld [vmem:[%s1131 + $0x99] sm:$0xff]
        %v3156 = vld [vmem:[%s1131 + $0xa9] sm:$0xff]
        %v3157 = vld [vmem:[%s1131 + $0xb1] sm:$0xff]
        %v3158 = vld [vmem:[%s1131 + $0xc1] sm:$0xff]
        %v3159 = vld [vmem:[%s1131 + $0xc9] sm:$0xff]
        %v3160 = vld [vmem:[%s1131 + $0xd9] sm:$0xff]
        %v3161 = vld [vmem:[%s1131 + $0xe1] sm:$0xff]
        %v3162 = vld [vmem:[%s1131 + $0xf1] sm:$0xff]
        %v3163 = vld [vmem:[%s1131 + $0xf9] sm:$0xff]
        %v3164 = vld [vmem:[%s1131 + $0x109] sm:$0xff]
        %v3165 = vld [vmem:[%s1131 + $0x111] sm:$0xff]
        %v3166 = vld [vmem:[%s1131 + $0x121] sm:$0xff]
        %v3167 = vld [vmem:[%s1131 + $0x129] sm:$0xff]
        %v3168 = vld [vmem:[%s1131 + $0x139] sm:$0xff]
        %v3169 = vld [vmem:[%s1131 + $0x141] sm:$0xff]
        %v3170 = vld [vmem:[%s1131 + $0x151] sm:$0xff]
        %v3171 = vld [vmem:[%s1131 + $0x159] sm:$0xff]
        %v3172 = vld [vmem:[%s1131 + $0x169] sm:$0xff]
        %v3173 = vld [vmem:[%s1131 + $0x171] sm:$0xff]
        %v3174 = vld [vmem:[%s2] sm:$0xff]
        %v3175 = vld [vmem:[%s2 + $0x8] sm:$0xff]
        %v3176 = vld [vmem:[%s2 + $0x10] sm:$0xff]
        %v3177 = vld [vmem:[%s2 + $0x18] sm:$0xff]
        %v3178 = vld [vmem:[%s2 + $0x20] sm:$0xff]
        %v3179 = vld [vmem:[%s2 + $0x28] sm:$0xff]
        %v3180 = vld [vmem:[%s2 + $0x30] sm:$0xff]
        %v3181 = vld [vmem:[%s2 + $0x38] sm:$0xff]
        %v3182 = vld [vmem:[%s2 + $0x40] sm:$0xff]
        %v3183 = vld [vmem:[%s2 + $0x48] sm:$0xff]
        %v3184 = vld [vmem:[%s2 + $0x50] sm:$0xff]
        %v3185 = vld [vmem:[%s2 + $0x58] sm:$0xff]
        %v3186 = vld [vmem:[%s2 + $0x60] sm:$0xff]
        %v3187 = vld [vmem:[%s2 + $0x68] sm:$0xff]
        %v3188 = vld [vmem:[%s2 + $0x70] sm:$0xff]
        %v3189 = vld [vmem:[%s2 + $0x78] sm:$0xff]
        %3190 = vmatprep.subr.mxu0 0.0
        %3191 = vmatpush1.msra.mxu0 %v3174
        %3192 = vmatprep.subr.mxu0 0.0
        %3193 = vmatpush1.msra.mxu0 %v3175
        %3194 = vmatprep.subr.mxu0 0.0
        %3195 = vmatpush1.msra.mxu0 %v3176
        %3196 = vmatprep.subr.mxu0 0.0
        %3197 = vmatpush1.msra.mxu0 %v3177
        %3198 = vmatprep.subr.mxu0 0.0
        %3199 = vmatpush1.msra.mxu0 %v3178
        %3200 = vmatprep.subr.mxu0 0.0
        %3201 = vmatpush1.msra.mxu0 %v3179
        %3202 = vmatprep.subr.mxu0 0.0
        %3203 = vmatpush1.msra.mxu0 %v3180
        %3204 = vmatprep.subr.mxu0 0.0
        %3205 = vmatpush1.msra.mxu0 %v3181
        %3206 = vmatprep.subr.mxu0 0.0
        %3207 = vmatpush1.msra.mxu0 %v3182
        %3208 = vmatprep.subr.mxu0 0.0
        %3209 = vmatpush1.msra.mxu0 %v3183
        %3210 = vmatprep.subr.mxu0 0.0
        %3211 = vmatpush1.msra.mxu0 %v3184
        %3212 = vmatprep.subr.mxu0 0.0
        %3213 = vmatpush1.msra.mxu0 %v3185
        %3214 = vmatprep.subr.mxu0 0.0
        %3215 = vmatpush1.msra.mxu0 %v3186
        %3216 = vmatprep.subr.mxu0 0.0
        %3217 = vmatpush1.msra.mxu0 %v3187
        %3218 = vmatprep.subr.mxu0 0.0
        %3219 = vmatpush1.msra.mxu0 %v3188
        %3220 = vmatprep.subr.mxu0 0.0
        %3221 = vmatpush1.msra.mxu0 %v3189
        %3222 = vmatprep.subr.mxu0 0.0
        %3223 = vmatpush1.msra.mxu0 0.0
        %3224 = vmatprep.subr.mxu0 0.0
        %3225 = vmatpush1.msra.mxu0 0.0
        %3226 = vmatprep.subr.mxu0 0.0
        %3227 = vmatpush1.msra.mxu0 0.0
        %3228 = vmatprep.subr.mxu0 0.0
        %3229 = vmatpush1.msra.mxu0 0.0
        %3230 = vmatprep.subr.mxu0 0.0
        %3231 = vmatpush1.msra.mxu0 0.0
        %3232 = vmatprep.subr.mxu0 0.0
        %3233 = vmatpush1.msra.mxu0 0.0
        %3234 = vmatprep.subr.mxu0 0.0
        %3235 = vmatpush1.msra.mxu0 0.0
        %3236 = vmatprep.subr.mxu0 0.0
        %3237 = vmatpush1.msra.mxu0 0.0
        %3238 = vmatprep.subr.mxu0 0.0
        %3239 = vmatpush1.msra.mxu0 0.0
        %3240 = vmatprep.subr.mxu0 0.0
        %3241 = vmatpush1.msra.mxu0 0.0
        %3242 = vmatprep.subr.mxu0 0.0
        %3243 = vmatpush1.msra.mxu0 0.0
        %3244 = vmatprep.subr.mxu0 0.0
        %3245 = vmatpush1.msra.mxu0 0.0
        %3246 = vmatprep.subr.mxu0 0.0
        %3247 = vmatpush1.msra.mxu0 0.0
        %3248 = vmatprep.subr.mxu0 0.0
        %3249 = vmatpush1.msra.mxu0 0.0
        %3250 = vmatprep.subr.mxu0 0.0
        %3251 = vmatpush1.msra.mxu0 0.0
        %3252 = vmatprep.subr.mxu0 0.0
        %3253 = vmatpush1.msra.mxu0 0.0
        %3254 = vmatprep.mubr.f32.mxu0 0.0
        %3255 = vmatmul.mubr.f32.gmra.mrb[0].mxu0 %v3142
        %v3256 = vpop.f32.mrb[0].mxu0
        %v3257 = vadd.f32 0.0, %v3256
        %v3258 = vpop.f32.mrb[0].mxu0
        %3259 = vmatprep.mubr.f32.mxu0 0.0
        %3260 = vmatmul.mubr.f32.gmra.mrb[0].mxu0 %v3143
        %v3261 = vpop.f32.mrb[0].mxu0
        %v3262 = vadd.f32 0.0, %v3261
        %v3263 = vpop.f32.mrb[0].mxu0
        %3264 = vmatprep.mubr.f32.mxu0 0.0
        %3265 = vmatmul.mubr.f32.gmra.mrb[0].mxu0 %v3144
        %v3266 = vpop.f32.mrb[0].mxu0
        %v3267 = vadd.f32 0.0, %v3266
        %v3268 = vpop.f32.mrb[0].mxu0
        %3269 = vmatprep.mubr.f32.mxu0 0.0
        %3270 = vmatmul.mubr.f32.gmra.mrb[0].mxu0 %v3145
        %v3271 = vpop.f32.mrb[0].mxu0
        %v3272 = vadd.f32 0.0, %v3271
        %v3273 = vpop.f32.mrb[0].mxu0
        %3274 = vmatprep.mubr.f32.mxu0 0.0
        %3275 = vmatmul.mubr.f32.gmra.mrb[0].mxu0 %v3146
        %v3276 = vpop.f32.mrb[0].mxu0
        %v3277 = vadd.f32 0.0, %v3276
        %v3278 = vpop.f32.mrb[0].mxu0
        %3279 = vmatprep.mubr.f32.mxu0 0.0
        %3280 = vmatmul.mubr.f32.gmra.mrb[0].mxu0 %v3147
        %v3281 = vpop.f32.mrb[0].mxu0
        %v3282 = vadd.f32 0.0, %v3281
        %v3283 = vpop.f32.mrb[0].mxu0
        %3284 = vmatprep.mubr.f32.mxu0 0.0
        %3285 = vmatmul.mubr.f32.gmra.mrb[0].mxu0 %v3148
        %v3286 = vpop.f32.mrb[0].mxu0
        %v3287 = vadd.f32 0.0, %v3286
        %v3288 = vpop.f32.mrb[0].mxu0
        %3289 = vmatprep.mubr.f32.mxu0 0.0
        %3290 = vmatmul.mubr.f32.gmra.mrb[0].mxu0 %v3149
        %v3291 = vpop.f32.mrb[0].mxu0
        %v3292 = vadd.f32 0.0, %v3291
        %v3293 = vpop.f32.mrb[0].mxu0
        %3294 = vmatprep.mubr.f32.mxu0 0.0
        %3295 = vmatmul.mubr.f32.gmra.mrb[0].mxu0 %v3150
        %v3296 = vpop.f32.mrb[0].mxu0
        %v3297 = vadd.f32 0.0, %v3296
        %v3298 = vpop.f32.mrb[0].mxu0
        %3299 = vmatprep.mubr.f32.mxu0 0.0
        %3300 = vmatmul.mubr.f32.gmra.mrb[0].mxu0 %v3151
        %v3301 = vpop.f32.mrb[0].mxu0
        %v3302 = vadd.f32 0.0, %v3301
        %v3303 = vpop.f32.mrb[0].mxu0
        %3304 = vmatprep.mubr.f32.mxu0 0.0
        %3305 = vmatmul.mubr.f32.gmra.mrb[0].mxu0 %v3152
        %v3306 = vpop.f32.mrb[0].mxu0
        %v3307 = vadd.f32 0.0, %v3306
        %v3308 = vpop.f32.mrb[0].mxu0
        %3309 = vmatprep.mubr.f32.mxu0 0.0
        %3310 = vmatmul.mubr.f32.gmra.mrb[0].mxu0 %v3153
        %v3311 = vpop.f32.mrb[0].mxu0
        %v3312 = vadd.f32 0.0, %v3311
        %v3313 = vpop.f32.mrb[0].mxu0
        %3314 = vmatprep.mubr.f32.mxu0 0.0
        %3315 = vmatmul.mubr.f32.gmra.mrb[0].mxu0 %v3154
        %v3316 = vpop.f32.mrb[0].mxu0
        %v3317 = vadd.f32 0.0, %v3316
        %v3318 = vpop.f32.mrb[0].mxu0
        %3319 = vmatprep.mubr.f32.mxu0 0.0
        %3320 = vmatmul.mubr.f32.gmra.mrb[0].mxu0 %v3155
        %v3321 = vpop.f32.mrb[0].mxu0
        %v3322 = vadd.f32 0.0, %v3321
        %v3323 = vpop.f32.mrb[0].mxu0
        %3324 = vmatprep.mubr.f32.mxu0 0.0
        %3325 = vmatmul.mubr.f32.gmra.mrb[0].mxu0 %v3156
        %v3326 = vpop.f32.mrb[0].mxu0
        %v3327 = vadd.f32 0.0, %v3326
        %v3328 = vpop.f32.mrb[0].mxu0
        %3329 = vmatprep.mubr.f32.mxu0 0.0
        %3330 = vmatmul.mubr.f32.gmra.mrb[0].mxu0 %v3157
        %v3331 = vpop.f32.mrb[0].mxu0
        %v3332 = vadd.f32 0.0, %v3331
        %v3333 = vpop.f32.mrb[0].mxu0
        %3334 = vmatprep.mubr.f32.mxu0 0.0
        %3335 = vmatmul.mubr.f32.gmra.mrb[0].mxu0 %v3158
        %v3336 = vpop.f32.mrb[0].mxu0
        %v3337 = vadd.f32 0.0, %v3336
        %v3338 = vpop.f32.mrb[0].mxu0
        %3339 = vmatprep.mubr.f32.mxu0 0.0
        %3340 = vmatmul.mubr.f32.gmra.mrb[0].mxu0 %v3159
        %v3341 = vpop.f32.mrb[0].mxu0
        %v3342 = vadd.f32 0.0, %v3341
        %v3343 = vpop.f32.mrb[0].mxu0
        %3344 = vmatprep.mubr.f32.mxu0 0.0
        %3345 = vmatmul.mubr.f32.gmra.mrb[0].mxu0 %v3160
        %v3346 = vpop.f32.mrb[0].mxu0
        %v3347 = vadd.f32 0.0, %v3346
        %v3348 = vpop.f32.mrb[0].mxu0
        %3349 = vmatprep.mubr.f32.mxu0 0.0
        %3350 = vmatmul.mubr.f32.gmra.mrb[0].mxu0 %v3161
        %v3351 = vpop.f32.mrb[0].mxu0
        %v3352 = vadd.f32 0.0, %v3351
        %v3353 = vpop.f32.mrb[0].mxu0
        %3354 = vmatprep.mubr.f32.mxu0 0.0
        %3355 = vmatmul.mubr.f32.gmra.mrb[0].mxu0 %v3162
        %v3356 = vpop.f32.mrb[0].mxu0
        %v3357 = vadd.f32 0.0, %v3356
        %v3358 = vpop.f32.mrb[0].mxu0
        %3359 = vmatprep.mubr.f32.mxu0 0.0
        %3360 = vmatmul.mubr.f32.gmra.mrb[0].mxu0 %v3163
        %v3361 = vpop.f32.mrb[0].mxu0
        %v3362 = vadd.f32 0.0, %v3361
        %v3363 = vpop.f32.mrb[0].mxu0
        %3364 = vmatprep.mubr.f32.mxu0 0.0
        %3365 = vmatmul.mubr.f32.gmra.mrb[0].mxu0 %v3164
        %v3366 = vpop.f32.mrb[0].mxu0
        %v3367 = vadd.f32 0.0, %v3366
        %v3368 = vpop.f32.mrb[0].mxu0
        %3369 = vmatprep.mubr.f32.mxu0 0.0
        %3370 = vmatmul.mubr.f32.gmra.mrb[0].mxu0 %v3165
        %v3371 = vpop.f32.mrb[0].mxu0
        %v3372 = vadd.f32 0.0, %v3371
        %v3373 = vpop.f32.mrb[0].mxu0
        %3374 = vmatprep.mubr.f32.mxu0 0.0
        %3375 = vmatmul.mubr.f32.gmra.mrb[0].mxu0 %v3166
        %v3376 = vpop.f32.mrb[0].mxu0
        %v3377 = vadd.f32 0.0, %v3376
        %v3378 = vpop.f32.mrb[0].mxu0
        %3379 = vmatprep.mubr.f32.mxu0 0.0
        %3380 = vmatmul.mubr.f32.gmra.mrb[0].mxu0 %v3167
        %v3381 = vpop.f32.mrb[0].mxu0
        %v3382 = vadd.f32 0.0, %v3381
        %v3383 = vpop.f32.mrb[0].mxu0
        %3384 = vmatprep.mubr.f32.mxu0 0.0
        %3385 = vmatmul.mubr.f32.gmra.mrb[0].mxu0 %v3168
        %v3386 = vpop.f32.mrb[0].mxu0
        %v3387 = vadd.f32 0.0, %v3386
        %v3388 = vpop.f32.mrb[0].mxu0
        %3389 = vmatprep.mubr.f32.mxu0 0.0
        %3390 = vmatmul.mubr.f32.gmra.mrb[0].mxu0 %v3169
        %v3391 = vpop.f32.mrb[0].mxu0
        %v3392 = vadd.f32 0.0, %v3391
        %v3393 = vpop.f32.mrb[0].mxu0
        %3394 = vmatprep.mubr.f32.mxu0 0.0
        %3395 = vmatmul.mubr.f32.gmra.mrb[0].mxu0 %v3170
        %v3396 = vpop.f32.mrb[0].mxu0
        %v3397 = vadd.f32 0.0, %v3396
        %v3398 = vpop.f32.mrb[0].mxu0
        %3399 = vmatprep.mubr.f32.mxu0 0.0
        %3400 = vmatmul.mubr.f32.gmra.mrb[0].mxu0 %v3171
        %v3401 = vpop.f32.mrb[0].mxu0
        %v3402 = vadd.f32 0.0, %v3401
        %v3403 = vpop.f32.mrb[0].mxu0
        %3404 = vmatprep.mubr.f32.mxu0 0.0
        %3405 = vmatmul.mubr.f32.gmra.mrb[0].mxu0 %v3172
        %v3406 = vpop.f32.mrb[0].mxu0
        %v3407 = vadd.f32 0.0, %v3406
        %v3408 = vpop.f32.mrb[0].mxu0
        %3409 = vmatprep.mubr.f32.mxu0 0.0
        %3410 = vmatmul.mubr.f32.gmra.mrb[0].mxu0 %v3173
        %v3411 = vpop.f32.mrb[0].mxu0
        %v3412 = vadd.f32 0.0, %v3411
        %v3413 = vpop.f32.mrb[0].mxu0
        %3414 = vdwg.mxu0
        %3415 = vst [vmem:[%s265] sm:$0xff] %v3257
        %3416 = vst [vmem:[%s265 + $0x8] sm:$0xff] %v3262
        %3417 = vst [vmem:[%s265 + $0x10] sm:$0xff] %v3267
        %3418 = vst [vmem:[%s265 + $0x18] sm:$0xff] %v3272
        %3419 = vst [vmem:[%s265 + $0x20] sm:$0xff] %v3277
        %3420 = vst [vmem:[%s265 + $0x28] sm:$0xff] %v3282
        %3421 = vst [vmem:[%s265 + $0x30] sm:$0xff] %v3287
        %3422 = vst [vmem:[%s265 + $0x38] sm:$0xff] %v3292
        %3423 = vst [vmem:[%s265 + $0x40] sm:$0xff] %v3297
        %3424 = vst [vmem:[%s265 + $0x48] sm:$0xff] %v3302
        %3425 = vst [vmem:[%s265 + $0x50] sm:$0xff] %v3307
        %3426 = vst [vmem:[%s265 + $0x58] sm:$0xff] %v3312
        %3427 = vst [vmem:[%s265 + $0x60] sm:$0xff] %v3317
        %3428 = vst [vmem:[%s265 + $0x68] sm:$0xff] %v3322
        %3429 = vst [vmem:[%s265 + $0x70] sm:$0xff] %v3327
        %3430 = vst [vmem:[%s265 + $0x78] sm:$0xff] %v3332
        %3431 = vst [vmem:[%s265 + $0x80] sm:$0xff] %v3337
        %3432 = vst [vmem:[%s265 + $0x88] sm:$0xff] %v3342
        %3433 = vst [vmem:[%s265 + $0x90] sm:$0xff] %v3347
        %3434 = vst [vmem:[%s265 + $0x98] sm:$0xff] %v3352
        %3435 = vst [vmem:[%s265 + $0xa0] sm:$0xff] %v3357
        %3436 = vst [vmem:[%s265 + $0xa8] sm:$0xff] %v3362
        %3437 = vst [vmem:[%s265 + $0xb0] sm:$0xff] %v3367
        %3438 = vst [vmem:[%s265 + $0xb8] sm:$0xff] %v3372
        %3439 = vst [vmem:[%s265 + $0xc0] sm:$0xff] %v3377
        %3440 = vst [vmem:[%s265 + $0xc8] sm:$0xff] %v3382
        %3441 = vst [vmem:[%s265 + $0xd0] sm:$0xff] %v3387
        %3442 = vst [vmem:[%s265 + $0xd8] sm:$0xff] %v3392
        %3443 = vst [vmem:[%s265 + $0xe0] sm:$0xff] %v3397
        %3444 = vst [vmem:[%s265 + $0xe8] sm:$0xff] %v3402
        %3445 = vst [vmem:[%s265 + $0xf0] sm:$0xff] %v3407
        %3446 = vst [vmem:[%s265 + $0xf8] sm:$0xff] %v3412
        %v3447 = vadd.f32 %v3257, %v3262
        %v3448 = vadd.f32 %v3447, %v3267
        %v3449 = vadd.f32 %v3448, %v3272
        %v3450 = vadd.f32 %v3449, %v3277
        %v3451 = vadd.f32 %v3450, %v3282
        %v3452 = vadd.f32 %v3451, %v3287
        %v3453 = vadd.f32 %v3452, %v3292
        %v3454 = vadd.f32 %v3453, %v3297
        %v3455 = vadd.f32 %v3454, %v3302
        %v3456 = vadd.f32 %v3455, %v3307
        %v3457 = vadd.f32 %v3456, %v3312
        %v3458 = vadd.f32 %v3457, %v3317
        %v3459 = vadd.f32 %v3458, %v3322
        %v3460 = vadd.f32 %v3459, %v3327
        %v3461 = vadd.f32 %v3460, %v3332
        %v3462 = vadd.f32 %v3461, %v3337
        %v3463 = vadd.f32 %v3462, %v3342
        %v3464 = vadd.f32 %v3463, %v3347
        %v3465 = vadd.f32 %v3464, %v3352
        %v3466 = vadd.f32 %v3465, %v3357
        %v3467 = vadd.f32 %v3466, %v3362
        %v3468 = vadd.f32 %v3467, %v3367
        %v3469 = vadd.f32 %v3468, %v3372
        %v3470 = vadd.f32 %v3469, %v3377
        %v3471 = vadd.f32 %v3470, %v3382
        %v3472 = vadd.f32 %v3471, %v3387
        %v3473 = vadd.f32 %v3472, %v3392
        %v3474 = vadd.f32 %v3473, %v3397
        %v3475 = vadd.f32 %v3474, %v3402
        %v3476 = vadd.f32 %v3475, %v3407
        %v3477 = vadd.f32 %v3476, %v3412
        %v3478 = vrot.slane %v3477, 4
        %v3479 = vadd.f32 %v3477, %v3478
        %v3480 = vrot.slane %v3479, 2
        %v3481 = vadd.f32 %v3479, %v3480
        %v3482 = vrot.slane %v3481, 1
        %v3483 = vadd.f32 %v3481, %v3482
        %v3484 = vmul.f32 %v3483, 0.00390625
        %v3485 = vsub.f32 %v3257, %v3484
        %v3486 = vsub.f32 %v3262, %v3484
        %v3487 = vsub.f32 %v3267, %v3484
        %v3488 = vsub.f32 %v3272, %v3484
        %v3489 = vsub.f32 %v3277, %v3484
        %v3490 = vsub.f32 %v3282, %v3484
        %v3491 = vsub.f32 %v3287, %v3484
        %v3492 = vsub.f32 %v3292, %v3484
        %v3493 = vsub.f32 %v3297, %v3484
        %v3494 = vsub.f32 %v3302, %v3484
        %v3495 = vsub.f32 %v3307, %v3484
        %v3496 = vsub.f32 %v3312, %v3484
        %v3497 = vsub.f32 %v3317, %v3484
        %v3498 = vsub.f32 %v3322, %v3484
        %v3499 = vsub.f32 %v3327, %v3484
        %v3500 = vsub.f32 %v3332, %v3484
        %v3501 = vsub.f32 %v3337, %v3484
        %v3502 = vsub.f32 %v3342, %v3484
        %v3503 = vsub.f32 %v3347, %v3484
        %v3504 = vsub.f32 %v3352, %v3484
        %v3505 = vsub.f32 %v3357, %v3484
        %v3506 = vsub.f32 %v3362, %v3484
        %v3507 = vsub.f32 %v3367, %v3484
        %v3508 = vsub.f32 %v3372, %v3484
        %v3509 = vsub.f32 %v3377, %v3484
        %v3510 = vsub.f32 %v3382, %v3484
        %v3511 = vsub.f32 %v3387, %v3484
        %v3512 = vsub.f32 %v3392, %v3484
        %v3513 = vsub.f32 %v3397, %v3484
        %v3514 = vsub.f32 %v3402, %v3484
        %v3515 = vsub.f32 %v3407, %v3484
        %v3516 = vsub.f32 %v3412, %v3484
        %3517 = vst [vmem:[%s272] sm:$0x1] %v3483
        %v3518 = vmul.f32 %v3485, %v3485
        %v3519 = vmul.f32 %v3486, %v3486
        %v3520 = vmul.f32 %v3487, %v3487
        %v3521 = vmul.f32 %v3488, %v3488
        %v3522 = vmul.f32 %v3489, %v3489
        %v3523 = vmul.f32 %v3490, %v3490
        %v3524 = vmul.f32 %v3491, %v3491
        %v3525 = vmul.f32 %v3492, %v3492
        %v3526 = vmul.f32 %v3493, %v3493
        %v3527 = vmul.f32 %v3494, %v3494
        %v3528 = vmul.f32 %v3495, %v3495
        %v3529 = vmul.f32 %v3496, %v3496
        %v3530 = vmul.f32 %v3497, %v3497
        %v3531 = vmul.f32 %v3498, %v3498
        %v3532 = vmul.f32 %v3499, %v3499
        %v3533 = vmul.f32 %v3500, %v3500
        %v3534 = vmul.f32 %v3501, %v3501
        %v3535 = vmul.f32 %v3502, %v3502
        %v3536 = vmul.f32 %v3503, %v3503
        %v3537 = vmul.f32 %v3504, %v3504
        %v3538 = vmul.f32 %v3505, %v3505
        %v3539 = vmul.f32 %v3506, %v3506
        %v3540 = vmul.f32 %v3507, %v3507
        %v3541 = vmul.f32 %v3508, %v3508
        %v3542 = vmul.f32 %v3509, %v3509
        %v3543 = vmul.f32 %v3510, %v3510
        %v3544 = vmul.f32 %v3511, %v3511
        %v3545 = vmul.f32 %v3512, %v3512
        %v3546 = vmul.f32 %v3513, %v3513
        %v3547 = vmul.f32 %v3514, %v3514
        %v3548 = vmul.f32 %v3515, %v3515
        %v3549 = vmul.f32 %v3516, %v3516
        %v3550 = vadd.f32 %v3518, %v3519
        %v3551 = vadd.f32 %v3550, %v3520
        %v3552 = vadd.f32 %v3551, %v3521
        %v3553 = vadd.f32 %v3552, %v3522
        %v3554 = vadd.f32 %v3553, %v3523
        %v3555 = vadd.f32 %v3554, %v3524
        %v3556 = vadd.f32 %v3555, %v3525
        %v3557 = vadd.f32 %v3556, %v3526
        %v3558 = vadd.f32 %v3557, %v3527
        %v3559 = vadd.f32 %v3558, %v3528
        %v3560 = vadd.f32 %v3559, %v3529
        %v3561 = vadd.f32 %v3560, %v3530
        %v3562 = vadd.f32 %v3561, %v3531
        %v3563 = vadd.f32 %v3562, %v3532
        %v3564 = vadd.f32 %v3563, %v3533
        %v3565 = vadd.f32 %v3564, %v3534
        %v3566 = vadd.f32 %v3565, %v3535
        %v3567 = vadd.f32 %v3566, %v3536
        %v3568 = vadd.f32 %v3567, %v3537
        %v3569 = vadd.f32 %v3568, %v3538
        %v3570 = vadd.f32 %v3569, %v3539
        %v3571 = vadd.f32 %v3570, %v3540
        %v3572 = vadd.f32 %v3571, %v3541
        %v3573 = vadd.f32 %v3572, %v3542
        %v3574 = vadd.f32 %v3573, %v3543
        %v3575 = vadd.f32 %v3574, %v3544
        %v3576 = vadd.f32 %v3575, %v3545
        %v3577 = vadd.f32 %v3576, %v3546
        %v3578 = vadd.f32 %v3577, %v3547
        %v3579 = vadd.f32 %v3578, %v3548
        %v3580 = vadd.f32 %v3579, %v3549
        %v3581 = vrot.slane %v3580, 4
        %v3582 = vadd.f32 %v3580, %v3581
        %v3583 = vrot.slane %v3582, 2
        %v3584 = vadd.f32 %v3582, %v3583
        %v3585 = vrot.slane %v3584, 1
        %v3586 = vadd.f32 %v3584, %v3585
        %3587 = vst [vmem:[%s272 + $0x1] sm:$0x1] %v3586
        %s3588 = sand.u32 %s103, 1
        %s3589 = scalar_lea.sflag [#allocation3], %s3588
        %s3590 = sand.u32 %s103, 1
        %s3591 = smul.addr %s3590, 256
        %s3592 = scalar_lea.vmem [#allocation2], %s3591
        %s3593 = sand.u32 %s27, 1
        %s3594 = scalar_lea.sflag [#allocation5], %s3593
        %s3595 = sand.u32 %s129, 1
        %s3596 = smul.addr %s3595, 2
        %s3597 = scalar_lea.vmem [#allocation4], %s3596
        %s3598 = sand.u32 %s27, 1
        %s3599 = scalar_lea.sflag [#allocation5], %s3598
        %s3600 = sand.u32 %s155, 1
        %s3601 = smul.addr %s3600, 256
        %s3602 = scalar_lea.vmem [#allocation6], %s3601
        %s3603 = sand.u32 %s181, 1
        %s3604 = scalar_lea.sflag [#allocation8], %s3603
        %s3605 = sand.u32 %s181, 1
        %s3606 = smul.addr %s3605, 2
        %s3607 = scalar_lea.vmem [#allocation7], %s3606
        // Predicated region
        $region33: #{tpu_custom_call.1} parent=31 // pred_check
          %p3608 = pneg %p113
        $region34: #{tpu_custom_call.1} parent=31 // pred_check_branch
          %3610 = sbr.rel (%p3608) target = $region36
        $region35: #{tpu_custom_call.1} parent=31 // pred_region
          %s3612 = ssub.s32 4096, 4096
          %3613 = vsyncadd %s3589, %s3612
          %s3614 = smul.addr %s27, 32
          %s3615 = smul.addr %s3614, 128
          %s3616 = scalar_lea.hbm %s3, %s3615
          %s3617 = sshll.u32 %s3592, 4
          %s3618 = int_to_ptr.vmem [resolvable:$true] %s3617
          %3623 = dma.vmem_to_hbm [thread:$0]  %s3618, 4096, %s3616, %s3589, 128, 128, 8
        $region36: #{tpu_custom_call.1} parent=31 // pred_fallthru
          _
        // Predicated region
        $region37: #{tpu_custom_call.1} parent=31 // pred_check
          %p3624 = pneg %p139
        $region38: #{tpu_custom_call.1} parent=31 // pred_check_branch
          %3626 = sbr.rel (%p3624) target = $region40
        $region39: #{tpu_custom_call.1} parent=31 // pred_region
          %s3628 = ssub.s32 32, 32
          %3629 = vsyncadd %s3594, %s3628
          %s3630 = smul.addr %s27, 32
          %s3631 = scalar_lea.hbm %s4, %s3630
          %s3633 = sshll.u32 %s3597, 4
          %s3634 = int_to_ptr.vmem [resolvable:$true] %s3633
          %3636 = dma.vmem_to_hbm [thread:$0]  %s3634, 32, %s3631, %s3594
        $region40: #{tpu_custom_call.1} parent=31 // pred_fallthru
          _
        // Predicated region
        $region41: #{tpu_custom_call.1} parent=31 // pred_check
          %p3637 = pneg %p165
        $region42: #{tpu_custom_call.1} parent=31 // pred_check_branch
          %3639 = sbr.rel (%p3637) target = $region44
        $region43: #{tpu_custom_call.1} parent=31 // pred_region
          %s3641 = ssub.s32 4096, 4096
          %3642 = vsyncadd %s3599, %s3641
          %s3643 = smul.addr %s27, 32
          %s3644 = smul.addr %s3643, 128
          %s3645 = scalar_lea.hbm %s5, %s3644
          %s3646 = sshll.u32 %s3602, 4
          %s3647 = int_to_ptr.vmem [resolvable:$true] %s3646
          %3652 = dma.vmem_to_hbm [thread:$0]  %s3647, 4096, %s3645, %s3599, 128, 128, 8
        $region44: #{tpu_custom_call.1} parent=31 // pred_fallthru
          _
        // Predicated region
        $region45: #{tpu_custom_call.1} parent=31 // pred_check
          %p3653 = pneg %p191
        $region46: #{tpu_custom_call.1} parent=31 // pred_check_branch
          %3655 = sbr.rel (%p3653) target = $region48
        $region47: #{tpu_custom_call.1} parent=31 // pred_region
          %s3657 = ssub.s32 32, 32
          %3658 = vsyncadd %s3604, %s3657
          %s3659 = smul.addr %s27, 32
          %s3660 = scalar_lea.hbm %s6, %s3659
          %s3662 = sshll.u32 %s3607, 4
          %s3663 = int_to_ptr.vmem [resolvable:$true] %s3662
          %3665 = dma.vmem_to_hbm [thread:$0]  %s3663, 32, %s3660, %s3604
        $region48: #{tpu_custom_call.1} parent=31 // pred_fallthru
          _
      $region32: #{tpu_custom_call.1} parent=5 // pred_fallthru
        _
      %p3666 = scmp.le.s32.totalorder 2, %s22
      // Predicated region
      $region49: #{tpu_custom_call.1} parent=5 // pred_check
        %p3667 = pneg %p3666
      $region50: #{tpu_custom_call.1} parent=5 // pred_check_branch
        %3669 = sbr.rel (%p3667) target = $region52
      $region51: #{tpu_custom_call.1} parent=5 // pred_region
        %s3670 = ssub.s32 %s22, 2
        // Predicated region
        $region53: #{tpu_custom_call.1} parent=51 // pred_check
          %p3671 = pneg %p119
        $region54: #{tpu_custom_call.1} parent=51 // pred_check_branch
          %3673 = sbr.rel (%p3671) target = $region56
        $region55: #{tpu_custom_call.1} parent=51 // pred_region
          %s3674 = sand.u32 %s104, 1
          %s3675 = scalar_lea.sflag [#allocation3], %s3674
          %s3676 = sand.u32 %s104, 1
          %s3677 = smul.addr %s3676, 256
          %s3678 = scalar_lea.vmem [#allocation2], %s3677
          %3679 = dma.done %s3675, 4096
        $region56: #{tpu_custom_call.1} parent=51 // pred_fallthru
          _
        // Predicated region
        $region57: #{tpu_custom_call.1} parent=51 // pred_check
          %p3680 = pneg %p145
        $region58: #{tpu_custom_call.1} parent=51 // pred_check_branch
          %3682 = sbr.rel (%p3680) target = $region60
        $region59: #{tpu_custom_call.1} parent=51 // pred_region
          %s3683 = sand.u32 %s28, 1
          %s3684 = scalar_lea.sflag [#allocation5], %s3683
          %s3685 = sand.u32 %s130, 1
          %s3686 = smul.addr %s3685, 2
          %s3687 = scalar_lea.vmem [#allocation4], %s3686
          %3688 = dma.done %s3684, 32
        $region60: #{tpu_custom_call.1} parent=51 // pred_fallthru
          _
        // Predicated region
        $region61: #{tpu_custom_call.1} parent=51 // pred_check
          %p3689 = pneg %p171
        $region62: #{tpu_custom_call.1} parent=51 // pred_check_branch
          %3691 = sbr.rel (%p3689) target = $region64
        $region63: #{tpu_custom_call.1} parent=51 // pred_region
          %s3692 = sand.u32 %s28, 1
          %s3693 = scalar_lea.sflag [#allocation5], %s3692
          %s3694 = sand.u32 %s156, 1
          %s3695 = smul.addr %s3694, 256
          %s3696 = scalar_lea.vmem [#allocation6], %s3695
          %3697 = dma.done %s3693, 4096
        $region64: #{tpu_custom_call.1} parent=51 // pred_fallthru
          _
        // Predicated region
        $region65: #{tpu_custom_call.1} parent=51 // pred_check
          %p3698 = pneg %p197
        $region66: #{tpu_custom_call.1} parent=51 // pred_check_branch
          %3700 = sbr.rel (%p3698) target = $region68
        $region67: #{tpu_custom_call.1} parent=51 // pred_region
          %s3701 = sand.u32 %s182, 1
          %s3702 = scalar_lea.sflag [#allocation8], %s3701
          %s3703 = sand.u32 %s182, 1
          %s3704 = smul.addr %s3703, 2
          %s3705 = scalar_lea.vmem [#allocation7], %s3704
          %3706 = dma.done %s3702, 32
        $region68: #{tpu_custom_call.1} parent=51 // pred_fallthru
          _
      $region52: #{tpu_custom_call.1} parent=5 // pred_fallthru
        _
    $region6: #{tpu_custom_call.1} parent=1 // loop_footer
      %s26 = sadd.s32 1, %s22
    $region7: #{tpu_custom_call.1} parent=1 // loop_footer_branch
      %21 = sbr.rel target = $region3
    $region8: #{tpu_custom_call.1} parent=1 // loop_exit
      _
    %3707 = vsyncpa [#allocation3], 1
    %s3708 = scalar_lea.sflag [#allocation3], 1
    %3709 = vsyncpa %s3708, 1
    %3710 = vsyncpa [#allocation5], 1
    %s3711 = scalar_lea.sflag [#allocation5], 1
    %3712 = vsyncpa %s3711, 1
    %3713 = vsyncpa [#allocation8], 1
    %s3714 = scalar_lea.sflag [#allocation8], 1
    %3715 = vsyncpa %s3714, 1

</llo_original>
